<compile_context>
chip_gen: v5e
topology: v5e:2x2
jax: 0.10.0
libtpu: 0.0.40
codegen_flags: <defaults>
</compile_context>

<pallas_src>
import functools

import jax
import jax.numpy as jnp
from jax.experimental import pallas as pl
from jax.experimental.pallas import tpu as pltpu

# --- Const equivalents (small, deterministic) ---
LSTM_HIDDEN_SIZE = 32
LSTM_INPUT_SIZE = 1        # univariate series
OUTPUT_SIZE = 1
TEACHER_FORCING_RATIO = 1.0  # deterministic: always teacher forcing

_GROUP = 8  # batch rows per grid step (= sublane width)


def _seq2seq_kernel(gxe_ref, gxd_ref, whh_e_ref, whh_d_ref,
                    wih_d_ref, b_d_ref, wout_ref, bout_ref,
                    out_ref, *, teacher_forcing):
    f32 = jnp.float32
    T_enc = gxe_ref.shape[1]
    T_dec = gxd_ref.shape[1]
    GB, H = gxe_ref.shape[3], gxe_ref.shape[4]

    # Loop-invariant recurrent weights, hoisted once (per-gate (H, H), bf16).
    w_e = [whh_e_ref[g] for g in range(4)]
    w_d = [whh_d_ref[g] for g in range(4)]

    def cell(gx, h, c, w):
        # gx: 4 x (GB, H) f32 pre-activations (x path + both biases, precomputed)
        hb = h.astype(jnp.bfloat16)
        i = jax.nn.sigmoid(gx[0] + jnp.dot(hb, w[0], preferred_element_type=f32))
        f = jax.nn.sigmoid(gx[1] + jnp.dot(hb, w[1], preferred_element_type=f32))
        g = jnp.tanh(gx[2] + jnp.dot(hb, w[2], preferred_element_type=f32))
        o = jax.nn.sigmoid(gx[3] + jnp.dot(hb, w[3], preferred_element_type=f32))
        c = f * c + i * g
        h = o * jnp.tanh(c)
        return h, c

    h = jnp.zeros((GB, H), f32)
    c = jnp.zeros((GB, H), f32)

    # ------------- encoder: fully unrolled single-layer LSTM -------------
    for t in range(T_enc):
        h, c = cell([gxe_ref[0, t, g] for g in range(4)], h, c, w_e)

    # ------------- decoder: LSTMCell + Linear head ------------------------
    if teacher_forcing:
        # Decoder inputs are known ahead of time -> x-path gates precomputed;
        # Linear head and the output store are hoisted out of the loop.
        hs = []
        for t in range(T_dec):
            h, c = cell([gxd_ref[0, t, g] for g in range(4)], h, c, w_d)
            hs.append(h)
        h_all = jnp.stack(hs, axis=0)                                 # (T_dec, GB, H)
        y = jnp.sum(h_all * wout_ref[...], axis=-1) + bout_ref[...]   # (T_dec, GB)
        out_ref[0] = y.astype(out_ref.dtype)
    else:
        # Autoregressive feedback (evaluate-style): y_hat needed per step.
        wout = wout_ref[...]                           # (1, H)
        bout = bout_ref[...]                           # (1, 1)
        wih = [wih_d_ref[g] for g in range(4)]         # (1, H) each
        bd = [b_d_ref[g] for g in range(4)]            # (1, H) each
        gx = [gxd_ref[0, 0, g] for g in range(4)]      # step 0: seed gates
        for t in range(T_dec):
            h, c = cell(gx, h, c, w_d)
            y_hat = jnp.sum(h * wout, axis=-1, keepdims=True) + bout  # (GB, 1)
            out_ref[0, t] = y_hat.astype(out_ref.dtype)
            if t + 1 < T_dec:
                gx = [y_hat * wih[g] + bd[g] for g in range(4)]


def init_params(key, hidden_size, input_size, output_size=1):
    """PyTorch-shaped parameters (uniform +-1/sqrt(H), like nn.LSTM defaults)."""
    H = hidden_size
    bound = 1.0 / float(H) ** 0.5
    ks = jax.random.split(key, 10)

    def u(kk, shape):
        return jax.random.uniform(kk, shape, jnp.float32, -bound, bound)

    return dict(
        enc_w_ih=u(ks[0], (4 * H, input_size)),
        enc_w_hh=u(ks[1], (4 * H, H)),
        enc_b_ih=u(ks[2], (4 * H,)),
        enc_b_hh=u(ks[3], (4 * H,)),
        dec_w_ih=u(ks[4], (4 * H, output_size)),
        dec_w_hh=u(ks[5], (4 * H, H)),
        dec_b_ih=u(ks[6], (4 * H,)),
        dec_b_hh=u(ks[7], (4 * H,)),
        out_w=u(ks[8], (output_size, H)),
        out_b=u(ks[9], (output_size,)),
    )


def pack_params(p):
    """Repack PyTorch-shaped parameters into the kernel layout."""
    H = p["enc_w_hh"].shape[1]

    def split_hh(w_hh):
        # (4H, H) -> (4, H, H) with  h @ out[g] == (h @ w_hh.T)[:, g*H:(g+1)*H]
        return jnp.transpose(w_hh.reshape(4, H, H), (0, 2, 1)).astype(jnp.bfloat16)

    return dict(
        wih_e_t=p["enc_w_ih"].T.astype(jnp.float32),                    # (D_in, 4H)
        b_e=(p["enc_b_ih"] + p["enc_b_hh"]).astype(jnp.float32),        # (4H,)
        whh_e4=split_hh(p["enc_w_hh"]),                                 # (4, H, H) bf16
        wih_d_t=p["dec_w_ih"].T.astype(jnp.float32),                    # (1, 4H)
        b_d=(p["dec_b_ih"] + p["dec_b_hh"]).astype(jnp.float32),        # (4H,)
        whh_d4=split_hh(p["dec_w_hh"]),                                 # (4, H, H) bf16
        wih_d4=jnp.transpose(p["dec_w_ih"].reshape(4, H, 1),
                             (0, 2, 1)).astype(jnp.float32),            # (4, 1, H)
        b_d4=(p["dec_b_ih"] + p["dec_b_hh"]).reshape(4, 1, H)
                                            .astype(jnp.float32),       # (4, 1, H)
        wout=p["out_w"].astype(jnp.float32),                            # (1, H)
        bout=p["out_b"].reshape(1, 1).astype(jnp.float32),              # (1, 1)
    )


def univariate_seq2seq_forward(input_tensor, target_tensor, packed,
                               teacher_forcing=True):
    """input_tensor: (B, T_enc, D_in); target_tensor: (B, T_dec, 1); batch-first."""
    B0, T_enc, _ = input_tensor.shape
    _, T_dec, out_size = target_tensor.shape
    assert out_size == 1, "decoder output_size must be 1 (module default)"
    H = packed["whh_e4"].shape[-1]

    x = input_tensor.astype(jnp.float32)
    tgt = target_tensor.astype(jnp.float32)

    # Pad batch to a multiple of the sublane width so every vreg row is used.
    B = ((B0 + _GROUP - 1) // _GROUP) * _GROUP
    if B != B0:
        x = jnp.pad(x, ((0, B - B0), (0, 0), (0, 0)))
        tgt = jnp.pad(tgt, ((0, B - B0), (0, 0), (0, 0)))
    G, GB = B // _GROUP, _GROUP

    def gate_x(seq, w_t, b):
        # (B, T, D) @ (D, 4H) + b  ->  (G, T, 4, GB, H)   (proper dot over D,
        # so D_in > 1 is also handled correctly; biases folded once here)
        T = seq.shape[1]
        g = jnp.einsum("btd,dk->tbk", seq, w_t) + b              # (T, B, 4H)
        g = g.reshape(T, B, 4, H).transpose(0, 2, 1, 3)           # (T, 4, B, H)
        return g.reshape(T, 4, G, GB, H).transpose(2, 0, 1, 3, 4)

    # Encoder x-path gate pre-activations (lane-dense, biases folded).
    gxe = gate_x(x, packed["wih_e_t"], packed["b_e"])
    # Decoder (teacher-forced) inputs are known ahead: [seed, tgt[:, :T_dec-1]].
    seed = x[:, -1, 0:1]                                          # (B, 1)
    d_in = jnp.concatenate([seed[:, None, :], tgt[:, :T_dec - 1, :]], axis=1)
    gxd = gate_x(d_in, packed["wih_d_t"], packed["b_d"])

    kernel = functools.partial(_seq2seq_kernel, teacher_forcing=teacher_forcing)

    in_specs = [
        pl.BlockSpec((1, T_enc, 4, GB, H), lambda g: (g, 0, 0, 0, 0)),
        pl.BlockSpec((1, T_dec, 4, GB, H), lambda g: (g, 0, 0, 0, 0)),
        pl.BlockSpec((4, H, H), lambda g: (0, 0, 0)),
        pl.BlockSpec((4, H, H), lambda g: (0, 0, 0)),
        pl.BlockSpec((4, 1, H), lambda g: (0, 0, 0)),
        pl.BlockSpec((4, 1, H), lambda g: (0, 0, 0)),
        pl.BlockSpec((1, H), lambda g: (0, 0)),
        pl.BlockSpec((1, 1), lambda g: (0, 0)),
    ]
    if teacher_forcing:
        out_shape = jax.ShapeDtypeStruct((G, T_dec, GB), jnp.float32)
        out_specs = pl.BlockSpec((1, T_dec, GB), lambda g: (g, 0, 0))
    else:
        out_shape = jax.ShapeDtypeStruct((G, T_dec, GB, 1), jnp.float32)
        out_specs = pl.BlockSpec((1, T_dec, GB, 1), lambda g: (g, 0, 0, 0))

    out = pl.pallas_call(
        kernel,
        out_shape=out_shape,
        grid_spec=pltpu.PrefetchScalarGridSpec(
            num_scalar_prefetch=0,
            grid=(G,),
            in_specs=in_specs,
            out_specs=out_specs),
        compiler_params=pltpu.CompilerParams(
            dimension_semantics=("parallel",)),   # v7x: batch groups across TCs
    )(gxe, gxd, packed["whh_e4"], packed["whh_d4"],
      packed["wih_d4"], packed["b_d4"], packed["wout"], packed["bout"])

    if teacher_forcing:
        out = out.transpose(0, 2, 1).reshape(B, T_dec)[:, :, None]
    else:
        out = out.transpose(0, 2, 1, 3).reshape(B, T_dec, out_size)
    return out[:B0]


def ref_forward(x, tgt, p, teacher_forcing=True):
    """Pure-JAX f32 reference of the same forward pass (PyTorch-shaped params)."""
    B, T_enc = x.shape[0], x.shape[1]
    T_dec = tgt.shape[1]
    H = p["enc_w_hh"].shape[1]
    b_e = p["enc_b_ih"] + p["enc_b_hh"]
    b_d = p["dec_b_ih"] + p["dec_b_hh"]

    def cell(xg, h, c, w_hh, b):
        gates = xg + h @ w_hh.T + b
        i = jax.nn.sigmoid(gates[:, :H])
        f = jax.nn.sigmoid(gates[:, H:2 * H])
        g = jnp.tanh(gates[:, 2 * H:3 * H])
        o = jax.nn.sigmoid(gates[:, 3 * H:])
        c = f * c + i * g
        h = o * jnp.tanh(c)
        return h, c

    h = jnp.zeros((B, H), jnp.float32)
    c = jnp.zeros((B, H), jnp.float32)
    for t in range(T_enc):
        h, c = cell(x[:, t] @ p["enc_w_ih"].T, h, c, p["enc_w_hh"], b_e)
    y = x[:, -1, 0:1]
    outs = []
    for t in range(T_dec):
        h, c = cell(y @ p["dec_w_ih"].T, h, c, p["dec_w_hh"], b_d)
        y_hat = h @ p["out_w"].T + p["out_b"]
        outs.append(y_hat)
        y = tgt[:, t] if teacher_forcing else y_hat
    return jnp.stack(outs, axis=1)


if __name__ == "__main__":
    key = jax.random.PRNGKey(0)
    k_p, k_x, k_t = jax.random.split(key, 3)

    B, T_ENC, T_DEC = 16, 8, 6   # 16 = 2 batch groups of 8 sublane rows
    torch_params = init_params(k_p, LSTM_HIDDEN_SIZE, LSTM_INPUT_SIZE, OUTPUT_SIZE)
    packed = pack_params(torch_params)

    input_tensor = jax.random.normal(k_x, (B, T_ENC, LSTM_INPUT_SIZE), jnp.float32)
    target_tensor = jax.random.normal(k_t, (B, T_DEC, OUTPUT_SIZE), jnp.float32)

    # teacher_forcing_ratio = 1.0 -> random.random() < 1.0 is always True
    use_tf = TEACHER_FORCING_RATIO >= 1.0

    # teacher-forcing (training) path
    out = univariate_seq2seq_forward(input_tensor, target_tensor, packed,
                                     teacher_forcing=use_tf)
    out = jax.block_until_ready(out)
    ref = ref_forward(input_tensor, target_tensor, torch_params,
                      teacher_forcing=use_tf)
    assert out.shape == (B, T_DEC, OUTPUT_SIZE), out.shape
    err = float(jnp.max(jnp.abs(out - ref)))
    assert err < 3e-2, f"teacher-forcing path max err {err}"

    # autoregressive (evaluate-style) path
    out_ar = univariate_seq2seq_forward(input_tensor, target_tensor, packed,
                                        teacher_forcing=False)
    out_ar = jax.block_until_ready(out_ar)
    ref_ar = ref_forward(input_tensor, target_tensor, torch_params,
                         teacher_forcing=False)
    err_ar = float(jnp.max(jnp.abs(out_ar - ref_ar)))
    assert err_ar < 3e-2, f"autoregressive path max err {err_ar}"

    print("KERNEL_OK")
</pallas_src>

<mosaic_0001>
module attributes {stable_mosaic.version = 11 : i64} {
  func.func @_seq2seq_kernel(%arg0: i32, %arg1: memref<1x8x4x8x32xf32, #tpu.memory_space<vmem>>, %arg2: memref<1x6x4x8x32xf32, #tpu.memory_space<vmem>>, %arg3: memref<4x32x32xbf16, #tpu.memory_space<vmem>>, %arg4: memref<4x32x32xbf16, #tpu.memory_space<vmem>>, %arg5: memref<4x1x32xf32, #tpu.memory_space<vmem>>, %arg6: memref<4x1x32xf32, #tpu.memory_space<vmem>>, %arg7: memref<1x32xf32, #tpu.memory_space<vmem>>, %arg8: memref<1x1xf32, #tpu.memory_space<vmem>>, %arg9: memref<1x6x8xf32, #tpu.memory_space<vmem>>) attributes {dimension_semantics = [#tpu.dimension_semantics<parallel>], iteration_bounds = array<i64: 2>, scalar_prefetch = 0 : i64, scratch_operands = 0 : i64, tpu.core_type = #tpu.core_type<tc>, window_params = [{transform_indices = @transform_0, window_bounds = array<i64: 1, 8, 4, 8, 32>}, {transform_indices = @transform_1, window_bounds = array<i64: 1, 6, 4, 8, 32>}, {pipeline_mode = #tpu.pipeline_mode<synchronous>, transform_indices = @transform_2, window_bounds = array<i64: 4, 32, 32>}, {pipeline_mode = #tpu.pipeline_mode<synchronous>, transform_indices = @transform_3, window_bounds = array<i64: 4, 32, 32>}, {pipeline_mode = #tpu.pipeline_mode<synchronous>, transform_indices = @transform_4, window_bounds = array<i64: 4, 1, 32>}, {pipeline_mode = #tpu.pipeline_mode<synchronous>, transform_indices = @transform_5, window_bounds = array<i64: 4, 1, 32>}, {pipeline_mode = #tpu.pipeline_mode<synchronous>, transform_indices = @transform_6, window_bounds = array<i64: 1, 32>}, {pipeline_mode = #tpu.pipeline_mode<synchronous>, transform_indices = @transform_7, window_bounds = array<i64: 1, 1>}, {transform_indices = @transform_8, window_bounds = array<i64: 1, 6, 8>}]} {
    %c0 = arith.constant 0 : index
    %c0_0 = arith.constant 0 : index
    %c0_1 = arith.constant 0 : index
    %0 = vector.load %arg3[%c0, %c0_0, %c0_1] : memref<4x32x32xbf16, #tpu.memory_space<vmem>>, vector<1x32x32xbf16>
    %1 = vector.shape_cast %0 : vector<1x32x32xbf16> to vector<32x32xbf16>
    %c1 = arith.constant 1 : index
    %c0_2 = arith.constant 0 : index
    %c0_3 = arith.constant 0 : index
    %2 = vector.load %arg3[%c1, %c0_2, %c0_3] : memref<4x32x32xbf16, #tpu.memory_space<vmem>>, vector<1x32x32xbf16>
    %3 = vector.shape_cast %2 : vector<1x32x32xbf16> to vector<32x32xbf16>
    %c2 = arith.constant 2 : index
    %c0_4 = arith.constant 0 : index
    %c0_5 = arith.constant 0 : index
    %4 = vector.load %arg3[%c2, %c0_4, %c0_5] : memref<4x32x32xbf16, #tpu.memory_space<vmem>>, vector<1x32x32xbf16>
    %5 = vector.shape_cast %4 : vector<1x32x32xbf16> to vector<32x32xbf16>
    %c3 = arith.constant 3 : index
    %c0_6 = arith.constant 0 : index
    %c0_7 = arith.constant 0 : index
    %6 = vector.load %arg3[%c3, %c0_6, %c0_7] : memref<4x32x32xbf16, #tpu.memory_space<vmem>>, vector<1x32x32xbf16>
    %7 = vector.shape_cast %6 : vector<1x32x32xbf16> to vector<32x32xbf16>
    %c0_8 = arith.constant 0 : index
    %c0_9 = arith.constant 0 : index
    %c0_10 = arith.constant 0 : index
    %8 = vector.load %arg4[%c0_8, %c0_9, %c0_10] : memref<4x32x32xbf16, #tpu.memory_space<vmem>>, vector<1x32x32xbf16>
    %9 = vector.shape_cast %8 : vector<1x32x32xbf16> to vector<32x32xbf16>
    %c1_11 = arith.constant 1 : index
    %c0_12 = arith.constant 0 : index
    %c0_13 = arith.constant 0 : index
    %10 = vector.load %arg4[%c1_11, %c0_12, %c0_13] : memref<4x32x32xbf16, #tpu.memory_space<vmem>>, vector<1x32x32xbf16>
    %11 = vector.shape_cast %10 : vector<1x32x32xbf16> to vector<32x32xbf16>
    %c2_14 = arith.constant 2 : index
    %c0_15 = arith.constant 0 : index
    %c0_16 = arith.constant 0 : index
    %12 = vector.load %arg4[%c2_14, %c0_15, %c0_16] : memref<4x32x32xbf16, #tpu.memory_space<vmem>>, vector<1x32x32xbf16>
    %13 = vector.shape_cast %12 : vector<1x32x32xbf16> to vector<32x32xbf16>
    %c3_17 = arith.constant 3 : index
    %c0_18 = arith.constant 0 : index
    %c0_19 = arith.constant 0 : index
    %14 = vector.load %arg4[%c3_17, %c0_18, %c0_19] : memref<4x32x32xbf16, #tpu.memory_space<vmem>>, vector<1x32x32xbf16>
    %15 = vector.shape_cast %14 : vector<1x32x32xbf16> to vector<32x32xbf16>
    %cst = arith.constant 0.000000e+00 : f32
    %16 = vector.broadcast %cst : f32 to vector<8x32xf32>
    %cst_20 = arith.constant 0.000000e+00 : f32
    %17 = vector.broadcast %cst_20 : f32 to vector<8x32xf32>
    %c0_21 = arith.constant 0 : index
    %c0_22 = arith.constant 0 : index
    %c0_23 = arith.constant 0 : index
    %c0_24 = arith.constant 0 : index
    %c0_25 = arith.constant 0 : index
    %18 = vector.load %arg1[%c0_21, %c0_22, %c0_23, %c0_24, %c0_25] : memref<1x8x4x8x32xf32, #tpu.memory_space<vmem>>, vector<1x1x1x8x32xf32>
    %19 = vector.shape_cast %18 : vector<1x1x1x8x32xf32> to vector<8x32xf32>
    %c0_26 = arith.constant 0 : index
    %c0_27 = arith.constant 0 : index
    %c1_28 = arith.constant 1 : index
    %c0_29 = arith.constant 0 : index
    %c0_30 = arith.constant 0 : index
    %20 = vector.load %arg1[%c0_26, %c0_27, %c1_28, %c0_29, %c0_30] : memref<1x8x4x8x32xf32, #tpu.memory_space<vmem>>, vector<1x1x1x8x32xf32>
    %21 = vector.shape_cast %20 : vector<1x1x1x8x32xf32> to vector<8x32xf32>
    %c0_31 = arith.constant 0 : index
    %c0_32 = arith.constant 0 : index
    %c2_33 = arith.constant 2 : index
    %c0_34 = arith.constant 0 : index
    %c0_35 = arith.constant 0 : index
    %22 = vector.load %arg1[%c0_31, %c0_32, %c2_33, %c0_34, %c0_35] : memref<1x8x4x8x32xf32, #tpu.memory_space<vmem>>, vector<1x1x1x8x32xf32>
    %23 = vector.shape_cast %22 : vector<1x1x1x8x32xf32> to vector<8x32xf32>
    %c0_36 = arith.constant 0 : index
    %c0_37 = arith.constant 0 : index
    %c3_38 = arith.constant 3 : index
    %c0_39 = arith.constant 0 : index
    %c0_40 = arith.constant 0 : index
    %24 = vector.load %arg1[%c0_36, %c0_37, %c3_38, %c0_39, %c0_40] : memref<1x8x4x8x32xf32, #tpu.memory_space<vmem>>, vector<1x1x1x8x32xf32>
    %25 = vector.shape_cast %24 : vector<1x1x1x8x32xf32> to vector<8x32xf32>
    %26 = arith.truncf %16 : vector<8x32xf32> to vector<8x32xbf16>
    %cst_41 = arith.constant dense<0.000000e+00> : vector<8x32xf32>
    %27 = tpu.matmul %26, %1, %cst_41 {dimension_numbers = #tpu.dot_dimension_numbers<[1], [0], [0], [1], [0, 0, 1, 1], [], []>} : vector<8x32xbf16>, vector<32x32xbf16>, vector<8x32xf32> -> vector<8x32xf32>
    %28 = arith.addf %19, %27 : vector<8x32xf32>
    %29 = arith.negf %28 : vector<8x32xf32>
    %30 = math.exp %29 : vector<8x32xf32>
    %cst_42 = arith.constant 1.000000e+00 : f32
    %31 = vector.broadcast %cst_42 : f32 to vector<8x32xf32>
    %32 = arith.addf %31, %30 : vector<8x32xf32>
    %33 = arith.divf %31, %32 : vector<8x32xf32>
    %cst_43 = arith.constant dense<0.000000e+00> : vector<8x32xf32>
    %34 = tpu.matmul %26, %3, %cst_43 {dimension_numbers = #tpu.dot_dimension_numbers<[1], [0], [0], [1], [0, 0, 1, 1], [], []>} : vector<8x32xbf16>, vector<32x32xbf16>, vector<8x32xf32> -> vector<8x32xf32>
    %35 = arith.addf %21, %34 : vector<8x32xf32>
    %36 = arith.negf %35 : vector<8x32xf32>
    %37 = math.exp %36 : vector<8x32xf32>
    %cst_44 = arith.constant 1.000000e+00 : f32
    %38 = vector.broadcast %cst_44 : f32 to vector<8x32xf32>
    %39 = arith.addf %38, %37 : vector<8x32xf32>
    %40 = arith.divf %38, %39 : vector<8x32xf32>
    %cst_45 = arith.constant dense<0.000000e+00> : vector<8x32xf32>
    %41 = tpu.matmul %26, %5, %cst_45 {dimension_numbers = #tpu.dot_dimension_numbers<[1], [0], [0], [1], [0, 0, 1, 1], [], []>} : vector<8x32xbf16>, vector<32x32xbf16>, vector<8x32xf32> -> vector<8x32xf32>
    %42 = arith.addf %23, %41 : vector<8x32xf32>
    %43 = math.tanh %42 : vector<8x32xf32>
    %cst_46 = arith.constant dense<0.000000e+00> : vector<8x32xf32>
    %44 = tpu.matmul %26, %7, %cst_46 {dimension_numbers = #tpu.dot_dimension_numbers<[1], [0], [0], [1], [0, 0, 1, 1], [], []>} : vector<8x32xbf16>, vector<32x32xbf16>, vector<8x32xf32> -> vector<8x32xf32>
    %45 = arith.addf %25, %44 : vector<8x32xf32>
    %46 = arith.negf %45 : vector<8x32xf32>
    %47 = math.exp %46 : vector<8x32xf32>
    %cst_47 = arith.constant 1.000000e+00 : f32
    %48 = vector.broadcast %cst_47 : f32 to vector<8x32xf32>
    %49 = arith.addf %48, %47 : vector<8x32xf32>
    %50 = arith.divf %48, %49 : vector<8x32xf32>
    %51 = arith.mulf %40, %17 : vector<8x32xf32>
    %52 = arith.mulf %33, %43 : vector<8x32xf32>
    %53 = arith.addf %51, %52 : vector<8x32xf32>
    %54 = math.tanh %53 : vector<8x32xf32>
    %55 = arith.mulf %50, %54 : vector<8x32xf32>
    %c0_48 = arith.constant 0 : index
    %c1_49 = arith.constant 1 : index
    %c0_50 = arith.constant 0 : index
    %c0_51 = arith.constant 0 : index
    %c0_52 = arith.constant 0 : index
    %56 = vector.load %arg1[%c0_48, %c1_49, %c0_50, %c0_51, %c0_52] : memref<1x8x4x8x32xf32, #tpu.memory_space<vmem>>, vector<1x1x1x8x32xf32>
    %57 = vector.shape_cast %56 : vector<1x1x1x8x32xf32> to vector<8x32xf32>
    %c0_53 = arith.constant 0 : index
    %c1_54 = arith.constant 1 : index
    %c1_55 = arith.constant 1 : index
    %c0_56 = arith.constant 0 : index
    %c0_57 = arith.constant 0 : index
    %58 = vector.load %arg1[%c0_53, %c1_54, %c1_55, %c0_56, %c0_57] : memref<1x8x4x8x32xf32, #tpu.memory_space<vmem>>, vector<1x1x1x8x32xf32>
    %59 = vector.shape_cast %58 : vector<1x1x1x8x32xf32> to vector<8x32xf32>
    %c0_58 = arith.constant 0 : index
    %c1_59 = arith.constant 1 : index
    %c2_60 = arith.constant 2 : index
    %c0_61 = arith.constant 0 : index
    %c0_62 = arith.constant 0 : index
    %60 = vector.load %arg1[%c0_58, %c1_59, %c2_60, %c0_61, %c0_62] : memref<1x8x4x8x32xf32, #tpu.memory_space<vmem>>, vector<1x1x1x8x32xf32>
    %61 = vector.shape_cast %60 : vector<1x1x1x8x32xf32> to vector<8x32xf32>
    %c0_63 = arith.constant 0 : index
    %c1_64 = arith.constant 1 : index
    %c3_65 = arith.constant 3 : index
    %c0_66 = arith.constant 0 : index
    %c0_67 = arith.constant 0 : index
    %62 = vector.load %arg1[%c0_63, %c1_64, %c3_65, %c0_66, %c0_67] : memref<1x8x4x8x32xf32, #tpu.memory_space<vmem>>, vector<1x1x1x8x32xf32>
    %63 = vector.shape_cast %62 : vector<1x1x1x8x32xf32> to vector<8x32xf32>
    %64 = arith.truncf %55 : vector<8x32xf32> to vector<8x32xbf16>
    %cst_68 = arith.constant dense<0.000000e+00> : vector<8x32xf32>
    %65 = tpu.matmul %64, %1, %cst_68 {dimension_numbers = #tpu.dot_dimension_numbers<[1], [0], [0], [1], [0, 0, 1, 1], [], []>} : vector<8x32xbf16>, vector<32x32xbf16>, vector<8x32xf32> -> vector<8x32xf32>
    %66 = arith.addf %57, %65 : vector<8x32xf32>
    %67 = arith.negf %66 : vector<8x32xf32>
    %68 = math.exp %67 : vector<8x32xf32>
    %cst_69 = arith.constant 1.000000e+00 : f32
    %69 = vector.broadcast %cst_69 : f32 to vector<8x32xf32>
    %70 = arith.addf %69, %68 : vector<8x32xf32>
    %71 = arith.divf %69, %70 : vector<8x32xf32>
    %cst_70 = arith.constant dense<0.000000e+00> : vector<8x32xf32>
    %72 = tpu.matmul %64, %3, %cst_70 {dimension_numbers = #tpu.dot_dimension_numbers<[1], [0], [0], [1], [0, 0, 1, 1], [], []>} : vector<8x32xbf16>, vector<32x32xbf16>, vector<8x32xf32> -> vector<8x32xf32>
    %73 = arith.addf %59, %72 : vector<8x32xf32>
    %74 = arith.negf %73 : vector<8x32xf32>
    %75 = math.exp %74 : vector<8x32xf32>
    %cst_71 = arith.constant 1.000000e+00 : f32
    %76 = vector.broadcast %cst_71 : f32 to vector<8x32xf32>
    %77 = arith.addf %76, %75 : vector<8x32xf32>
    %78 = arith.divf %76, %77 : vector<8x32xf32>
    %cst_72 = arith.constant dense<0.000000e+00> : vector<8x32xf32>
    %79 = tpu.matmul %64, %5, %cst_72 {dimension_numbers = #tpu.dot_dimension_numbers<[1], [0], [0], [1], [0, 0, 1, 1], [], []>} : vector<8x32xbf16>, vector<32x32xbf16>, vector<8x32xf32> -> vector<8x32xf32>
    %80 = arith.addf %61, %79 : vector<8x32xf32>
    %81 = math.tanh %80 : vector<8x32xf32>
    %cst_73 = arith.constant dense<0.000000e+00> : vector<8x32xf32>
    %82 = tpu.matmul %64, %7, %cst_73 {dimension_numbers = #tpu.dot_dimension_numbers<[1], [0], [0], [1], [0, 0, 1, 1], [], []>} : vector<8x32xbf16>, vector<32x32xbf16>, vector<8x32xf32> -> vector<8x32xf32>
    %83 = arith.addf %63, %82 : vector<8x32xf32>
    %84 = arith.negf %83 : vector<8x32xf32>
    %85 = math.exp %84 : vector<8x32xf32>
    %cst_74 = arith.constant 1.000000e+00 : f32
    %86 = vector.broadcast %cst_74 : f32 to vector<8x32xf32>
    %87 = arith.addf %86, %85 : vector<8x32xf32>
    %88 = arith.divf %86, %87 : vector<8x32xf32>
    %89 = arith.mulf %78, %53 : vector<8x32xf32>
    %90 = arith.mulf %71, %81 : vector<8x32xf32>
    %91 = arith.addf %89, %90 : vector<8x32xf32>
    %92 = math.tanh %91 : vector<8x32xf32>
    %93 = arith.mulf %88, %92 : vector<8x32xf32>
    %c0_75 = arith.constant 0 : index
    %c2_76 = arith.constant 2 : index
    %c0_77 = arith.constant 0 : index
    %c0_78 = arith.constant 0 : index
    %c0_79 = arith.constant 0 : index
    %94 = vector.load %arg1[%c0_75, %c2_76, %c0_77, %c0_78, %c0_79] : memref<1x8x4x8x32xf32, #tpu.memory_space<vmem>>, vector<1x1x1x8x32xf32>
    %95 = vector.shape_cast %94 : vector<1x1x1x8x32xf32> to vector<8x32xf32>
    %c0_80 = arith.constant 0 : index
    %c2_81 = arith.constant 2 : index
    %c1_82 = arith.constant 1 : index
    %c0_83 = arith.constant 0 : index
    %c0_84 = arith.constant 0 : index
    %96 = vector.load %arg1[%c0_80, %c2_81, %c1_82, %c0_83, %c0_84] : memref<1x8x4x8x32xf32, #tpu.memory_space<vmem>>, vector<1x1x1x8x32xf32>
    %97 = vector.shape_cast %96 : vector<1x1x1x8x32xf32> to vector<8x32xf32>
    %c0_85 = arith.constant 0 : index
    %c2_86 = arith.constant 2 : index
    %c2_87 = arith.constant 2 : index
    %c0_88 = arith.constant 0 : index
    %c0_89 = arith.constant 0 : index
    %98 = vector.load %arg1[%c0_85, %c2_86, %c2_87, %c0_88, %c0_89] : memref<1x8x4x8x32xf32, #tpu.memory_space<vmem>>, vector<1x1x1x8x32xf32>
    %99 = vector.shape_cast %98 : vector<1x1x1x8x32xf32> to vector<8x32xf32>
    %c0_90 = arith.constant 0 : index
    %c2_91 = arith.constant 2 : index
    %c3_92 = arith.constant 3 : index
    %c0_93 = arith.constant 0 : index
    %c0_94 = arith.constant 0 : index
    %100 = vector.load %arg1[%c0_90, %c2_91, %c3_92, %c0_93, %c0_94] : memref<1x8x4x8x32xf32, #tpu.memory_space<vmem>>, vector<1x1x1x8x32xf32>
    %101 = vector.shape_cast %100 : vector<1x1x1x8x32xf32> to vector<8x32xf32>
    %102 = arith.truncf %93 : vector<8x32xf32> to vector<8x32xbf16>
    %cst_95 = arith.constant dense<0.000000e+00> : vector<8x32xf32>
    %103 = tpu.matmul %102, %1, %cst_95 {dimension_numbers = #tpu.dot_dimension_numbers<[1], [0], [0], [1], [0, 0, 1, 1], [], []>} : vector<8x32xbf16>, vector<32x32xbf16>, vector<8x32xf32> -> vector<8x32xf32>
    %104 = arith.addf %95, %103 : vector<8x32xf32>
    %105 = arith.negf %104 : vector<8x32xf32>
    %106 = math.exp %105 : vector<8x32xf32>
    %cst_96 = arith.constant 1.000000e+00 : f32
    %107 = vector.broadcast %cst_96 : f32 to vector<8x32xf32>
    %108 = arith.addf %107, %106 : vector<8x32xf32>
    %109 = arith.divf %107, %108 : vector<8x32xf32>
    %cst_97 = arith.constant dense<0.000000e+00> : vector<8x32xf32>
    %110 = tpu.matmul %102, %3, %cst_97 {dimension_numbers = #tpu.dot_dimension_numbers<[1], [0], [0], [1], [0, 0, 1, 1], [], []>} : vector<8x32xbf16>, vector<32x32xbf16>, vector<8x32xf32> -> vector<8x32xf32>
    %111 = arith.addf %97, %110 : vector<8x32xf32>
    %112 = arith.negf %111 : vector<8x32xf32>
    %113 = math.exp %112 : vector<8x32xf32>
    %cst_98 = arith.constant 1.000000e+00 : f32
    %114 = vector.broadcast %cst_98 : f32 to vector<8x32xf32>
    %115 = arith.addf %114, %113 : vector<8x32xf32>
    %116 = arith.divf %114, %115 : vector<8x32xf32>
    %cst_99 = arith.constant dense<0.000000e+00> : vector<8x32xf32>
    %117 = tpu.matmul %102, %5, %cst_99 {dimension_numbers = #tpu.dot_dimension_numbers<[1], [0], [0], [1], [0, 0, 1, 1], [], []>} : vector<8x32xbf16>, vector<32x32xbf16>, vector<8x32xf32> -> vector<8x32xf32>
    %118 = arith.addf %99, %117 : vector<8x32xf32>
    %119 = math.tanh %118 : vector<8x32xf32>
    %cst_100 = arith.constant dense<0.000000e+00> : vector<8x32xf32>
    %120 = tpu.matmul %102, %7, %cst_100 {dimension_numbers = #tpu.dot_dimension_numbers<[1], [0], [0], [1], [0, 0, 1, 1], [], []>} : vector<8x32xbf16>, vector<32x32xbf16>, vector<8x32xf32> -> vector<8x32xf32>
    %121 = arith.addf %101, %120 : vector<8x32xf32>
    %122 = arith.negf %121 : vector<8x32xf32>
    %123 = math.exp %122 : vector<8x32xf32>
    %cst_101 = arith.constant 1.000000e+00 : f32
    %124 = vector.broadcast %cst_101 : f32 to vector<8x32xf32>
    %125 = arith.addf %124, %123 : vector<8x32xf32>
    %126 = arith.divf %124, %125 : vector<8x32xf32>
    %127 = arith.mulf %116, %91 : vector<8x32xf32>
    %128 = arith.mulf %109, %119 : vector<8x32xf32>
    %129 = arith.addf %127, %128 : vector<8x32xf32>
    %130 = math.tanh %129 : vector<8x32xf32>
    %131 = arith.mulf %126, %130 : vector<8x32xf32>
    %c0_102 = arith.constant 0 : index
    %c3_103 = arith.constant 3 : index
    %c0_104 = arith.constant 0 : index
    %c0_105 = arith.constant 0 : index
    %c0_106 = arith.constant 0 : index
    %132 = vector.load %arg1[%c0_102, %c3_103, %c0_104, %c0_105, %c0_106] : memref<1x8x4x8x32xf32, #tpu.memory_space<vmem>>, vector<1x1x1x8x32xf32>
    %133 = vector.shape_cast %132 : vector<1x1x1x8x32xf32> to vector<8x32xf32>
    %c0_107 = arith.constant 0 : index
    %c3_108 = arith.constant 3 : index
    %c1_109 = arith.constant 1 : index
    %c0_110 = arith.constant 0 : index
    %c0_111 = arith.constant 0 : index
    %134 = vector.load %arg1[%c0_107, %c3_108, %c1_109, %c0_110, %c0_111] : memref<1x8x4x8x32xf32, #tpu.memory_space<vmem>>, vector<1x1x1x8x32xf32>
    %135 = vector.shape_cast %134 : vector<1x1x1x8x32xf32> to vector<8x32xf32>
    %c0_112 = arith.constant 0 : index
    %c3_113 = arith.constant 3 : index
    %c2_114 = arith.constant 2 : index
    %c0_115 = arith.constant 0 : index
    %c0_116 = arith.constant 0 : index
    %136 = vector.load %arg1[%c0_112, %c3_113, %c2_114, %c0_115, %c0_116] : memref<1x8x4x8x32xf32, #tpu.memory_space<vmem>>, vector<1x1x1x8x32xf32>
    %137 = vector.shape_cast %136 : vector<1x1x1x8x32xf32> to vector<8x32xf32>
    %c0_117 = arith.constant 0 : index
    %c3_118 = arith.constant 3 : index
    %c3_119 = arith.constant 3 : index
    %c0_120 = arith.constant 0 : index
    %c0_121 = arith.constant 0 : index
    %138 = vector.load %arg1[%c0_117, %c3_118, %c3_119, %c0_120, %c0_121] : memref<1x8x4x8x32xf32, #tpu.memory_space<vmem>>, vector<1x1x1x8x32xf32>
    %139 = vector.shape_cast %138 : vector<1x1x1x8x32xf32> to vector<8x32xf32>
    %140 = arith.truncf %131 : vector<8x32xf32> to vector<8x32xbf16>
    %cst_122 = arith.constant dense<0.000000e+00> : vector<8x32xf32>
    %141 = tpu.matmul %140, %1, %cst_122 {dimension_numbers = #tpu.dot_dimension_numbers<[1], [0], [0], [1], [0, 0, 1, 1], [], []>} : vector<8x32xbf16>, vector<32x32xbf16>, vector<8x32xf32> -> vector<8x32xf32>
    %142 = arith.addf %133, %141 : vector<8x32xf32>
    %143 = arith.negf %142 : vector<8x32xf32>
    %144 = math.exp %143 : vector<8x32xf32>
    %cst_123 = arith.constant 1.000000e+00 : f32
    %145 = vector.broadcast %cst_123 : f32 to vector<8x32xf32>
    %146 = arith.addf %145, %144 : vector<8x32xf32>
    %147 = arith.divf %145, %146 : vector<8x32xf32>
    %cst_124 = arith.constant dense<0.000000e+00> : vector<8x32xf32>
    %148 = tpu.matmul %140, %3, %cst_124 {dimension_numbers = #tpu.dot_dimension_numbers<[1], [0], [0], [1], [0, 0, 1, 1], [], []>} : vector<8x32xbf16>, vector<32x32xbf16>, vector<8x32xf32> -> vector<8x32xf32>
    %149 = arith.addf %135, %148 : vector<8x32xf32>
    %150 = arith.negf %149 : vector<8x32xf32>
    %151 = math.exp %150 : vector<8x32xf32>
    %cst_125 = arith.constant 1.000000e+00 : f32
    %152 = vector.broadcast %cst_125 : f32 to vector<8x32xf32>
    %153 = arith.addf %152, %151 : vector<8x32xf32>
    %154 = arith.divf %152, %153 : vector<8x32xf32>
    %cst_126 = arith.constant dense<0.000000e+00> : vector<8x32xf32>
    %155 = tpu.matmul %140, %5, %cst_126 {dimension_numbers = #tpu.dot_dimension_numbers<[1], [0], [0], [1], [0, 0, 1, 1], [], []>} : vector<8x32xbf16>, vector<32x32xbf16>, vector<8x32xf32> -> vector<8x32xf32>
    %156 = arith.addf %137, %155 : vector<8x32xf32>
    %157 = math.tanh %156 : vector<8x32xf32>
    %cst_127 = arith.constant dense<0.000000e+00> : vector<8x32xf32>
    %158 = tpu.matmul %140, %7, %cst_127 {dimension_numbers = #tpu.dot_dimension_numbers<[1], [0], [0], [1], [0, 0, 1, 1], [], []>} : vector<8x32xbf16>, vector<32x32xbf16>, vector<8x32xf32> -> vector<8x32xf32>
    %159 = arith.addf %139, %158 : vector<8x32xf32>
    %160 = arith.negf %159 : vector<8x32xf32>
    %161 = math.exp %160 : vector<8x32xf32>
    %cst_128 = arith.constant 1.000000e+00 : f32
    %162 = vector.broadcast %cst_128 : f32 to vector<8x32xf32>
    %163 = arith.addf %162, %161 : vector<8x32xf32>
    %164 = arith.divf %162, %163 : vector<8x32xf32>
    %165 = arith.mulf %154, %129 : vector<8x32xf32>
    %166 = arith.mulf %147, %157 : vector<8x32xf32>
    %167 = arith.addf %165, %166 : vector<8x32xf32>
    %168 = math.tanh %167 : vector<8x32xf32>
    %169 = arith.mulf %164, %168 : vector<8x32xf32>
    %c0_129 = arith.constant 0 : index
    %c4 = arith.constant 4 : index
    %c0_130 = arith.constant 0 : index
    %c0_131 = arith.constant 0 : index
    %c0_132 = arith.constant 0 : index
    %170 = vector.load %arg1[%c0_129, %c4, %c0_130, %c0_131, %c0_132] : memref<1x8x4x8x32xf32, #tpu.memory_space<vmem>>, vector<1x1x1x8x32xf32>
    %171 = vector.shape_cast %170 : vector<1x1x1x8x32xf32> to vector<8x32xf32>
    %c0_133 = arith.constant 0 : index
    %c4_134 = arith.constant 4 : index
    %c1_135 = arith.constant 1 : index
    %c0_136 = arith.constant 0 : index
    %c0_137 = arith.constant 0 : index
    %172 = vector.load %arg1[%c0_133, %c4_134, %c1_135, %c0_136, %c0_137] : memref<1x8x4x8x32xf32, #tpu.memory_space<vmem>>, vector<1x1x1x8x32xf32>
    %173 = vector.shape_cast %172 : vector<1x1x1x8x32xf32> to vector<8x32xf32>
    %c0_138 = arith.constant 0 : index
    %c4_139 = arith.constant 4 : index
    %c2_140 = arith.constant 2 : index
    %c0_141 = arith.constant 0 : index
    %c0_142 = arith.constant 0 : index
    %174 = vector.load %arg1[%c0_138, %c4_139, %c2_140, %c0_141, %c0_142] : memref<1x8x4x8x32xf32, #tpu.memory_space<vmem>>, vector<1x1x1x8x32xf32>
    %175 = vector.shape_cast %174 : vector<1x1x1x8x32xf32> to vector<8x32xf32>
    %c0_143 = arith.constant 0 : index
    %c4_144 = arith.constant 4 : index
    %c3_145 = arith.constant 3 : index
    %c0_146 = arith.constant 0 : index
    %c0_147 = arith.constant 0 : index
    %176 = vector.load %arg1[%c0_143, %c4_144, %c3_145, %c0_146, %c0_147] : memref<1x8x4x8x32xf32, #tpu.memory_space<vmem>>, vector<1x1x1x8x32xf32>
    %177 = vector.shape_cast %176 : vector<1x1x1x8x32xf32> to vector<8x32xf32>
    %178 = arith.truncf %169 : vector<8x32xf32> to vector<8x32xbf16>
    %cst_148 = arith.constant dense<0.000000e+00> : vector<8x32xf32>
    %179 = tpu.matmul %178, %1, %cst_148 {dimension_numbers = #tpu.dot_dimension_numbers<[1], [0], [0], [1], [0, 0, 1, 1], [], []>} : vector<8x32xbf16>, vector<32x32xbf16>, vector<8x32xf32> -> vector<8x32xf32>
    %180 = arith.addf %171, %179 : vector<8x32xf32>
    %181 = arith.negf %180 : vector<8x32xf32>
    %182 = math.exp %181 : vector<8x32xf32>
    %cst_149 = arith.constant 1.000000e+00 : f32
    %183 = vector.broadcast %cst_149 : f32 to vector<8x32xf32>
    %184 = arith.addf %183, %182 : vector<8x32xf32>
    %185 = arith.divf %183, %184 : vector<8x32xf32>
    %cst_150 = arith.constant dense<0.000000e+00> : vector<8x32xf32>
    %186 = tpu.matmul %178, %3, %cst_150 {dimension_numbers = #tpu.dot_dimension_numbers<[1], [0], [0], [1], [0, 0, 1, 1], [], []>} : vector<8x32xbf16>, vector<32x32xbf16>, vector<8x32xf32> -> vector<8x32xf32>
    %187 = arith.addf %173, %186 : vector<8x32xf32>
    %188 = arith.negf %187 : vector<8x32xf32>
    %189 = math.exp %188 : vector<8x32xf32>
    %cst_151 = arith.constant 1.000000e+00 : f32
    %190 = vector.broadcast %cst_151 : f32 to vector<8x32xf32>
    %191 = arith.addf %190, %189 : vector<8x32xf32>
    %192 = arith.divf %190, %191 : vector<8x32xf32>
    %cst_152 = arith.constant dense<0.000000e+00> : vector<8x32xf32>
    %193 = tpu.matmul %178, %5, %cst_152 {dimension_numbers = #tpu.dot_dimension_numbers<[1], [0], [0], [1], [0, 0, 1, 1], [], []>} : vector<8x32xbf16>, vector<32x32xbf16>, vector<8x32xf32> -> vector<8x32xf32>
    %194 = arith.addf %175, %193 : vector<8x32xf32>
    %195 = math.tanh %194 : vector<8x32xf32>
    %cst_153 = arith.constant dense<0.000000e+00> : vector<8x32xf32>
    %196 = tpu.matmul %178, %7, %cst_153 {dimension_numbers = #tpu.dot_dimension_numbers<[1], [0], [0], [1], [0, 0, 1, 1], [], []>} : vector<8x32xbf16>, vector<32x32xbf16>, vector<8x32xf32> -> vector<8x32xf32>
    %197 = arith.addf %177, %196 : vector<8x32xf32>
    %198 = arith.negf %197 : vector<8x32xf32>
    %199 = math.exp %198 : vector<8x32xf32>
    %cst_154 = arith.constant 1.000000e+00 : f32
    %200 = vector.broadcast %cst_154 : f32 to vector<8x32xf32>
    %201 = arith.addf %200, %199 : vector<8x32xf32>
    %202 = arith.divf %200, %201 : vector<8x32xf32>
    %203 = arith.mulf %192, %167 : vector<8x32xf32>
    %204 = arith.mulf %185, %195 : vector<8x32xf32>
    %205 = arith.addf %203, %204 : vector<8x32xf32>
    %206 = math.tanh %205 : vector<8x32xf32>
    %207 = arith.mulf %202, %206 : vector<8x32xf32>
    %c0_155 = arith.constant 0 : index
    %c5 = arith.constant 5 : index
    %c0_156 = arith.constant 0 : index
    %c0_157 = arith.constant 0 : index
    %c0_158 = arith.constant 0 : index
    %208 = vector.load %arg1[%c0_155, %c5, %c0_156, %c0_157, %c0_158] : memref<1x8x4x8x32xf32, #tpu.memory_space<vmem>>, vector<1x1x1x8x32xf32>
    %209 = vector.shape_cast %208 : vector<1x1x1x8x32xf32> to vector<8x32xf32>
    %c0_159 = arith.constant 0 : index
    %c5_160 = arith.constant 5 : index
    %c1_161 = arith.constant 1 : index
    %c0_162 = arith.constant 0 : index
    %c0_163 = arith.constant 0 : index
    %210 = vector.load %arg1[%c0_159, %c5_160, %c1_161, %c0_162, %c0_163] : memref<1x8x4x8x32xf32, #tpu.memory_space<vmem>>, vector<1x1x1x8x32xf32>
    %211 = vector.shape_cast %210 : vector<1x1x1x8x32xf32> to vector<8x32xf32>
    %c0_164 = arith.constant 0 : index
    %c5_165 = arith.constant 5 : index
    %c2_166 = arith.constant 2 : index
    %c0_167 = arith.constant 0 : index
    %c0_168 = arith.constant 0 : index
    %212 = vector.load %arg1[%c0_164, %c5_165, %c2_166, %c0_167, %c0_168] : memref<1x8x4x8x32xf32, #tpu.memory_space<vmem>>, vector<1x1x1x8x32xf32>
    %213 = vector.shape_cast %212 : vector<1x1x1x8x32xf32> to vector<8x32xf32>
    %c0_169 = arith.constant 0 : index
    %c5_170 = arith.constant 5 : index
    %c3_171 = arith.constant 3 : index
    %c0_172 = arith.constant 0 : index
    %c0_173 = arith.constant 0 : index
    %214 = vector.load %arg1[%c0_169, %c5_170, %c3_171, %c0_172, %c0_173] : memref<1x8x4x8x32xf32, #tpu.memory_space<vmem>>, vector<1x1x1x8x32xf32>
    %215 = vector.shape_cast %214 : vector<1x1x1x8x32xf32> to vector<8x32xf32>
    %216 = arith.truncf %207 : vector<8x32xf32> to vector<8x32xbf16>
    %cst_174 = arith.constant dense<0.000000e+00> : vector<8x32xf32>
    %217 = tpu.matmul %216, %1, %cst_174 {dimension_numbers = #tpu.dot_dimension_numbers<[1], [0], [0], [1], [0, 0, 1, 1], [], []>} : vector<8x32xbf16>, vector<32x32xbf16>, vector<8x32xf32> -> vector<8x32xf32>
    %218 = arith.addf %209, %217 : vector<8x32xf32>
    %219 = arith.negf %218 : vector<8x32xf32>
    %220 = math.exp %219 : vector<8x32xf32>
    %cst_175 = arith.constant 1.000000e+00 : f32
    %221 = vector.broadcast %cst_175 : f32 to vector<8x32xf32>
    %222 = arith.addf %221, %220 : vector<8x32xf32>
    %223 = arith.divf %221, %222 : vector<8x32xf32>
    %cst_176 = arith.constant dense<0.000000e+00> : vector<8x32xf32>
    %224 = tpu.matmul %216, %3, %cst_176 {dimension_numbers = #tpu.dot_dimension_numbers<[1], [0], [0], [1], [0, 0, 1, 1], [], []>} : vector<8x32xbf16>, vector<32x32xbf16>, vector<8x32xf32> -> vector<8x32xf32>
    %225 = arith.addf %211, %224 : vector<8x32xf32>
    %226 = arith.negf %225 : vector<8x32xf32>
    %227 = math.exp %226 : vector<8x32xf32>
    %cst_177 = arith.constant 1.000000e+00 : f32
    %228 = vector.broadcast %cst_177 : f32 to vector<8x32xf32>
    %229 = arith.addf %228, %227 : vector<8x32xf32>
    %230 = arith.divf %228, %229 : vector<8x32xf32>
    %cst_178 = arith.constant dense<0.000000e+00> : vector<8x32xf32>
    %231 = tpu.matmul %216, %5, %cst_178 {dimension_numbers = #tpu.dot_dimension_numbers<[1], [0], [0], [1], [0, 0, 1, 1], [], []>} : vector<8x32xbf16>, vector<32x32xbf16>, vector<8x32xf32> -> vector<8x32xf32>
    %232 = arith.addf %213, %231 : vector<8x32xf32>
    %233 = math.tanh %232 : vector<8x32xf32>
    %cst_179 = arith.constant dense<0.000000e+00> : vector<8x32xf32>
    %234 = tpu.matmul %216, %7, %cst_179 {dimension_numbers = #tpu.dot_dimension_numbers<[1], [0], [0], [1], [0, 0, 1, 1], [], []>} : vector<8x32xbf16>, vector<32x32xbf16>, vector<8x32xf32> -> vector<8x32xf32>
    %235 = arith.addf %215, %234 : vector<8x32xf32>
    %236 = arith.negf %235 : vector<8x32xf32>
    %237 = math.exp %236 : vector<8x32xf32>
    %cst_180 = arith.constant 1.000000e+00 : f32
    %238 = vector.broadcast %cst_180 : f32 to vector<8x32xf32>
    %239 = arith.addf %238, %237 : vector<8x32xf32>
    %240 = arith.divf %238, %239 : vector<8x32xf32>
    %241 = arith.mulf %230, %205 : vector<8x32xf32>
    %242 = arith.mulf %223, %233 : vector<8x32xf32>
    %243 = arith.addf %241, %242 : vector<8x32xf32>
    %244 = math.tanh %243 : vector<8x32xf32>
    %245 = arith.mulf %240, %244 : vector<8x32xf32>
    %c0_181 = arith.constant 0 : index
    %c6 = arith.constant 6 : index
    %c0_182 = arith.constant 0 : index
    %c0_183 = arith.constant 0 : index
    %c0_184 = arith.constant 0 : index
    %246 = vector.load %arg1[%c0_181, %c6, %c0_182, %c0_183, %c0_184] : memref<1x8x4x8x32xf32, #tpu.memory_space<vmem>>, vector<1x1x1x8x32xf32>
    %247 = vector.shape_cast %246 : vector<1x1x1x8x32xf32> to vector<8x32xf32>
    %c0_185 = arith.constant 0 : index
    %c6_186 = arith.constant 6 : index
    %c1_187 = arith.constant 1 : index
    %c0_188 = arith.constant 0 : index
    %c0_189 = arith.constant 0 : index
    %248 = vector.load %arg1[%c0_185, %c6_186, %c1_187, %c0_188, %c0_189] : memref<1x8x4x8x32xf32, #tpu.memory_space<vmem>>, vector<1x1x1x8x32xf32>
    %249 = vector.shape_cast %248 : vector<1x1x1x8x32xf32> to vector<8x32xf32>
    %c0_190 = arith.constant 0 : index
    %c6_191 = arith.constant 6 : index
    %c2_192 = arith.constant 2 : index
    %c0_193 = arith.constant 0 : index
    %c0_194 = arith.constant 0 : index
    %250 = vector.load %arg1[%c0_190, %c6_191, %c2_192, %c0_193, %c0_194] : memref<1x8x4x8x32xf32, #tpu.memory_space<vmem>>, vector<1x1x1x8x32xf32>
    %251 = vector.shape_cast %250 : vector<1x1x1x8x32xf32> to vector<8x32xf32>
    %c0_195 = arith.constant 0 : index
    %c6_196 = arith.constant 6 : index
    %c3_197 = arith.constant 3 : index
    %c0_198 = arith.constant 0 : index
    %c0_199 = arith.constant 0 : index
    %252 = vector.load %arg1[%c0_195, %c6_196, %c3_197, %c0_198, %c0_199] : memref<1x8x4x8x32xf32, #tpu.memory_space<vmem>>, vector<1x1x1x8x32xf32>
    %253 = vector.shape_cast %252 : vector<1x1x1x8x32xf32> to vector<8x32xf32>
    %254 = arith.truncf %245 : vector<8x32xf32> to vector<8x32xbf16>
    %cst_200 = arith.constant dense<0.000000e+00> : vector<8x32xf32>
    %255 = tpu.matmul %254, %1, %cst_200 {dimension_numbers = #tpu.dot_dimension_numbers<[1], [0], [0], [1], [0, 0, 1, 1], [], []>} : vector<8x32xbf16>, vector<32x32xbf16>, vector<8x32xf32> -> vector<8x32xf32>
    %256 = arith.addf %247, %255 : vector<8x32xf32>
    %257 = arith.negf %256 : vector<8x32xf32>
    %258 = math.exp %257 : vector<8x32xf32>
    %cst_201 = arith.constant 1.000000e+00 : f32
    %259 = vector.broadcast %cst_201 : f32 to vector<8x32xf32>
    %260 = arith.addf %259, %258 : vector<8x32xf32>
    %261 = arith.divf %259, %260 : vector<8x32xf32>
    %cst_202 = arith.constant dense<0.000000e+00> : vector<8x32xf32>
    %262 = tpu.matmul %254, %3, %cst_202 {dimension_numbers = #tpu.dot_dimension_numbers<[1], [0], [0], [1], [0, 0, 1, 1], [], []>} : vector<8x32xbf16>, vector<32x32xbf16>, vector<8x32xf32> -> vector<8x32xf32>
    %263 = arith.addf %249, %262 : vector<8x32xf32>
    %264 = arith.negf %263 : vector<8x32xf32>
    %265 = math.exp %264 : vector<8x32xf32>
    %cst_203 = arith.constant 1.000000e+00 : f32
    %266 = vector.broadcast %cst_203 : f32 to vector<8x32xf32>
    %267 = arith.addf %266, %265 : vector<8x32xf32>
    %268 = arith.divf %266, %267 : vector<8x32xf32>
    %cst_204 = arith.constant dense<0.000000e+00> : vector<8x32xf32>
    %269 = tpu.matmul %254, %5, %cst_204 {dimension_numbers = #tpu.dot_dimension_numbers<[1], [0], [0], [1], [0, 0, 1, 1], [], []>} : vector<8x32xbf16>, vector<32x32xbf16>, vector<8x32xf32> -> vector<8x32xf32>
    %270 = arith.addf %251, %269 : vector<8x32xf32>
    %271 = math.tanh %270 : vector<8x32xf32>
    %cst_205 = arith.constant dense<0.000000e+00> : vector<8x32xf32>
    %272 = tpu.matmul %254, %7, %cst_205 {dimension_numbers = #tpu.dot_dimension_numbers<[1], [0], [0], [1], [0, 0, 1, 1], [], []>} : vector<8x32xbf16>, vector<32x32xbf16>, vector<8x32xf32> -> vector<8x32xf32>
    %273 = arith.addf %253, %272 : vector<8x32xf32>
    %274 = arith.negf %273 : vector<8x32xf32>
    %275 = math.exp %274 : vector<8x32xf32>
    %cst_206 = arith.constant 1.000000e+00 : f32
    %276 = vector.broadcast %cst_206 : f32 to vector<8x32xf32>
    %277 = arith.addf %276, %275 : vector<8x32xf32>
    %278 = arith.divf %276, %277 : vector<8x32xf32>
    %279 = arith.mulf %268, %243 : vector<8x32xf32>
    %280 = arith.mulf %261, %271 : vector<8x32xf32>
    %281 = arith.addf %279, %280 : vector<8x32xf32>
    %282 = math.tanh %281 : vector<8x32xf32>
    %283 = arith.mulf %278, %282 : vector<8x32xf32>
    %c0_207 = arith.constant 0 : index
    %c7 = arith.constant 7 : index
    %c0_208 = arith.constant 0 : index
    %c0_209 = arith.constant 0 : index
    %c0_210 = arith.constant 0 : index
    %284 = vector.load %arg1[%c0_207, %c7, %c0_208, %c0_209, %c0_210] : memref<1x8x4x8x32xf32, #tpu.memory_space<vmem>>, vector<1x1x1x8x32xf32>
    %285 = vector.shape_cast %284 : vector<1x1x1x8x32xf32> to vector<8x32xf32>
    %c0_211 = arith.constant 0 : index
    %c7_212 = arith.constant 7 : index
    %c1_213 = arith.constant 1 : index
    %c0_214 = arith.constant 0 : index
    %c0_215 = arith.constant 0 : index
    %286 = vector.load %arg1[%c0_211, %c7_212, %c1_213, %c0_214, %c0_215] : memref<1x8x4x8x32xf32, #tpu.memory_space<vmem>>, vector<1x1x1x8x32xf32>
    %287 = vector.shape_cast %286 : vector<1x1x1x8x32xf32> to vector<8x32xf32>
    %c0_216 = arith.constant 0 : index
    %c7_217 = arith.constant 7 : index
    %c2_218 = arith.constant 2 : index
    %c0_219 = arith.constant 0 : index
    %c0_220 = arith.constant 0 : index
    %288 = vector.load %arg1[%c0_216, %c7_217, %c2_218, %c0_219, %c0_220] : memref<1x8x4x8x32xf32, #tpu.memory_space<vmem>>, vector<1x1x1x8x32xf32>
    %289 = vector.shape_cast %288 : vector<1x1x1x8x32xf32> to vector<8x32xf32>
    %c0_221 = arith.constant 0 : index
    %c7_222 = arith.constant 7 : index
    %c3_223 = arith.constant 3 : index
    %c0_224 = arith.constant 0 : index
    %c0_225 = arith.constant 0 : index
    %290 = vector.load %arg1[%c0_221, %c7_222, %c3_223, %c0_224, %c0_225] : memref<1x8x4x8x32xf32, #tpu.memory_space<vmem>>, vector<1x1x1x8x32xf32>
    %291 = vector.shape_cast %290 : vector<1x1x1x8x32xf32> to vector<8x32xf32>
    %292 = arith.truncf %283 : vector<8x32xf32> to vector<8x32xbf16>
    %cst_226 = arith.constant dense<0.000000e+00> : vector<8x32xf32>
    %293 = tpu.matmul %292, %1, %cst_226 {dimension_numbers = #tpu.dot_dimension_numbers<[1], [0], [0], [1], [0, 0, 1, 1], [], []>} : vector<8x32xbf16>, vector<32x32xbf16>, vector<8x32xf32> -> vector<8x32xf32>
    %294 = arith.addf %285, %293 : vector<8x32xf32>
    %295 = arith.negf %294 : vector<8x32xf32>
    %296 = math.exp %295 : vector<8x32xf32>
    %cst_227 = arith.constant 1.000000e+00 : f32
    %297 = vector.broadcast %cst_227 : f32 to vector<8x32xf32>
    %298 = arith.addf %297, %296 : vector<8x32xf32>
    %299 = arith.divf %297, %298 : vector<8x32xf32>
    %cst_228 = arith.constant dense<0.000000e+00> : vector<8x32xf32>
    %300 = tpu.matmul %292, %3, %cst_228 {dimension_numbers = #tpu.dot_dimension_numbers<[1], [0], [0], [1], [0, 0, 1, 1], [], []>} : vector<8x32xbf16>, vector<32x32xbf16>, vector<8x32xf32> -> vector<8x32xf32>
    %301 = arith.addf %287, %300 : vector<8x32xf32>
    %302 = arith.negf %301 : vector<8x32xf32>
    %303 = math.exp %302 : vector<8x32xf32>
    %cst_229 = arith.constant 1.000000e+00 : f32
    %304 = vector.broadcast %cst_229 : f32 to vector<8x32xf32>
    %305 = arith.addf %304, %303 : vector<8x32xf32>
    %306 = arith.divf %304, %305 : vector<8x32xf32>
    %cst_230 = arith.constant dense<0.000000e+00> : vector<8x32xf32>
    %307 = tpu.matmul %292, %5, %cst_230 {dimension_numbers = #tpu.dot_dimension_numbers<[1], [0], [0], [1], [0, 0, 1, 1], [], []>} : vector<8x32xbf16>, vector<32x32xbf16>, vector<8x32xf32> -> vector<8x32xf32>
    %308 = arith.addf %289, %307 : vector<8x32xf32>
    %309 = math.tanh %308 : vector<8x32xf32>
    %cst_231 = arith.constant dense<0.000000e+00> : vector<8x32xf32>
    %310 = tpu.matmul %292, %7, %cst_231 {dimension_numbers = #tpu.dot_dimension_numbers<[1], [0], [0], [1], [0, 0, 1, 1], [], []>} : vector<8x32xbf16>, vector<32x32xbf16>, vector<8x32xf32> -> vector<8x32xf32>
    %311 = arith.addf %291, %310 : vector<8x32xf32>
    %312 = arith.negf %311 : vector<8x32xf32>
    %313 = math.exp %312 : vector<8x32xf32>
    %cst_232 = arith.constant 1.000000e+00 : f32
    %314 = vector.broadcast %cst_232 : f32 to vector<8x32xf32>
    %315 = arith.addf %314, %313 : vector<8x32xf32>
    %316 = arith.divf %314, %315 : vector<8x32xf32>
    %317 = arith.mulf %306, %281 : vector<8x32xf32>
    %318 = arith.mulf %299, %309 : vector<8x32xf32>
    %319 = arith.addf %317, %318 : vector<8x32xf32>
    %320 = math.tanh %319 : vector<8x32xf32>
    %321 = arith.mulf %316, %320 : vector<8x32xf32>
    %c0_233 = arith.constant 0 : index
    %c0_234 = arith.constant 0 : index
    %c0_235 = arith.constant 0 : index
    %c0_236 = arith.constant 0 : index
    %c0_237 = arith.constant 0 : index
    %322 = vector.load %arg2[%c0_233, %c0_234, %c0_235, %c0_236, %c0_237] : memref<1x6x4x8x32xf32, #tpu.memory_space<vmem>>, vector<1x1x1x8x32xf32>
    %323 = vector.shape_cast %322 : vector<1x1x1x8x32xf32> to vector<8x32xf32>
    %c0_238 = arith.constant 0 : index
    %c0_239 = arith.constant 0 : index
    %c1_240 = arith.constant 1 : index
    %c0_241 = arith.constant 0 : index
    %c0_242 = arith.constant 0 : index
    %324 = vector.load %arg2[%c0_238, %c0_239, %c1_240, %c0_241, %c0_242] : memref<1x6x4x8x32xf32, #tpu.memory_space<vmem>>, vector<1x1x1x8x32xf32>
    %325 = vector.shape_cast %324 : vector<1x1x1x8x32xf32> to vector<8x32xf32>
    %c0_243 = arith.constant 0 : index
    %c0_244 = arith.constant 0 : index
    %c2_245 = arith.constant 2 : index
    %c0_246 = arith.constant 0 : index
    %c0_247 = arith.constant 0 : index
    %326 = vector.load %arg2[%c0_243, %c0_244, %c2_245, %c0_246, %c0_247] : memref<1x6x4x8x32xf32, #tpu.memory_space<vmem>>, vector<1x1x1x8x32xf32>
    %327 = vector.shape_cast %326 : vector<1x1x1x8x32xf32> to vector<8x32xf32>
    %c0_248 = arith.constant 0 : index
    %c0_249 = arith.constant 0 : index
    %c3_250 = arith.constant 3 : index
    %c0_251 = arith.constant 0 : index
    %c0_252 = arith.constant 0 : index
    %328 = vector.load %arg2[%c0_248, %c0_249, %c3_250, %c0_251, %c0_252] : memref<1x6x4x8x32xf32, #tpu.memory_space<vmem>>, vector<1x1x1x8x32xf32>
    %329 = vector.shape_cast %328 : vector<1x1x1x8x32xf32> to vector<8x32xf32>
    %330 = arith.truncf %321 : vector<8x32xf32> to vector<8x32xbf16>
    %cst_253 = arith.constant dense<0.000000e+00> : vector<8x32xf32>
    %331 = tpu.matmul %330, %9, %cst_253 {dimension_numbers = #tpu.dot_dimension_numbers<[1], [0], [0], [1], [0, 0, 1, 1], [], []>} : vector<8x32xbf16>, vector<32x32xbf16>, vector<8x32xf32> -> vector<8x32xf32>
    %332 = arith.addf %323, %331 : vector<8x32xf32>
    %333 = arith.negf %332 : vector<8x32xf32>
    %334 = math.exp %333 : vector<8x32xf32>
    %cst_254 = arith.constant 1.000000e+00 : f32
    %335 = vector.broadcast %cst_254 : f32 to vector<8x32xf32>
    %336 = arith.addf %335, %334 : vector<8x32xf32>
    %337 = arith.divf %335, %336 : vector<8x32xf32>
    %cst_255 = arith.constant dense<0.000000e+00> : vector<8x32xf32>
    %338 = tpu.matmul %330, %11, %cst_255 {dimension_numbers = #tpu.dot_dimension_numbers<[1], [0], [0], [1], [0, 0, 1, 1], [], []>} : vector<8x32xbf16>, vector<32x32xbf16>, vector<8x32xf32> -> vector<8x32xf32>
    %339 = arith.addf %325, %338 : vector<8x32xf32>
    %340 = arith.negf %339 : vector<8x32xf32>
    %341 = math.exp %340 : vector<8x32xf32>
    %cst_256 = arith.constant 1.000000e+00 : f32
    %342 = vector.broadcast %cst_256 : f32 to vector<8x32xf32>
    %343 = arith.addf %342, %341 : vector<8x32xf32>
    %344 = arith.divf %342, %343 : vector<8x32xf32>
    %cst_257 = arith.constant dense<0.000000e+00> : vector<8x32xf32>
    %345 = tpu.matmul %330, %13, %cst_257 {dimension_numbers = #tpu.dot_dimension_numbers<[1], [0], [0], [1], [0, 0, 1, 1], [], []>} : vector<8x32xbf16>, vector<32x32xbf16>, vector<8x32xf32> -> vector<8x32xf32>
    %346 = arith.addf %327, %345 : vector<8x32xf32>
    %347 = math.tanh %346 : vector<8x32xf32>
    %cst_258 = arith.constant dense<0.000000e+00> : vector<8x32xf32>
    %348 = tpu.matmul %330, %15, %cst_258 {dimension_numbers = #tpu.dot_dimension_numbers<[1], [0], [0], [1], [0, 0, 1, 1], [], []>} : vector<8x32xbf16>, vector<32x32xbf16>, vector<8x32xf32> -> vector<8x32xf32>
    %349 = arith.addf %329, %348 : vector<8x32xf32>
    %350 = arith.negf %349 : vector<8x32xf32>
    %351 = math.exp %350 : vector<8x32xf32>
    %cst_259 = arith.constant 1.000000e+00 : f32
    %352 = vector.broadcast %cst_259 : f32 to vector<8x32xf32>
    %353 = arith.addf %352, %351 : vector<8x32xf32>
    %354 = arith.divf %352, %353 : vector<8x32xf32>
    %355 = arith.mulf %344, %319 : vector<8x32xf32>
    %356 = arith.mulf %337, %347 : vector<8x32xf32>
    %357 = arith.addf %355, %356 : vector<8x32xf32>
    %358 = math.tanh %357 : vector<8x32xf32>
    %359 = arith.mulf %354, %358 : vector<8x32xf32>
    %c0_260 = arith.constant 0 : index
    %c1_261 = arith.constant 1 : index
    %c0_262 = arith.constant 0 : index
    %c0_263 = arith.constant 0 : index
    %c0_264 = arith.constant 0 : index
    %360 = vector.load %arg2[%c0_260, %c1_261, %c0_262, %c0_263, %c0_264] : memref<1x6x4x8x32xf32, #tpu.memory_space<vmem>>, vector<1x1x1x8x32xf32>
    %361 = vector.shape_cast %360 : vector<1x1x1x8x32xf32> to vector<8x32xf32>
    %c0_265 = arith.constant 0 : index
    %c1_266 = arith.constant 1 : index
    %c1_267 = arith.constant 1 : index
    %c0_268 = arith.constant 0 : index
    %c0_269 = arith.constant 0 : index
    %362 = vector.load %arg2[%c0_265, %c1_266, %c1_267, %c0_268, %c0_269] : memref<1x6x4x8x32xf32, #tpu.memory_space<vmem>>, vector<1x1x1x8x32xf32>
    %363 = vector.shape_cast %362 : vector<1x1x1x8x32xf32> to vector<8x32xf32>
    %c0_270 = arith.constant 0 : index
    %c1_271 = arith.constant 1 : index
    %c2_272 = arith.constant 2 : index
    %c0_273 = arith.constant 0 : index
    %c0_274 = arith.constant 0 : index
    %364 = vector.load %arg2[%c0_270, %c1_271, %c2_272, %c0_273, %c0_274] : memref<1x6x4x8x32xf32, #tpu.memory_space<vmem>>, vector<1x1x1x8x32xf32>
    %365 = vector.shape_cast %364 : vector<1x1x1x8x32xf32> to vector<8x32xf32>
    %c0_275 = arith.constant 0 : index
    %c1_276 = arith.constant 1 : index
    %c3_277 = arith.constant 3 : index
    %c0_278 = arith.constant 0 : index
    %c0_279 = arith.constant 0 : index
    %366 = vector.load %arg2[%c0_275, %c1_276, %c3_277, %c0_278, %c0_279] : memref<1x6x4x8x32xf32, #tpu.memory_space<vmem>>, vector<1x1x1x8x32xf32>
    %367 = vector.shape_cast %366 : vector<1x1x1x8x32xf32> to vector<8x32xf32>
    %368 = arith.truncf %359 : vector<8x32xf32> to vector<8x32xbf16>
    %cst_280 = arith.constant dense<0.000000e+00> : vector<8x32xf32>
    %369 = tpu.matmul %368, %9, %cst_280 {dimension_numbers = #tpu.dot_dimension_numbers<[1], [0], [0], [1], [0, 0, 1, 1], [], []>} : vector<8x32xbf16>, vector<32x32xbf16>, vector<8x32xf32> -> vector<8x32xf32>
    %370 = arith.addf %361, %369 : vector<8x32xf32>
    %371 = arith.negf %370 : vector<8x32xf32>
    %372 = math.exp %371 : vector<8x32xf32>
    %cst_281 = arith.constant 1.000000e+00 : f32
    %373 = vector.broadcast %cst_281 : f32 to vector<8x32xf32>
    %374 = arith.addf %373, %372 : vector<8x32xf32>
    %375 = arith.divf %373, %374 : vector<8x32xf32>
    %cst_282 = arith.constant dense<0.000000e+00> : vector<8x32xf32>
    %376 = tpu.matmul %368, %11, %cst_282 {dimension_numbers = #tpu.dot_dimension_numbers<[1], [0], [0], [1], [0, 0, 1, 1], [], []>} : vector<8x32xbf16>, vector<32x32xbf16>, vector<8x32xf32> -> vector<8x32xf32>
    %377 = arith.addf %363, %376 : vector<8x32xf32>
    %378 = arith.negf %377 : vector<8x32xf32>
    %379 = math.exp %378 : vector<8x32xf32>
    %cst_283 = arith.constant 1.000000e+00 : f32
    %380 = vector.broadcast %cst_283 : f32 to vector<8x32xf32>
    %381 = arith.addf %380, %379 : vector<8x32xf32>
    %382 = arith.divf %380, %381 : vector<8x32xf32>
    %cst_284 = arith.constant dense<0.000000e+00> : vector<8x32xf32>
    %383 = tpu.matmul %368, %13, %cst_284 {dimension_numbers = #tpu.dot_dimension_numbers<[1], [0], [0], [1], [0, 0, 1, 1], [], []>} : vector<8x32xbf16>, vector<32x32xbf16>, vector<8x32xf32> -> vector<8x32xf32>
    %384 = arith.addf %365, %383 : vector<8x32xf32>
    %385 = math.tanh %384 : vector<8x32xf32>
    %cst_285 = arith.constant dense<0.000000e+00> : vector<8x32xf32>
    %386 = tpu.matmul %368, %15, %cst_285 {dimension_numbers = #tpu.dot_dimension_numbers<[1], [0], [0], [1], [0, 0, 1, 1], [], []>} : vector<8x32xbf16>, vector<32x32xbf16>, vector<8x32xf32> -> vector<8x32xf32>
    %387 = arith.addf %367, %386 : vector<8x32xf32>
    %388 = arith.negf %387 : vector<8x32xf32>
    %389 = math.exp %388 : vector<8x32xf32>
    %cst_286 = arith.constant 1.000000e+00 : f32
    %390 = vector.broadcast %cst_286 : f32 to vector<8x32xf32>
    %391 = arith.addf %390, %389 : vector<8x32xf32>
    %392 = arith.divf %390, %391 : vector<8x32xf32>
    %393 = arith.mulf %382, %357 : vector<8x32xf32>
    %394 = arith.mulf %375, %385 : vector<8x32xf32>
    %395 = arith.addf %393, %394 : vector<8x32xf32>
    %396 = math.tanh %395 : vector<8x32xf32>
    %397 = arith.mulf %392, %396 : vector<8x32xf32>
    %c0_287 = arith.constant 0 : index
    %c2_288 = arith.constant 2 : index
    %c0_289 = arith.constant 0 : index
    %c0_290 = arith.constant 0 : index
    %c0_291 = arith.constant 0 : index
    %398 = vector.load %arg2[%c0_287, %c2_288, %c0_289, %c0_290, %c0_291] : memref<1x6x4x8x32xf32, #tpu.memory_space<vmem>>, vector<1x1x1x8x32xf32>
    %399 = vector.shape_cast %398 : vector<1x1x1x8x32xf32> to vector<8x32xf32>
    %c0_292 = arith.constant 0 : index
    %c2_293 = arith.constant 2 : index
    %c1_294 = arith.constant 1 : index
    %c0_295 = arith.constant 0 : index
    %c0_296 = arith.constant 0 : index
    %400 = vector.load %arg2[%c0_292, %c2_293, %c1_294, %c0_295, %c0_296] : memref<1x6x4x8x32xf32, #tpu.memory_space<vmem>>, vector<1x1x1x8x32xf32>
    %401 = vector.shape_cast %400 : vector<1x1x1x8x32xf32> to vector<8x32xf32>
    %c0_297 = arith.constant 0 : index
    %c2_298 = arith.constant 2 : index
    %c2_299 = arith.constant 2 : index
    %c0_300 = arith.constant 0 : index
    %c0_301 = arith.constant 0 : index
    %402 = vector.load %arg2[%c0_297, %c2_298, %c2_299, %c0_300, %c0_301] : memref<1x6x4x8x32xf32, #tpu.memory_space<vmem>>, vector<1x1x1x8x32xf32>
    %403 = vector.shape_cast %402 : vector<1x1x1x8x32xf32> to vector<8x32xf32>
    %c0_302 = arith.constant 0 : index
    %c2_303 = arith.constant 2 : index
    %c3_304 = arith.constant 3 : index
    %c0_305 = arith.constant 0 : index
    %c0_306 = arith.constant 0 : index
    %404 = vector.load %arg2[%c0_302, %c2_303, %c3_304, %c0_305, %c0_306] : memref<1x6x4x8x32xf32, #tpu.memory_space<vmem>>, vector<1x1x1x8x32xf32>
    %405 = vector.shape_cast %404 : vector<1x1x1x8x32xf32> to vector<8x32xf32>
    %406 = arith.truncf %397 : vector<8x32xf32> to vector<8x32xbf16>
    %cst_307 = arith.constant dense<0.000000e+00> : vector<8x32xf32>
    %407 = tpu.matmul %406, %9, %cst_307 {dimension_numbers = #tpu.dot_dimension_numbers<[1], [0], [0], [1], [0, 0, 1, 1], [], []>} : vector<8x32xbf16>, vector<32x32xbf16>, vector<8x32xf32> -> vector<8x32xf32>
    %408 = arith.addf %399, %407 : vector<8x32xf32>
    %409 = arith.negf %408 : vector<8x32xf32>
    %410 = math.exp %409 : vector<8x32xf32>
    %cst_308 = arith.constant 1.000000e+00 : f32
    %411 = vector.broadcast %cst_308 : f32 to vector<8x32xf32>
    %412 = arith.addf %411, %410 : vector<8x32xf32>
    %413 = arith.divf %411, %412 : vector<8x32xf32>
    %cst_309 = arith.constant dense<0.000000e+00> : vector<8x32xf32>
    %414 = tpu.matmul %406, %11, %cst_309 {dimension_numbers = #tpu.dot_dimension_numbers<[1], [0], [0], [1], [0, 0, 1, 1], [], []>} : vector<8x32xbf16>, vector<32x32xbf16>, vector<8x32xf32> -> vector<8x32xf32>
    %415 = arith.addf %401, %414 : vector<8x32xf32>
    %416 = arith.negf %415 : vector<8x32xf32>
    %417 = math.exp %416 : vector<8x32xf32>
    %cst_310 = arith.constant 1.000000e+00 : f32
    %418 = vector.broadcast %cst_310 : f32 to vector<8x32xf32>
    %419 = arith.addf %418, %417 : vector<8x32xf32>
    %420 = arith.divf %418, %419 : vector<8x32xf32>
    %cst_311 = arith.constant dense<0.000000e+00> : vector<8x32xf32>
    %421 = tpu.matmul %406, %13, %cst_311 {dimension_numbers = #tpu.dot_dimension_numbers<[1], [0], [0], [1], [0, 0, 1, 1], [], []>} : vector<8x32xbf16>, vector<32x32xbf16>, vector<8x32xf32> -> vector<8x32xf32>
    %422 = arith.addf %403, %421 : vector<8x32xf32>
    %423 = math.tanh %422 : vector<8x32xf32>
    %cst_312 = arith.constant dense<0.000000e+00> : vector<8x32xf32>
    %424 = tpu.matmul %406, %15, %cst_312 {dimension_numbers = #tpu.dot_dimension_numbers<[1], [0], [0], [1], [0, 0, 1, 1], [], []>} : vector<8x32xbf16>, vector<32x32xbf16>, vector<8x32xf32> -> vector<8x32xf32>
    %425 = arith.addf %405, %424 : vector<8x32xf32>
    %426 = arith.negf %425 : vector<8x32xf32>
    %427 = math.exp %426 : vector<8x32xf32>
    %cst_313 = arith.constant 1.000000e+00 : f32
    %428 = vector.broadcast %cst_313 : f32 to vector<8x32xf32>
    %429 = arith.addf %428, %427 : vector<8x32xf32>
    %430 = arith.divf %428, %429 : vector<8x32xf32>
    %431 = arith.mulf %420, %395 : vector<8x32xf32>
    %432 = arith.mulf %413, %423 : vector<8x32xf32>
    %433 = arith.addf %431, %432 : vector<8x32xf32>
    %434 = math.tanh %433 : vector<8x32xf32>
    %435 = arith.mulf %430, %434 : vector<8x32xf32>
    %c0_314 = arith.constant 0 : index
    %c3_315 = arith.constant 3 : index
    %c0_316 = arith.constant 0 : index
    %c0_317 = arith.constant 0 : index
    %c0_318 = arith.constant 0 : index
    %436 = vector.load %arg2[%c0_314, %c3_315, %c0_316, %c0_317, %c0_318] : memref<1x6x4x8x32xf32, #tpu.memory_space<vmem>>, vector<1x1x1x8x32xf32>
    %437 = vector.shape_cast %436 : vector<1x1x1x8x32xf32> to vector<8x32xf32>
    %c0_319 = arith.constant 0 : index
    %c3_320 = arith.constant 3 : index
    %c1_321 = arith.constant 1 : index
    %c0_322 = arith.constant 0 : index
    %c0_323 = arith.constant 0 : index
    %438 = vector.load %arg2[%c0_319, %c3_320, %c1_321, %c0_322, %c0_323] : memref<1x6x4x8x32xf32, #tpu.memory_space<vmem>>, vector<1x1x1x8x32xf32>
    %439 = vector.shape_cast %438 : vector<1x1x1x8x32xf32> to vector<8x32xf32>
    %c0_324 = arith.constant 0 : index
    %c3_325 = arith.constant 3 : index
    %c2_326 = arith.constant 2 : index
    %c0_327 = arith.constant 0 : index
    %c0_328 = arith.constant 0 : index
    %440 = vector.load %arg2[%c0_324, %c3_325, %c2_326, %c0_327, %c0_328] : memref<1x6x4x8x32xf32, #tpu.memory_space<vmem>>, vector<1x1x1x8x32xf32>
    %441 = vector.shape_cast %440 : vector<1x1x1x8x32xf32> to vector<8x32xf32>
    %c0_329 = arith.constant 0 : index
    %c3_330 = arith.constant 3 : index
    %c3_331 = arith.constant 3 : index
    %c0_332 = arith.constant 0 : index
    %c0_333 = arith.constant 0 : index
    %442 = vector.load %arg2[%c0_329, %c3_330, %c3_331, %c0_332, %c0_333] : memref<1x6x4x8x32xf32, #tpu.memory_space<vmem>>, vector<1x1x1x8x32xf32>
    %443 = vector.shape_cast %442 : vector<1x1x1x8x32xf32> to vector<8x32xf32>
    %444 = arith.truncf %435 : vector<8x32xf32> to vector<8x32xbf16>
    %cst_334 = arith.constant dense<0.000000e+00> : vector<8x32xf32>
    %445 = tpu.matmul %444, %9, %cst_334 {dimension_numbers = #tpu.dot_dimension_numbers<[1], [0], [0], [1], [0, 0, 1, 1], [], []>} : vector<8x32xbf16>, vector<32x32xbf16>, vector<8x32xf32> -> vector<8x32xf32>
    %446 = arith.addf %437, %445 : vector<8x32xf32>
    %447 = arith.negf %446 : vector<8x32xf32>
    %448 = math.exp %447 : vector<8x32xf32>
    %cst_335 = arith.constant 1.000000e+00 : f32
    %449 = vector.broadcast %cst_335 : f32 to vector<8x32xf32>
    %450 = arith.addf %449, %448 : vector<8x32xf32>
    %451 = arith.divf %449, %450 : vector<8x32xf32>
    %cst_336 = arith.constant dense<0.000000e+00> : vector<8x32xf32>
    %452 = tpu.matmul %444, %11, %cst_336 {dimension_numbers = #tpu.dot_dimension_numbers<[1], [0], [0], [1], [0, 0, 1, 1], [], []>} : vector<8x32xbf16>, vector<32x32xbf16>, vector<8x32xf32> -> vector<8x32xf32>
    %453 = arith.addf %439, %452 : vector<8x32xf32>
    %454 = arith.negf %453 : vector<8x32xf32>
    %455 = math.exp %454 : vector<8x32xf32>
    %cst_337 = arith.constant 1.000000e+00 : f32
    %456 = vector.broadcast %cst_337 : f32 to vector<8x32xf32>
    %457 = arith.addf %456, %455 : vector<8x32xf32>
    %458 = arith.divf %456, %457 : vector<8x32xf32>
    %cst_338 = arith.constant dense<0.000000e+00> : vector<8x32xf32>
    %459 = tpu.matmul %444, %13, %cst_338 {dimension_numbers = #tpu.dot_dimension_numbers<[1], [0], [0], [1], [0, 0, 1, 1], [], []>} : vector<8x32xbf16>, vector<32x32xbf16>, vector<8x32xf32> -> vector<8x32xf32>
    %460 = arith.addf %441, %459 : vector<8x32xf32>
    %461 = math.tanh %460 : vector<8x32xf32>
    %cst_339 = arith.constant dense<0.000000e+00> : vector<8x32xf32>
    %462 = tpu.matmul %444, %15, %cst_339 {dimension_numbers = #tpu.dot_dimension_numbers<[1], [0], [0], [1], [0, 0, 1, 1], [], []>} : vector<8x32xbf16>, vector<32x32xbf16>, vector<8x32xf32> -> vector<8x32xf32>
    %463 = arith.addf %443, %462 : vector<8x32xf32>
    %464 = arith.negf %463 : vector<8x32xf32>
    %465 = math.exp %464 : vector<8x32xf32>
    %cst_340 = arith.constant 1.000000e+00 : f32
    %466 = vector.broadcast %cst_340 : f32 to vector<8x32xf32>
    %467 = arith.addf %466, %465 : vector<8x32xf32>
    %468 = arith.divf %466, %467 : vector<8x32xf32>
    %469 = arith.mulf %458, %433 : vector<8x32xf32>
    %470 = arith.mulf %451, %461 : vector<8x32xf32>
    %471 = arith.addf %469, %470 : vector<8x32xf32>
    %472 = math.tanh %471 : vector<8x32xf32>
    %473 = arith.mulf %468, %472 : vector<8x32xf32>
    %c0_341 = arith.constant 0 : index
    %c4_342 = arith.constant 4 : index
    %c0_343 = arith.constant 0 : index
    %c0_344 = arith.constant 0 : index
    %c0_345 = arith.constant 0 : index
    %474 = vector.load %arg2[%c0_341, %c4_342, %c0_343, %c0_344, %c0_345] : memref<1x6x4x8x32xf32, #tpu.memory_space<vmem>>, vector<1x1x1x8x32xf32>
    %475 = vector.shape_cast %474 : vector<1x1x1x8x32xf32> to vector<8x32xf32>
    %c0_346 = arith.constant 0 : index
    %c4_347 = arith.constant 4 : index
    %c1_348 = arith.constant 1 : index
    %c0_349 = arith.constant 0 : index
    %c0_350 = arith.constant 0 : index
    %476 = vector.load %arg2[%c0_346, %c4_347, %c1_348, %c0_349, %c0_350] : memref<1x6x4x8x32xf32, #tpu.memory_space<vmem>>, vector<1x1x1x8x32xf32>
    %477 = vector.shape_cast %476 : vector<1x1x1x8x32xf32> to vector<8x32xf32>
    %c0_351 = arith.constant 0 : index
    %c4_352 = arith.constant 4 : index
    %c2_353 = arith.constant 2 : index
    %c0_354 = arith.constant 0 : index
    %c0_355 = arith.constant 0 : index
    %478 = vector.load %arg2[%c0_351, %c4_352, %c2_353, %c0_354, %c0_355] : memref<1x6x4x8x32xf32, #tpu.memory_space<vmem>>, vector<1x1x1x8x32xf32>
    %479 = vector.shape_cast %478 : vector<1x1x1x8x32xf32> to vector<8x32xf32>
    %c0_356 = arith.constant 0 : index
    %c4_357 = arith.constant 4 : index
    %c3_358 = arith.constant 3 : index
    %c0_359 = arith.constant 0 : index
    %c0_360 = arith.constant 0 : index
    %480 = vector.load %arg2[%c0_356, %c4_357, %c3_358, %c0_359, %c0_360] : memref<1x6x4x8x32xf32, #tpu.memory_space<vmem>>, vector<1x1x1x8x32xf32>
    %481 = vector.shape_cast %480 : vector<1x1x1x8x32xf32> to vector<8x32xf32>
    %482 = arith.truncf %473 : vector<8x32xf32> to vector<8x32xbf16>
    %cst_361 = arith.constant dense<0.000000e+00> : vector<8x32xf32>
    %483 = tpu.matmul %482, %9, %cst_361 {dimension_numbers = #tpu.dot_dimension_numbers<[1], [0], [0], [1], [0, 0, 1, 1], [], []>} : vector<8x32xbf16>, vector<32x32xbf16>, vector<8x32xf32> -> vector<8x32xf32>
    %484 = arith.addf %475, %483 : vector<8x32xf32>
    %485 = arith.negf %484 : vector<8x32xf32>
    %486 = math.exp %485 : vector<8x32xf32>
    %cst_362 = arith.constant 1.000000e+00 : f32
    %487 = vector.broadcast %cst_362 : f32 to vector<8x32xf32>
    %488 = arith.addf %487, %486 : vector<8x32xf32>
    %489 = arith.divf %487, %488 : vector<8x32xf32>
    %cst_363 = arith.constant dense<0.000000e+00> : vector<8x32xf32>
    %490 = tpu.matmul %482, %11, %cst_363 {dimension_numbers = #tpu.dot_dimension_numbers<[1], [0], [0], [1], [0, 0, 1, 1], [], []>} : vector<8x32xbf16>, vector<32x32xbf16>, vector<8x32xf32> -> vector<8x32xf32>
    %491 = arith.addf %477, %490 : vector<8x32xf32>
    %492 = arith.negf %491 : vector<8x32xf32>
    %493 = math.exp %492 : vector<8x32xf32>
    %cst_364 = arith.constant 1.000000e+00 : f32
    %494 = vector.broadcast %cst_364 : f32 to vector<8x32xf32>
    %495 = arith.addf %494, %493 : vector<8x32xf32>
    %496 = arith.divf %494, %495 : vector<8x32xf32>
    %cst_365 = arith.constant dense<0.000000e+00> : vector<8x32xf32>
    %497 = tpu.matmul %482, %13, %cst_365 {dimension_numbers = #tpu.dot_dimension_numbers<[1], [0], [0], [1], [0, 0, 1, 1], [], []>} : vector<8x32xbf16>, vector<32x32xbf16>, vector<8x32xf32> -> vector<8x32xf32>
    %498 = arith.addf %479, %497 : vector<8x32xf32>
    %499 = math.tanh %498 : vector<8x32xf32>
    %cst_366 = arith.constant dense<0.000000e+00> : vector<8x32xf32>
    %500 = tpu.matmul %482, %15, %cst_366 {dimension_numbers = #tpu.dot_dimension_numbers<[1], [0], [0], [1], [0, 0, 1, 1], [], []>} : vector<8x32xbf16>, vector<32x32xbf16>, vector<8x32xf32> -> vector<8x32xf32>
    %501 = arith.addf %481, %500 : vector<8x32xf32>
    %502 = arith.negf %501 : vector<8x32xf32>
    %503 = math.exp %502 : vector<8x32xf32>
    %cst_367 = arith.constant 1.000000e+00 : f32
    %504 = vector.broadcast %cst_367 : f32 to vector<8x32xf32>
    %505 = arith.addf %504, %503 : vector<8x32xf32>
    %506 = arith.divf %504, %505 : vector<8x32xf32>
    %507 = arith.mulf %496, %471 : vector<8x32xf32>
    %508 = arith.mulf %489, %499 : vector<8x32xf32>
    %509 = arith.addf %507, %508 : vector<8x32xf32>
    %510 = math.tanh %509 : vector<8x32xf32>
    %511 = arith.mulf %506, %510 : vector<8x32xf32>
    %c0_368 = arith.constant 0 : index
    %c5_369 = arith.constant 5 : index
    %c0_370 = arith.constant 0 : index
    %c0_371 = arith.constant 0 : index
    %c0_372 = arith.constant 0 : index
    %512 = vector.load %arg2[%c0_368, %c5_369, %c0_370, %c0_371, %c0_372] : memref<1x6x4x8x32xf32, #tpu.memory_space<vmem>>, vector<1x1x1x8x32xf32>
    %513 = vector.shape_cast %512 : vector<1x1x1x8x32xf32> to vector<8x32xf32>
    %c0_373 = arith.constant 0 : index
    %c5_374 = arith.constant 5 : index
    %c1_375 = arith.constant 1 : index
    %c0_376 = arith.constant 0 : index
    %c0_377 = arith.constant 0 : index
    %514 = vector.load %arg2[%c0_373, %c5_374, %c1_375, %c0_376, %c0_377] : memref<1x6x4x8x32xf32, #tpu.memory_space<vmem>>, vector<1x1x1x8x32xf32>
    %515 = vector.shape_cast %514 : vector<1x1x1x8x32xf32> to vector<8x32xf32>
    %c0_378 = arith.constant 0 : index
    %c5_379 = arith.constant 5 : index
    %c2_380 = arith.constant 2 : index
    %c0_381 = arith.constant 0 : index
    %c0_382 = arith.constant 0 : index
    %516 = vector.load %arg2[%c0_378, %c5_379, %c2_380, %c0_381, %c0_382] : memref<1x6x4x8x32xf32, #tpu.memory_space<vmem>>, vector<1x1x1x8x32xf32>
    %517 = vector.shape_cast %516 : vector<1x1x1x8x32xf32> to vector<8x32xf32>
    %c0_383 = arith.constant 0 : index
    %c5_384 = arith.constant 5 : index
    %c3_385 = arith.constant 3 : index
    %c0_386 = arith.constant 0 : index
    %c0_387 = arith.constant 0 : index
    %518 = vector.load %arg2[%c0_383, %c5_384, %c3_385, %c0_386, %c0_387] : memref<1x6x4x8x32xf32, #tpu.memory_space<vmem>>, vector<1x1x1x8x32xf32>
    %519 = vector.shape_cast %518 : vector<1x1x1x8x32xf32> to vector<8x32xf32>
    %520 = arith.truncf %511 : vector<8x32xf32> to vector<8x32xbf16>
    %cst_388 = arith.constant dense<0.000000e+00> : vector<8x32xf32>
    %521 = tpu.matmul %520, %9, %cst_388 {dimension_numbers = #tpu.dot_dimension_numbers<[1], [0], [0], [1], [0, 0, 1, 1], [], []>} : vector<8x32xbf16>, vector<32x32xbf16>, vector<8x32xf32> -> vector<8x32xf32>
    %522 = arith.addf %513, %521 : vector<8x32xf32>
    %523 = arith.negf %522 : vector<8x32xf32>
    %524 = math.exp %523 : vector<8x32xf32>
    %cst_389 = arith.constant 1.000000e+00 : f32
    %525 = vector.broadcast %cst_389 : f32 to vector<8x32xf32>
    %526 = arith.addf %525, %524 : vector<8x32xf32>
    %527 = arith.divf %525, %526 : vector<8x32xf32>
    %cst_390 = arith.constant dense<0.000000e+00> : vector<8x32xf32>
    %528 = tpu.matmul %520, %11, %cst_390 {dimension_numbers = #tpu.dot_dimension_numbers<[1], [0], [0], [1], [0, 0, 1, 1], [], []>} : vector<8x32xbf16>, vector<32x32xbf16>, vector<8x32xf32> -> vector<8x32xf32>
    %529 = arith.addf %515, %528 : vector<8x32xf32>
    %530 = arith.negf %529 : vector<8x32xf32>
    %531 = math.exp %530 : vector<8x32xf32>
    %cst_391 = arith.constant 1.000000e+00 : f32
    %532 = vector.broadcast %cst_391 : f32 to vector<8x32xf32>
    %533 = arith.addf %532, %531 : vector<8x32xf32>
    %534 = arith.divf %532, %533 : vector<8x32xf32>
    %cst_392 = arith.constant dense<0.000000e+00> : vector<8x32xf32>
    %535 = tpu.matmul %520, %13, %cst_392 {dimension_numbers = #tpu.dot_dimension_numbers<[1], [0], [0], [1], [0, 0, 1, 1], [], []>} : vector<8x32xbf16>, vector<32x32xbf16>, vector<8x32xf32> -> vector<8x32xf32>
    %536 = arith.addf %517, %535 : vector<8x32xf32>
    %537 = math.tanh %536 : vector<8x32xf32>
    %cst_393 = arith.constant dense<0.000000e+00> : vector<8x32xf32>
    %538 = tpu.matmul %520, %15, %cst_393 {dimension_numbers = #tpu.dot_dimension_numbers<[1], [0], [0], [1], [0, 0, 1, 1], [], []>} : vector<8x32xbf16>, vector<32x32xbf16>, vector<8x32xf32> -> vector<8x32xf32>
    %539 = arith.addf %519, %538 : vector<8x32xf32>
    %540 = arith.negf %539 : vector<8x32xf32>
    %541 = math.exp %540 : vector<8x32xf32>
    %cst_394 = arith.constant 1.000000e+00 : f32
    %542 = vector.broadcast %cst_394 : f32 to vector<8x32xf32>
    %543 = arith.addf %542, %541 : vector<8x32xf32>
    %544 = arith.divf %542, %543 : vector<8x32xf32>
    %545 = arith.mulf %534, %509 : vector<8x32xf32>
    %546 = arith.mulf %527, %537 : vector<8x32xf32>
    %547 = arith.addf %545, %546 : vector<8x32xf32>
    %548 = math.tanh %547 : vector<8x32xf32>
    %549 = arith.mulf %544, %548 : vector<8x32xf32>
    %550 = vector.shape_cast %359 : vector<8x32xf32> to vector<1x8x32xf32>
    %551 = vector.shape_cast %397 : vector<8x32xf32> to vector<1x8x32xf32>
    %552 = vector.shape_cast %435 : vector<8x32xf32> to vector<1x8x32xf32>
    %553 = vector.shape_cast %473 : vector<8x32xf32> to vector<1x8x32xf32>
    %554 = vector.shape_cast %511 : vector<8x32xf32> to vector<1x8x32xf32>
    %555 = vector.shape_cast %549 : vector<8x32xf32> to vector<1x8x32xf32>
    %556 = tpu.concatenate %550, %551, %552, %553, %554, %555 in 0 : vector<1x8x32xf32>, vector<1x8x32xf32>, vector<1x8x32xf32>, vector<1x8x32xf32>, vector<1x8x32xf32>, vector<1x8x32xf32> -> vector<6x8x32xf32>
    %c0_395 = arith.constant 0 : index
    %c0_396 = arith.constant 0 : index
    %557 = vector.load %arg7[%c0_395, %c0_396] : memref<1x32xf32, #tpu.memory_space<vmem>>, vector<1x32xf32>
    %558 = vector.shape_cast %557 : vector<1x32xf32> to vector<1x1x32xf32>
    %559 = vector.broadcast %558 : vector<1x1x32xf32> to vector<6x8x32xf32>
    %560 = arith.mulf %556, %559 : vector<6x8x32xf32>
    %cst_397 = arith.constant dense<0.000000e+00> : vector<6x8xf32>
    %561 = vector.multi_reduction <add>, %560, %cst_397 [2] : vector<6x8x32xf32> to vector<6x8xf32>
    %c0_398 = arith.constant 0 : index
    %c0_399 = arith.constant 0 : index
    %562 = vector.load %arg8[%c0_398, %c0_399] : memref<1x1xf32, #tpu.memory_space<vmem>>, vector<1x1xf32>
    %563 = vector.broadcast %562 : vector<1x1xf32> to vector<6x8xf32>
    %564 = arith.addf %561, %563 : vector<6x8xf32>
    %c0_400 = arith.constant 0 : index
    %c0_401 = arith.constant 0 : index
    %c0_402 = arith.constant 0 : index
    %565 = vector.load %arg9[%c0_400, %c0_401, %c0_402] : memref<1x6x8xf32, #tpu.memory_space<vmem>>, vector<1x6x8xf32>
    %566 = vector.shape_cast %565 : vector<1x6x8xf32> to vector<6x8xf32>
    %567 = vector.shape_cast %564 : vector<6x8xf32> to vector<1x6x8xf32>
    tpu.vector_store %arg9[%c0_400, %c0_401, %c0_402], %567 {strides = array<i32>} : memref<1x6x8xf32, #tpu.memory_space<vmem>>, vector<1x6x8xf32>,
    return
  }
  func.func @transform_0(%arg0: i32) -> (i32, i32, i32, i32, i32) {
    %c0_i32 = arith.constant 0 : i32
    %c0_i32_0 = arith.constant 0 : i32
    %c0_i32_1 = arith.constant 0 : i32
    %c0_i32_2 = arith.constant 0 : i32
    %c0_i32_3 = arith.constant 0 : i32
    return %arg0, %c0_i32, %c0_i32_0, %c0_i32_1, %c0_i32_2 : i32, i32, i32, i32, i32
  }
  func.func @transform_1(%arg0: i32) -> (i32, i32, i32, i32, i32) {
    %c0_i32 = arith.constant 0 : i32
    %c0_i32_0 = arith.constant 0 : i32
    %c0_i32_1 = arith.constant 0 : i32
    %c0_i32_2 = arith.constant 0 : i32
    %c0_i32_3 = arith.constant 0 : i32
    return %arg0, %c0_i32, %c0_i32_0, %c0_i32_1, %c0_i32_2 : i32, i32, i32, i32, i32
  }
  func.func @transform_2(%arg0: i32) -> (i32, i32, i32) {
    %c0_i32 = arith.constant 0 : i32
    %c0_i32_0 = arith.constant 0 : i32
    %c0_i32_1 = arith.constant 0 : i32
    %c0_i32_2 = arith.constant 0 : i32
    return %c0_i32, %c0_i32_0, %c0_i32_1 : i32, i32, i32
  }
  func.func @transform_3(%arg0: i32) -> (i32, i32, i32) {
    %c0_i32 = arith.constant 0 : i32
    %c0_i32_0 = arith.constant 0 : i32
    %c0_i32_1 = arith.constant 0 : i32
    %c0_i32_2 = arith.constant 0 : i32
    return %c0_i32, %c0_i32_0, %c0_i32_1 : i32, i32, i32
  }
  func.func @transform_4(%arg0: i32) -> (i32, i32, i32) {
    %c0_i32 = arith.constant 0 : i32
    %c0_i32_0 = arith.constant 0 : i32
    %c0_i32_1 = arith.constant 0 : i32
    %c0_i32_2 = arith.constant 0 : i32
    return %c0_i32, %c0_i32_0, %c0_i32_1 : i32, i32, i32
  }
  func.func @transform_5(%arg0: i32) -> (i32, i32, i32) {
    %c0_i32 = arith.constant 0 : i32
    %c0_i32_0 = arith.constant 0 : i32
    %c0_i32_1 = arith.constant 0 : i32
    %c0_i32_2 = arith.constant 0 : i32
    return %c0_i32, %c0_i32_0, %c0_i32_1 : i32, i32, i32
  }
  func.func @transform_6(%arg0: i32) -> (i32, i32) {
    %c0_i32 = arith.constant 0 : i32
    %c0_i32_0 = arith.constant 0 : i32
    %c0_i32_1 = arith.constant 0 : i32
    return %c0_i32, %c0_i32_0 : i32, i32
  }
  func.func @transform_7(%arg0: i32) -> (i32, i32) {
    %c0_i32 = arith.constant 0 : i32
    %c0_i32_0 = arith.constant 0 : i32
    %c0_i32_1 = arith.constant 0 : i32
    return %c0_i32, %c0_i32_0 : i32, i32
  }
  func.func @transform_8(%arg0: i32) -> (i32, i32, i32) {
    %c0_i32 = arith.constant 0 : i32
    %c0_i32_0 = arith.constant 0 : i32
    %c0_i32_1 = arith.constant 0 : i32
    return %arg0, %c0_i32, %c0_i32_0 : i32, i32, i32
  }
}

</mosaic_0001>

<llo_original>
// kernel: tpu_custom_call.1
$region0: #{tpu_custom_call.1}
  #allocation0 [shape = 'u32[]', space=smem, size = 0x4, offset = 0x4, fixed_abs, tag = 'smem constant byte address 0x4 - core index']
  #allocation1 [shape = 'u32[72,128]{1,0:T(1,128)}', space=vmem, size = 0x9000, scoped, tag = 'internal scratch']
  #allocation2 [shape = 'f32[1,1]{1,0:T(1,128)S(1)}', space=vmem, size = 0x200, scoped, tag = 'scoped memory for tpu_custom_call.1']
  %s0 = inlined_call_operand.hbm [shape: f32[2,8,4,8,32], index: 0, kind: input, shape index: {}]
  %s1 = inlined_call_operand.hbm [shape: f32[2,6,4,8,32], index: 1, kind: input, shape index: {}]
  %s2 = inlined_call_operand.hbm [shape: bf16[4,32,32], index: 2, kind: input, shape index: {}]
  %s3 = inlined_call_operand.hbm [shape: bf16[4,32,32], index: 3, kind: input, shape index: {}]
  %s4 = inlined_call_operand.vmem [shape: f32[4,1,32], index: 4, kind: input, shape index: {}]
  %s5 = inlined_call_operand.hbm [shape: f32[4,1,32], index: 5, kind: input, shape index: {}]
  %s6 = inlined_call_operand.vmem [shape: f32[1,32], index: 6, kind: input, shape index: {}]
  %s7 = inlined_call_operand.<no memory space> [shape: f32[1,1], index: 7, kind: input, shape index: {}]
  %s8 = inlined_call_operand.vmem [shape: f32[2,6,8], index: 8, kind: output, shape index: {}]
  %s9 = sld [smem:[#allocation0]]
  $region85: #{tpu_custom_call.1} parent=0
    _
  %s11 = ssub.s32 1, %s9
  %s12 = scalar_select 0, %s11, %s9
  %v13 = vstv %s7
  %14 = vst [vmem:[#allocation2] sm:$0x1] %v13
  $region1: #{tpu_custom_call.1} parent=0
    #allocation3 [shape = 'u8[262144]{0}', space=vmem, size = 0x40000, scoped, tag = 'input window, operand 0']
    #allocation4 [shape = 's32[2]{0}', space=sflag, size = 0x8, scoped, tag = 'scoped memory for tpu_custom_call.1']
    #allocation5 [shape = 'u8[196608]{0}', space=vmem, size = 0x30000, scoped, tag = 'input window, operand 1']
    #allocation6 [shape = 's32[2]{0}', space=sflag, size = 0x8, scoped, tag = 'scoped memory for tpu_custom_call.1']
    #allocation7 [shape = 'u8[32768]{0}', space=vmem, size = 0x8000, scoped, tag = 'input window, operand 2, single buffered']
    #allocation8 [shape = 'u8[32768]{0}', space=vmem, size = 0x8000, scoped, tag = 'input window, operand 3, single buffered']
    #allocation9 [shape = 's32[1]{0}', space=sflag, size = 0x4, scoped, tag = 'scoped memory for tpu_custom_call.1']
    #allocation10 [shape = 'u8[2048]{0}', space=vmem, size = 0x800, scoped, tag = 'input window, operand 5, single buffered']
    %15 = vsyncpa [#allocation4], 0
    %s16 = scalar_lea.sflag [#allocation4], 1
    %17 = vsyncpa %s16, 0
    %18 = vsyncpa [#allocation6], 0
    %s19 = scalar_lea.sflag [#allocation6], 1
    %20 = vsyncpa %s19, 0
    %21 = vsyncpa [#allocation9], 0
    loop: start=0, step=1, limit=4
    $region2: #{tpu_custom_call.1} parent=1 // loop_pre_header
      _
    $region3: #{tpu_custom_call.1} parent=1 // loop_header
      %s23 = sphi 0, %s27
      %p24 = scmp.ge.s32.totalorder %s23, 4
      %s33 = sphi 0, %s35
      %s36 = sphi 0, %s33
      %s37 = sphi 0, %s36
      %s53 = sphi 0, %s37
      %s59 = sphi 0, %s61
      %s62 = sphi 0, %s59
      %s63 = sphi 0, %s62
      %s79 = sphi 0, %s63
      %s83 = sphi 0, %s83
      %s85 = sphi 0, %s83
      %s86 = sphi 0, %s85
      %s100 = sphi 0, %s86
      %s104 = sphi 0, %s104
      %s106 = sphi 0, %s104
      %s107 = sphi 0, %s106
      %s121 = sphi 0, %s107
      %s125 = sphi 0, %s125
      %s127 = sphi 0, %s125
      %s128 = sphi 0, %s127
      %s142 = sphi 0, %s128
      %s146 = sphi 0, %s146
      %s148 = sphi 0, %s146
      %s149 = sphi 0, %s148
      %s163 = sphi 0, %s149
      %s167 = sphi 0, %s167
      %s169 = sphi 0, %s167
      %s170 = sphi 0, %s169
      %s184 = sphi 0, %s170
      %s188 = sphi 0, %s188
      %s190 = sphi 0, %s188
      %s191 = sphi 0, %s190
      %s205 = sphi 0, %s191
      %s211 = sphi 0, %s213
      %s214 = sphi 0, %s211
      %s215 = sphi 0, %s214
      %s231 = sphi 0, %s215
    $region4: #{tpu_custom_call.1} parent=1 // loop_header_branch
      %26 = sbr.rel (%p24) target = $region8
    $region5: #{tpu_custom_call.1} parent=1 // loop_body
      %s28 = ssub.s32 %s23, 1
      %s29 = ssub.s32 %s23, 2
      %s30 = sadd.s32 %s23, 1
      %s31 = ssub.s32 %s23, %s30
      %p32 = scmp.eq.s32.totalorder %s31, 0
      %s34 = sadd.s32 %s33, 1
      %s35 = scalar_select %p32, %s33, %s34
      %p38 = pneg %p32
      %p39 = scmp.eq.s32.totalorder %s23, 1
      %p40 = por %p38, %p39
      %p41 = scmp.ne.s32.totalorder %s33, %s36
      %p42 = scmp.eq.s32.totalorder %s23, 0
      %p43 = por %p41, %p42
      %p44 = scmp.ne.s32.totalorder %s33, %s36
      %p45 = scmp.eq.s32.totalorder %s28, 1
      %p46 = por %p44, %p45
      %p47 = scmp.ne.s32.totalorder %s36, %s37
      %p48 = scmp.eq.s32.totalorder %s28, 0
      %p49 = por %p47, %p48
      %p50 = scmp.ne.s32.totalorder %s36, %s37
      %p51 = scmp.eq.s32.totalorder %s29, 1
      %p52 = por %p50, %p51
      %p54 = scmp.ne.s32.totalorder %s37, %s53
      %p55 = scmp.eq.s32.totalorder %s29, 0
      %p56 = por %p54, %p55
      %s57 = ssub.s32 %s23, %s30
      %p58 = scmp.eq.s32.totalorder %s57, 0
      %s60 = sadd.s32 %s59, 1
      %s61 = scalar_select %p58, %s59, %s60
      %p64 = pneg %p58
      %p65 = scmp.eq.s32.totalorder %s23, 1
      %p66 = por %p64, %p65
      %p67 = scmp.ne.s32.totalorder %s59, %s62
      %p68 = scmp.eq.s32.totalorder %s23, 0
      %p69 = por %p67, %p68
      %p70 = scmp.ne.s32.totalorder %s59, %s62
      %p71 = scmp.eq.s32.totalorder %s28, 1
      %p72 = por %p70, %p71
      %p73 = scmp.ne.s32.totalorder %s62, %s63
      %p74 = scmp.eq.s32.totalorder %s28, 0
      %p75 = por %p73, %p74
      %p76 = scmp.ne.s32.totalorder %s62, %s63
      %p77 = scmp.eq.s32.totalorder %s29, 1
      %p78 = por %p76, %p77
      %p80 = scmp.ne.s32.totalorder %s63, %s79
      %p81 = scmp.eq.s32.totalorder %s29, 0
      %p82 = por %p80, %p81
      %s84 = sadd.s32 %s83, 1
      %p87 = scmp.eq.s32.totalorder %s23, 1
      %p88 = scmp.ne.s32.totalorder %s83, %s85
      %p89 = scmp.eq.s32.totalorder %s23, 0
      %p90 = por %p88, %p89
      %p91 = scmp.ne.s32.totalorder %s83, %s85
      %p92 = scmp.eq.s32.totalorder %s28, 1
      %p93 = por %p91, %p92
      %p94 = scmp.ne.s32.totalorder %s85, %s86
      %p95 = scmp.eq.s32.totalorder %s28, 0
      %p96 = por %p94, %p95
      %p97 = scmp.ne.s32.totalorder %s85, %s86
      %p98 = scmp.eq.s32.totalorder %s29, 1
      %p99 = por %p97, %p98
      %p101 = scmp.ne.s32.totalorder %s86, %s100
      %p102 = scmp.eq.s32.totalorder %s29, 0
      %p103 = por %p101, %p102
      %s105 = sadd.s32 %s104, 1
      %p108 = scmp.eq.s32.totalorder %s23, 1
      %p109 = scmp.ne.s32.totalorder %s104, %s106
      %p110 = scmp.eq.s32.totalorder %s23, 0
      %p111 = por %p109, %p110
      %p112 = scmp.ne.s32.totalorder %s104, %s106
      %p113 = scmp.eq.s32.totalorder %s28, 1
      %p114 = por %p112, %p113
      %p115 = scmp.ne.s32.totalorder %s106, %s107
      %p116 = scmp.eq.s32.totalorder %s28, 0
      %p117 = por %p115, %p116
      %p118 = scmp.ne.s32.totalorder %s106, %s107
      %p119 = scmp.eq.s32.totalorder %s29, 1
      %p120 = por %p118, %p119
      %p122 = scmp.ne.s32.totalorder %s107, %s121
      %p123 = scmp.eq.s32.totalorder %s29, 0
      %p124 = por %p122, %p123
      %s126 = sadd.s32 %s125, 1
      %p129 = scmp.eq.s32.totalorder %s23, 1
      %p130 = scmp.ne.s32.totalorder %s125, %s127
      %p131 = scmp.eq.s32.totalorder %s23, 0
      %p132 = por %p130, %p131
      %p133 = scmp.ne.s32.totalorder %s125, %s127
      %p134 = scmp.eq.s32.totalorder %s28, 1
      %p135 = por %p133, %p134
      %p136 = scmp.ne.s32.totalorder %s127, %s128
      %p137 = scmp.eq.s32.totalorder %s28, 0
      %p138 = por %p136, %p137
      %p139 = scmp.ne.s32.totalorder %s127, %s128
      %p140 = scmp.eq.s32.totalorder %s29, 1
      %p141 = por %p139, %p140
      %p143 = scmp.ne.s32.totalorder %s128, %s142
      %p144 = scmp.eq.s32.totalorder %s29, 0
      %p145 = por %p143, %p144
      %s147 = sadd.s32 %s146, 1
      %p150 = scmp.eq.s32.totalorder %s23, 1
      %p151 = scmp.ne.s32.totalorder %s146, %s148
      %p152 = scmp.eq.s32.totalorder %s23, 0
      %p153 = por %p151, %p152
      %p154 = scmp.ne.s32.totalorder %s146, %s148
      %p155 = scmp.eq.s32.totalorder %s28, 1
      %p156 = por %p154, %p155
      %p157 = scmp.ne.s32.totalorder %s148, %s149
      %p158 = scmp.eq.s32.totalorder %s28, 0
      %p159 = por %p157, %p158
      %p160 = scmp.ne.s32.totalorder %s148, %s149
      %p161 = scmp.eq.s32.totalorder %s29, 1
      %p162 = por %p160, %p161
      %p164 = scmp.ne.s32.totalorder %s149, %s163
      %p165 = scmp.eq.s32.totalorder %s29, 0
      %p166 = por %p164, %p165
      %s168 = sadd.s32 %s167, 1
      %p171 = scmp.eq.s32.totalorder %s23, 1
      %p172 = scmp.ne.s32.totalorder %s167, %s169
      %p173 = scmp.eq.s32.totalorder %s23, 0
      %p174 = por %p172, %p173
      %p175 = scmp.ne.s32.totalorder %s167, %s169
      %p176 = scmp.eq.s32.totalorder %s28, 1
      %p177 = por %p175, %p176
      %p178 = scmp.ne.s32.totalorder %s169, %s170
      %p179 = scmp.eq.s32.totalorder %s28, 0
      %p180 = por %p178, %p179
      %p181 = scmp.ne.s32.totalorder %s169, %s170
      %p182 = scmp.eq.s32.totalorder %s29, 1
      %p183 = por %p181, %p182
      %p185 = scmp.ne.s32.totalorder %s170, %s184
      %p186 = scmp.eq.s32.totalorder %s29, 0
      %p187 = por %p185, %p186
      %s189 = sadd.s32 %s188, 1
      %p192 = scmp.eq.s32.totalorder %s23, 1
      %p193 = scmp.ne.s32.totalorder %s188, %s190
      %p194 = scmp.eq.s32.totalorder %s23, 0
      %p195 = por %p193, %p194
      %p196 = scmp.ne.s32.totalorder %s188, %s190
      %p197 = scmp.eq.s32.totalorder %s28, 1
      %p198 = por %p196, %p197
      %p199 = scmp.ne.s32.totalorder %s190, %s191
      %p200 = scmp.eq.s32.totalorder %s28, 0
      %p201 = por %p199, %p200
      %p202 = scmp.ne.s32.totalorder %s190, %s191
      %p203 = scmp.eq.s32.totalorder %s29, 1
      %p204 = por %p202, %p203
      %p206 = scmp.ne.s32.totalorder %s191, %s205
      %p207 = scmp.eq.s32.totalorder %s29, 0
      %p208 = por %p206, %p207
      %s209 = ssub.s32 %s23, %s30
      %p210 = scmp.eq.s32.totalorder %s209, 0
      %s212 = sadd.s32 %s211, 1
      %s213 = scalar_select %p210, %s211, %s212
      %p216 = pneg %p210
      %p217 = scmp.eq.s32.totalorder %s23, 1
      %p218 = por %p216, %p217
      %p219 = scmp.ne.s32.totalorder %s211, %s214
      %p220 = scmp.eq.s32.totalorder %s23, 0
      %p221 = por %p219, %p220
      %p222 = scmp.ne.s32.totalorder %s211, %s214
      %p223 = scmp.eq.s32.totalorder %s28, 1
      %p224 = por %p222, %p223
      %p225 = scmp.ne.s32.totalorder %s214, %s215
      %p226 = scmp.eq.s32.totalorder %s28, 0
      %p227 = por %p225, %p226
      %p228 = scmp.ne.s32.totalorder %s214, %s215
      %p229 = scmp.eq.s32.totalorder %s29, 1
      %p230 = por %p228, %p229
      %p232 = scmp.ne.s32.totalorder %s215, %s231
      %p233 = scmp.eq.s32.totalorder %s29, 0
      %p234 = por %p232, %p233
      %p235 = scmp.le.s32.totalorder 1, %s23
      %p236 = scmp.lt.s32.totalorder %s23, 3
      %p237 = pnand %p235, %p236
      %p238 = pneg %p237
      // Predicated region
      $region9: #{tpu_custom_call.1} parent=5 // pred_check
        _
      $region10: #{tpu_custom_call.1} parent=5 // pred_check_branch
        %240 = sbr.rel (%p237) target = $region12
      $region11: #{tpu_custom_call.1} parent=5 // pred_region
        %s241 = ssub.s32 %s23, 1
        // Predicated region
        $region13: #{tpu_custom_call.1} parent=11 // pred_check
          %p242 = pneg %p96
        $region14: #{tpu_custom_call.1} parent=11 // pred_check_branch
          %244 = sbr.rel (%p242) target = $region16
        $region15: #{tpu_custom_call.1} parent=11 // pred_region
          %246 = vsyncadd [#allocation6], 0
          %s247 = sshll.u32 %s2, 4
          %s248 = int_to_ptr.hbm [resolvable:$true] %s247
          %s249 = sshll.u32 [#allocation7], 4
          %s250 = int_to_ptr.vmem [resolvable:$true] %s249
          %255 = dma.hbm_to_vmem [thread:$0]  %s248, 1024, %s250, [#allocation6], 64, 64, 4
        $region16: #{tpu_custom_call.1} parent=11 // pred_fallthru
          _
        // Predicated region
        $region17: #{tpu_custom_call.1} parent=11 // pred_check
          %p256 = pneg %p117
        $region18: #{tpu_custom_call.1} parent=11 // pred_check_branch
          %258 = sbr.rel (%p256) target = $region20
        $region19: #{tpu_custom_call.1} parent=11 // pred_region
          %260 = vsyncadd [#allocation9], 0
          %s261 = sshll.u32 %s3, 4
          %s262 = int_to_ptr.hbm [resolvable:$true] %s261
          %s263 = sshll.u32 [#allocation8], 4
          %s264 = int_to_ptr.vmem [resolvable:$true] %s263
          %269 = dma.hbm_to_vmem [thread:$0]  %s262, 1024, %s264, [#allocation9], 64, 64, 4
        $region20: #{tpu_custom_call.1} parent=11 // pred_fallthru
          _
        // Predicated region
        $region21: #{tpu_custom_call.1} parent=11 // pred_check
          %p270 = pneg %p138
        $region22: #{tpu_custom_call.1} parent=11 // pred_check_branch
          %272 = sbr.rel (%p270) target = $region24
        $region23: #{tpu_custom_call.1} parent=11 // pred_region
          _
        $region24: #{tpu_custom_call.1} parent=11 // pred_fallthru
          _
        // Predicated region
        $region25: #{tpu_custom_call.1} parent=11 // pred_check
          %p273 = pneg %p159
        $region26: #{tpu_custom_call.1} parent=11 // pred_check_branch
          %275 = sbr.rel (%p273) target = $region28
        $region27: #{tpu_custom_call.1} parent=11 // pred_region
          %277 = vsyncadd [#allocation9], 0
          %s278 = sshll.u32 %s5, 4
          %s279 = int_to_ptr.hbm [resolvable:$true] %s278
          %s280 = sshll.u32 [#allocation10], 4
          %s281 = int_to_ptr.vmem [resolvable:$true] %s280
          %286 = dma.hbm_to_vmem [thread:$0]  %s279, 64, %s281, [#allocation9], 16, 16, 1
        $region28: #{tpu_custom_call.1} parent=11 // pred_fallthru
          _
        // Predicated region
        $region29: #{tpu_custom_call.1} parent=11 // pred_check
          %p287 = pneg %p180
        $region30: #{tpu_custom_call.1} parent=11 // pred_check_branch
          %289 = sbr.rel (%p287) target = $region32
        $region31: #{tpu_custom_call.1} parent=11 // pred_region
          _
        $region32: #{tpu_custom_call.1} parent=11 // pred_fallthru
          _
        // Predicated region
        $region33: #{tpu_custom_call.1} parent=11 // pred_check
          %p290 = pneg %p201
        $region34: #{tpu_custom_call.1} parent=11 // pred_check_branch
          %292 = sbr.rel (%p290) target = $region36
        $region35: #{tpu_custom_call.1} parent=11 // pred_region
          _
        $region36: #{tpu_custom_call.1} parent=11 // pred_fallthru
          _
      $region12: #{tpu_custom_call.1} parent=5 // pred_fallthru
        _
      %p293 = scmp.lt.s32.totalorder %s23, 2
      // Predicated region
      $region37: #{tpu_custom_call.1} parent=5 // pred_check
        %p294 = pneg %p293
      $region38: #{tpu_custom_call.1} parent=5 // pred_check_branch
        %296 = sbr.rel (%p294) target = $region40
      $region39: #{tpu_custom_call.1} parent=5 // pred_region
        // Predicated region
        $region41: #{tpu_custom_call.1} parent=39 // pred_check
          %p297 = pneg %p43
        $region42: #{tpu_custom_call.1} parent=39 // pred_check_branch
          %299 = sbr.rel (%p297) target = $region44
        $region43: #{tpu_custom_call.1} parent=39 // pred_region
          %s300 = sand.u32 %s33, 1
          %s301 = scalar_lea.sflag [#allocation4], %s300
          %s302 = sand.u32 %s33, 1
          %s303 = smul.addr %s302, 256
          %s304 = scalar_lea.vmem [#allocation3], %s303
          %306 = vsyncadd %s301, 0
          %s307 = smul.addr %s23, 32
          %s308 = smul.addr %s307, 8
          %s309 = scalar_lea.hbm %s0, %s308
          %s310 = sshll.u32 %s309, 4
          %s311 = int_to_ptr.hbm [resolvable:$true] %s310
          %s312 = sshll.u32 %s304, 4
          %s313 = int_to_ptr.vmem [resolvable:$true] %s312
          %318 = dma.hbm_to_vmem [thread:$0]  %s311, 4096, %s313, %s301, 128, 128, 8
        $region44: #{tpu_custom_call.1} parent=39 // pred_fallthru
          _
        // Predicated region
        $region45: #{tpu_custom_call.1} parent=39 // pred_check
          %p319 = pneg %p69
        $region46: #{tpu_custom_call.1} parent=39 // pred_check_branch
          %321 = sbr.rel (%p319) target = $region48
        $region47: #{tpu_custom_call.1} parent=39 // pred_region
          %s322 = sand.u32 %s23, 1
          %s323 = scalar_lea.sflag [#allocation6], %s322
          %s324 = sand.u32 %s59, 1
          %s325 = smul.addr %s324, 192
          %s326 = scalar_lea.vmem [#allocation5], %s325
          %328 = vsyncadd %s323, 0
          %s329 = smul.addr %s23, 24
          %s330 = smul.addr %s329, 8
          %s331 = scalar_lea.hbm %s1, %s330
          %s332 = sshll.u32 %s331, 4
          %s333 = int_to_ptr.hbm [resolvable:$true] %s332
          %s334 = sshll.u32 %s326, 4
          %s335 = int_to_ptr.vmem [resolvable:$true] %s334
          %340 = dma.hbm_to_vmem [thread:$0]  %s333, 3072, %s335, %s323, 128, 128, 8
        $region48: #{tpu_custom_call.1} parent=39 // pred_fallthru
          _
      $region40: #{tpu_custom_call.1} parent=5 // pred_fallthru
        _
      %p341 = scmp.le.s32.totalorder 1, %s23
      %p342 = scmp.lt.s32.totalorder %s23, 3
      %p343 = pnand %p341, %p342
      %p344 = pneg %p343
      // Predicated region
      $region49: #{tpu_custom_call.1} parent=5 // pred_check
        _
      $region50: #{tpu_custom_call.1} parent=5 // pred_check_branch
        %346 = sbr.rel (%p343) target = $region52
      $region51: #{tpu_custom_call.1} parent=5 // pred_region
        %s347 = ssub.s32 %s23, 1
        %s348 = sand.u32 %s36, 1
        %s349 = scalar_lea.sflag [#allocation4], %s348
        %s350 = sand.u32 %s36, 1
        %s351 = smul.addr %s350, 256
        %s352 = scalar_lea.vmem [#allocation3], %s351
        // Predicated region
        $region53: #{tpu_custom_call.1} parent=51 // pred_check
          %p353 = pneg %p49
        $region54: #{tpu_custom_call.1} parent=51 // pred_check_branch
          %355 = sbr.rel (%p353) target = $region56
        $region55: #{tpu_custom_call.1} parent=51 // pred_region
          %357 = dma.done %s349, 4096
        $region56: #{tpu_custom_call.1} parent=51 // pred_fallthru
          _
        %s358 = sand.u32 %s28, 1
        %s359 = scalar_lea.sflag [#allocation6], %s358
        %s360 = sand.u32 %s62, 1
        %s361 = smul.addr %s360, 192
        %s362 = scalar_lea.vmem [#allocation5], %s361
        // Predicated region
        $region57: #{tpu_custom_call.1} parent=51 // pred_check
          %p363 = pneg %p75
        $region58: #{tpu_custom_call.1} parent=51 // pred_check_branch
          %365 = sbr.rel (%p363) target = $region60
        $region59: #{tpu_custom_call.1} parent=51 // pred_region
          %367 = dma.done %s359, 3072
        $region60: #{tpu_custom_call.1} parent=51 // pred_fallthru
          _
        // Predicated region
        $region61: #{tpu_custom_call.1} parent=51 // pred_check
          %p368 = pneg %p96
        $region62: #{tpu_custom_call.1} parent=51 // pred_check_branch
          %370 = sbr.rel (%p368) target = $region64
        $region63: #{tpu_custom_call.1} parent=51 // pred_region
          %372 = dma.done [#allocation6], 1024
        $region64: #{tpu_custom_call.1} parent=51 // pred_fallthru
          _
        // Predicated region
        $region65: #{tpu_custom_call.1} parent=51 // pred_check
          %p373 = pneg %p117
        $region66: #{tpu_custom_call.1} parent=51 // pred_check_branch
          %375 = sbr.rel (%p373) target = $region68
        $region67: #{tpu_custom_call.1} parent=51 // pred_region
          %377 = dma.done [#allocation9], 1024
        $region68: #{tpu_custom_call.1} parent=51 // pred_fallthru
          _
        // Predicated region
        $region69: #{tpu_custom_call.1} parent=51 // pred_check
          %p378 = pneg %p159
        $region70: #{tpu_custom_call.1} parent=51 // pred_check_branch
          %380 = sbr.rel (%p378) target = $region72
        $region71: #{tpu_custom_call.1} parent=51 // pred_region
          %382 = dma.done [#allocation9], 64
        $region72: #{tpu_custom_call.1} parent=51 // pred_fallthru
          _
        %s383 = sand.u32 %s36, 1
        %s384 = scalar_lea.sflag [#allocation4], %s383
        %s385 = sand.u32 %s36, 1
        %s386 = smul.addr %s385, 256
        %s387 = scalar_lea.vmem [#allocation3], %s386
        %p388 = pneg %p49
        %p389 = pneg %p46
        %s390 = sand.u32 %s28, 1
        %s391 = scalar_lea.sflag [#allocation6], %s390
        %s392 = sand.u32 %s62, 1
        %s393 = smul.addr %s392, 192
        %s394 = scalar_lea.vmem [#allocation5], %s393
        %p395 = pneg %p75
        %p396 = pneg %p72
        %p397 = pneg %p96
        %p398 = pneg %p93
        %p399 = pneg %p117
        %p400 = pneg %p114
        %p401 = pneg %p138
        %p402 = pneg %p135
        %p403 = pneg %p159
        %p404 = pneg %p156
        %p405 = pneg %p180
        %p406 = pneg %p177
        %p407 = pneg %p201
        %p408 = pneg %p198
        %p409 = pneg %p227
        %p410 = pneg %p224
        %p411 = scmp.lt.s32.totalorder %s28, 1
        %s412 = scalar_select %p411, %s28, 1
        %s413 = smul.addr %s412, 8
        %s414 = scalar_lea.vmem %s8, %s413
        %p415 = scmp.lt.s32.totalorder %s28, 1
        %s416 = scalar_select %p415, %s28, 1
        %s417 = smul.addr %s416, 8
        %s418 = scalar_lea.vmem %s8, %s417
        %v420 = vld [vmem:[#allocation7] sm:$0xf]
        %v421 = vld [vmem:[#allocation7 + $0x4] sm:$0xf]
        %v422 = vld [vmem:[#allocation7 + $0x8] sm:$0xf]
        %v423 = vld [vmem:[#allocation7 + $0xc] sm:$0xf]
        %s424 = scalar_lea.vmem [#allocation7], 16
        %v425 = vld [vmem:[%s424] sm:$0xf]
        %v426 = vld [vmem:[%s424 + $0x4] sm:$0xf]
        %v427 = vld [vmem:[%s424 + $0x8] sm:$0xf]
        %v428 = vld [vmem:[%s424 + $0xc] sm:$0xf]
        %s429 = scalar_lea.vmem [#allocation7], 32
        %v430 = vld [vmem:[%s429] sm:$0xf]
        %v431 = vld [vmem:[%s429 + $0x4] sm:$0xf]
        %v432 = vld [vmem:[%s429 + $0x8] sm:$0xf]
        %v433 = vld [vmem:[%s429 + $0xc] sm:$0xf]
        %s434 = scalar_lea.vmem [#allocation7], 48
        %v435 = vld [vmem:[%s434] sm:$0xf]
        %v436 = vld [vmem:[%s434 + $0x4] sm:$0xf]
        %v437 = vld [vmem:[%s434 + $0x8] sm:$0xf]
        %v438 = vld [vmem:[%s434 + $0xc] sm:$0xf]
        %v439 = vld [vmem:[#allocation8] sm:$0xf]
        %v440 = vld [vmem:[#allocation8 + $0x4] sm:$0xf]
        %v441 = vld [vmem:[#allocation8 + $0x8] sm:$0xf]
        %v442 = vld [vmem:[#allocation8 + $0xc] sm:$0xf]
        %s443 = scalar_lea.vmem [#allocation8], 16
        %v444 = vld [vmem:[%s443] sm:$0xf]
        %v445 = vld [vmem:[%s443 + $0x4] sm:$0xf]
        %v446 = vld [vmem:[%s443 + $0x8] sm:$0xf]
        %v447 = vld [vmem:[%s443 + $0xc] sm:$0xf]
        %s448 = scalar_lea.vmem [#allocation8], 32
        %v449 = vld [vmem:[%s448] sm:$0xf]
        %v450 = vld [vmem:[%s448 + $0x4] sm:$0xf]
        %v451 = vld [vmem:[%s448 + $0x8] sm:$0xf]
        %v452 = vld [vmem:[%s448 + $0xc] sm:$0xf]
        %s453 = scalar_lea.vmem [#allocation8], 48
        %v454 = vld [vmem:[%s453] sm:$0xf]
        %v455 = vld [vmem:[%s453 + $0x4] sm:$0xf]
        %v456 = vld [vmem:[%s453 + $0x8] sm:$0xf]
        %v457 = vld [vmem:[%s453 + $0xc] sm:$0xf]
        %v458 = vld [vmem:[%s352] sm:$0xff]
        %s459 = scalar_lea.vmem %s352, 8 [#allocation3]
        %v460 = vld [vmem:[%s459] sm:$0xff]
        %s461 = scalar_lea.vmem %s352, 16 [#allocation3]
        %v462 = vld [vmem:[%s461] sm:$0xff]
        %s463 = scalar_lea.vmem %s352, 24 [#allocation3]
        %v464 = vld [vmem:[%s463] sm:$0xff]
        %v469 = vunpack.c.l.b16 %v420
        %v470 = vunpack.c.l.b16 %v421
        %v471 = vunpack.c.l.b16 %v422
        %v472 = vunpack.c.l.b16 %v423
        %v473 = vpack.c.b16 %v470, %v469
        %v474 = vpack.c.b16 %v472, %v471
        %vm477 = vcmask 261120
        %v479 = vsel %vm477, 0, 0
        %481 = vmatpush.bf16.msra.mxu0 0
        %482 = vmatpush.bf16.msra.mxu0 0
        %483 = vmatpush.bf16.msra.mxu0 0
        %484 = vmatpush.bf16.msra.mxu0 0
        %485 = vmatpush.bf16.msra.mxu0 0
        %486 = vmatpush.bf16.msra.mxu0 0
        %487 = vmatpush.bf16.msra.mxu0 %v474
        %488 = vmatpush.bf16.msra.mxu0 %v473
        %489 = vmatmul.bf16.gmra.mxu0 %v479
        %v490 = vpop.f32.mrf.mxu0
        %v491 = vadd.f32 0.0, %v490
        %v492 = vpop.f32.mrf.mxu0
        %493 = vdwg.mxu0
        %v494 = vadd.f32 %v458, %v491
        %v495 = vxor.u32 %v494, 2147483648
        %v496 = vmul.f32 %v495, 1.442695
        %v497 = vpow.pop %v496
        %v498 = vadd.f32 %v497, 1.0
        %v499 = vrcp.pop %v498
        %v500 = vmul.f32 %v498, %v499
        %v501 = vsub.f32 1.0, %v500
        %v502 = vmul.f32 %v499, %v501
        %v503 = vadd.f32 %v499, %v502
        %vm504 = vweird.f32 %v498
        %vm505 = vweird.f32 %v499
        %vm506 = vmor %vm504, %vm505
        %v507 = vsel %vm506, %v499, %v503
        %v508 = vand.u32 2147483647, %v498
        %vm509 = vcmp.eq.f32.partialorder %v508, 8.507059e+37
        %v510 = vand.u32 %v498, 2147483648
        %v511 = vor.u32 1.1754944e-38, %v510
        %v512 = vsel %vm509, %v511, %v507
        %v513 = vmul.f32 1.0, %v512
        %v518 = vunpack.c.l.b16 %v425
        %v519 = vunpack.c.l.b16 %v426
        %v520 = vunpack.c.l.b16 %v427
        %v521 = vunpack.c.l.b16 %v428
        %v522 = vpack.c.b16 %v519, %v518
        %v523 = vpack.c.b16 %v521, %v520
        %526 = vmatpush.bf16.msra.mxu0 0
        %527 = vmatpush.bf16.msra.mxu0 0
        %528 = vmatpush.bf16.msra.mxu0 0
        %529 = vmatpush.bf16.msra.mxu0 0
        %530 = vmatpush.bf16.msra.mxu0 0
        %531 = vmatpush.bf16.msra.mxu0 0
        %532 = vmatpush.bf16.msra.mxu0 %v523
        %533 = vmatpush.bf16.msra.mxu0 %v522
        %534 = vmatmul.bf16.gmra.mxu0 %v479
        %v535 = vpop.f32.mrf.mxu0
        %v536 = vadd.f32 0.0, %v535
        %v537 = vpop.f32.mrf.mxu0
        %538 = vdwg.mxu0
        %v539 = vadd.f32 %v460, %v536
        %v540 = vxor.u32 %v539, 2147483648
        %v541 = vmul.f32 %v540, 1.442695
        %v542 = vpow.pop %v541
        %v543 = vadd.f32 %v542, 1.0
        %v544 = vrcp.pop %v543
        %v545 = vmul.f32 %v543, %v544
        %v546 = vsub.f32 1.0, %v545
        %v547 = vmul.f32 %v544, %v546
        %v548 = vadd.f32 %v544, %v547
        %vm549 = vweird.f32 %v543
        %vm550 = vweird.f32 %v544
        %vm551 = vmor %vm549, %vm550
        %v552 = vsel %vm551, %v544, %v548
        %v553 = vand.u32 2147483647, %v543
        %vm554 = vcmp.eq.f32.partialorder %v553, 8.507059e+37
        %v555 = vand.u32 %v543, 2147483648
        %v556 = vor.u32 1.1754944e-38, %v555
        %v557 = vsel %vm554, %v556, %v552
        %v558 = vmul.f32 1.0, %v557
        %v563 = vunpack.c.l.b16 %v430
        %v564 = vunpack.c.l.b16 %v431
        %v565 = vunpack.c.l.b16 %v432
        %v566 = vunpack.c.l.b16 %v433
        %v567 = vpack.c.b16 %v564, %v563
        %v568 = vpack.c.b16 %v566, %v565
        %571 = vmatpush.bf16.msra.mxu0 0
        %572 = vmatpush.bf16.msra.mxu0 0
        %573 = vmatpush.bf16.msra.mxu0 0
        %574 = vmatpush.bf16.msra.mxu0 0
        %575 = vmatpush.bf16.msra.mxu0 0
        %576 = vmatpush.bf16.msra.mxu0 0
        %577 = vmatpush.bf16.msra.mxu0 %v568
        %578 = vmatpush.bf16.msra.mxu0 %v567
        %579 = vmatmul.bf16.gmra.mxu0 %v479
        %v580 = vpop.f32.mrf.mxu0
        %v581 = vadd.f32 0.0, %v580
        %v582 = vpop.f32.mrf.mxu0
        %583 = vdwg.mxu0
        %v584 = vadd.f32 %v462, %v581
        %v585 = vtanh.pop %v584
        %v590 = vunpack.c.l.b16 %v435
        %v591 = vunpack.c.l.b16 %v436
        %v592 = vunpack.c.l.b16 %v437
        %v593 = vunpack.c.l.b16 %v438
        %v594 = vpack.c.b16 %v591, %v590
        %v595 = vpack.c.b16 %v593, %v592
        %598 = vmatpush.bf16.msra.mxu0 0
        %599 = vmatpush.bf16.msra.mxu0 0
        %600 = vmatpush.bf16.msra.mxu0 0
        %601 = vmatpush.bf16.msra.mxu0 0
        %602 = vmatpush.bf16.msra.mxu0 0
        %603 = vmatpush.bf16.msra.mxu0 0
        %604 = vmatpush.bf16.msra.mxu0 %v595
        %605 = vmatpush.bf16.msra.mxu0 %v594
        %606 = vmatmul.bf16.gmra.mxu0 %v479
        %v607 = vpop.f32.mrf.mxu0
        %v608 = vadd.f32 0.0, %v607
        %v609 = vpop.f32.mrf.mxu0
        %610 = vdwg.mxu0
        %v611 = vadd.f32 %v464, %v608
        %v612 = vxor.u32 %v611, 2147483648
        %v613 = vmul.f32 %v612, 1.442695
        %v614 = vpow.pop %v613
        %v615 = vadd.f32 %v614, 1.0
        %v616 = vrcp.pop %v615
        %v617 = vmul.f32 %v615, %v616
        %v618 = vsub.f32 1.0, %v617
        %v619 = vmul.f32 %v616, %v618
        %v620 = vadd.f32 %v616, %v619
        %vm621 = vweird.f32 %v615
        %vm622 = vweird.f32 %v616
        %vm623 = vmor %vm621, %vm622
        %v624 = vsel %vm623, %v616, %v620
        %v625 = vand.u32 2147483647, %v615
        %vm626 = vcmp.eq.f32.partialorder %v625, 8.507059e+37
        %v627 = vand.u32 %v615, 2147483648
        %v628 = vor.u32 1.1754944e-38, %v627
        %v629 = vsel %vm626, %v628, %v624
        %v630 = vmul.f32 1.0, %v629
        %v631 = vmul.f32 %v558, 0.0
        %v632 = vmul.f32 %v513, %v585
        %v633 = vadd.f32 %v631, %v632
        %v634 = vtanh.pop %v633
        %v635 = vmul.f32 %v630, %v634
        %s636 = scalar_lea.vmem %s352, 32 [#allocation3]
        %v637 = vld [vmem:[%s636] sm:$0xff]
        %s638 = scalar_lea.vmem %s352, 40 [#allocation3]
        %v639 = vld [vmem:[%s638] sm:$0xff]
        %s640 = scalar_lea.vmem %s352, 48 [#allocation3]
        %v641 = vld [vmem:[%s640] sm:$0xff]
        %s642 = scalar_lea.vmem %s352, 56 [#allocation3]
        %v643 = vld [vmem:[%s642] sm:$0xff]
        %v644 = vpack.c.bf16 %v635, %v635
        %v646 = vsel %vm477, %v644, 0
        %648 = vmatpush.bf16.msra.mxu0 0
        %649 = vmatpush.bf16.msra.mxu0 0
        %650 = vmatpush.bf16.msra.mxu0 0
        %651 = vmatpush.bf16.msra.mxu0 0
        %652 = vmatpush.bf16.msra.mxu0 0
        %653 = vmatpush.bf16.msra.mxu0 0
        %654 = vmatpush.bf16.msra.mxu0 %v474
        %655 = vmatpush.bf16.msra.mxu0 %v473
        %656 = vmatmul.bf16.gmra.mxu0 %v646
        %v657 = vpop.f32.mrf.mxu0
        %v658 = vadd.f32 0.0, %v657
        %v659 = vpop.f32.mrf.mxu0
        %660 = vdwg.mxu0
        %v661 = vadd.f32 %v637, %v658
        %v662 = vxor.u32 %v661, 2147483648
        %v663 = vmul.f32 %v662, 1.442695
        %v664 = vpow.pop %v663
        %v665 = vadd.f32 %v664, 1.0
        %v666 = vrcp.pop %v665
        %v667 = vmul.f32 %v665, %v666
        %v668 = vsub.f32 1.0, %v667
        %v669 = vmul.f32 %v666, %v668
        %v670 = vadd.f32 %v666, %v669
        %vm671 = vweird.f32 %v665
        %vm672 = vweird.f32 %v666
        %vm673 = vmor %vm671, %vm672
        %v674 = vsel %vm673, %v666, %v670
        %v675 = vand.u32 2147483647, %v665
        %vm676 = vcmp.eq.f32.partialorder %v675, 8.507059e+37
        %v677 = vand.u32 %v665, 2147483648
        %v678 = vor.u32 1.1754944e-38, %v677
        %v679 = vsel %vm676, %v678, %v674
        %v680 = vmul.f32 1.0, %v679
        %681 = vmatpush.bf16.msra.mxu0 0
        %682 = vmatpush.bf16.msra.mxu0 0
        %683 = vmatpush.bf16.msra.mxu0 0
        %684 = vmatpush.bf16.msra.mxu0 0
        %685 = vmatpush.bf16.msra.mxu0 0
        %686 = vmatpush.bf16.msra.mxu0 0
        %687 = vmatpush.bf16.msra.mxu0 %v523
        %688 = vmatpush.bf16.msra.mxu0 %v522
        %689 = vmatmul.bf16.gmra.mxu0 %v646
        %v690 = vpop.f32.mrf.mxu0
        %v691 = vadd.f32 0.0, %v690
        %v692 = vpop.f32.mrf.mxu0
        %693 = vdwg.mxu0
        %v694 = vadd.f32 %v639, %v691
        %v695 = vxor.u32 %v694, 2147483648
        %v696 = vmul.f32 %v695, 1.442695
        %v697 = vpow.pop %v696
        %v698 = vadd.f32 %v697, 1.0
        %v699 = vrcp.pop %v698
        %v700 = vmul.f32 %v698, %v699
        %v701 = vsub.f32 1.0, %v700
        %v702 = vmul.f32 %v699, %v701
        %v703 = vadd.f32 %v699, %v702
        %vm704 = vweird.f32 %v698
        %vm705 = vweird.f32 %v699
        %vm706 = vmor %vm704, %vm705
        %v707 = vsel %vm706, %v699, %v703
        %v708 = vand.u32 2147483647, %v698
        %vm709 = vcmp.eq.f32.partialorder %v708, 8.507059e+37
        %v710 = vand.u32 %v698, 2147483648
        %v711 = vor.u32 1.1754944e-38, %v710
        %v712 = vsel %vm709, %v711, %v707
        %v713 = vmul.f32 1.0, %v712
        %714 = vmatpush.bf16.msra.mxu0 0
        %715 = vmatpush.bf16.msra.mxu0 0
        %716 = vmatpush.bf16.msra.mxu0 0
        %717 = vmatpush.bf16.msra.mxu0 0
        %718 = vmatpush.bf16.msra.mxu0 0
        %719 = vmatpush.bf16.msra.mxu0 0
        %720 = vmatpush.bf16.msra.mxu0 %v568
        %721 = vmatpush.bf16.msra.mxu0 %v567
        %722 = vmatmul.bf16.gmra.mxu0 %v646
        %v723 = vpop.f32.mrf.mxu0
        %v724 = vadd.f32 0.0, %v723
        %v725 = vpop.f32.mrf.mxu0
        %726 = vdwg.mxu0
        %v727 = vadd.f32 %v641, %v724
        %v728 = vtanh.pop %v727
        %729 = vmatpush.bf16.msra.mxu0 0
        %730 = vmatpush.bf16.msra.mxu0 0
        %731 = vmatpush.bf16.msra.mxu0 0
        %732 = vmatpush.bf16.msra.mxu0 0
        %733 = vmatpush.bf16.msra.mxu0 0
        %734 = vmatpush.bf16.msra.mxu0 0
        %735 = vmatpush.bf16.msra.mxu0 %v595
        %736 = vmatpush.bf16.msra.mxu0 %v594
        %737 = vmatmul.bf16.gmra.mxu0 %v646
        %v738 = vpop.f32.mrf.mxu0
        %v739 = vadd.f32 0.0, %v738
        %v740 = vpop.f32.mrf.mxu0
        %741 = vdwg.mxu0
        %v742 = vadd.f32 %v643, %v739
        %v743 = vxor.u32 %v742, 2147483648
        %v744 = vmul.f32 %v743, 1.442695
        %v745 = vpow.pop %v744
        %v746 = vadd.f32 %v745, 1.0
        %v747 = vrcp.pop %v746
        %v748 = vmul.f32 %v746, %v747
        %v749 = vsub.f32 1.0, %v748
        %v750 = vmul.f32 %v747, %v749
        %v751 = vadd.f32 %v747, %v750
        %vm752 = vweird.f32 %v746
        %vm753 = vweird.f32 %v747
        %vm754 = vmor %vm752, %vm753
        %v755 = vsel %vm754, %v747, %v751
        %v756 = vand.u32 2147483647, %v746
        %vm757 = vcmp.eq.f32.partialorder %v756, 8.507059e+37
        %v758 = vand.u32 %v746, 2147483648
        %v759 = vor.u32 1.1754944e-38, %v758
        %v760 = vsel %vm757, %v759, %v755
        %v761 = vmul.f32 1.0, %v760
        %v762 = vmul.f32 %v713, %v633
        %v763 = vmul.f32 %v680, %v728
        %v764 = vadd.f32 %v762, %v763
        %v765 = vtanh.pop %v764
        %v766 = vmul.f32 %v761, %v765
        %s767 = scalar_lea.vmem %s352, 64 [#allocation3]
        %v768 = vld [vmem:[%s767] sm:$0xff]
        %s769 = scalar_lea.vmem %s352, 72 [#allocation3]
        %v770 = vld [vmem:[%s769] sm:$0xff]
        %s771 = scalar_lea.vmem %s352, 80 [#allocation3]
        %v772 = vld [vmem:[%s771] sm:$0xff]
        %s773 = scalar_lea.vmem %s352, 88 [#allocation3]
        %v774 = vld [vmem:[%s773] sm:$0xff]
        %v775 = vpack.c.bf16 %v766, %v766
        %v777 = vsel %vm477, %v775, 0
        %779 = vmatpush.bf16.msra.mxu0 0
        %780 = vmatpush.bf16.msra.mxu0 0
        %781 = vmatpush.bf16.msra.mxu0 0
        %782 = vmatpush.bf16.msra.mxu0 0
        %783 = vmatpush.bf16.msra.mxu0 0
        %784 = vmatpush.bf16.msra.mxu0 0
        %785 = vmatpush.bf16.msra.mxu0 %v474
        %786 = vmatpush.bf16.msra.mxu0 %v473
        %787 = vmatmul.bf16.gmra.mxu0 %v777
        %v788 = vpop.f32.mrf.mxu0
        %v789 = vadd.f32 0.0, %v788
        %v790 = vpop.f32.mrf.mxu0
        %791 = vdwg.mxu0
        %v792 = vadd.f32 %v768, %v789
        %v793 = vxor.u32 %v792, 2147483648
        %v794 = vmul.f32 %v793, 1.442695
        %v795 = vpow.pop %v794
        %v796 = vadd.f32 %v795, 1.0
        %v797 = vrcp.pop %v796
        %v798 = vmul.f32 %v796, %v797
        %v799 = vsub.f32 1.0, %v798
        %v800 = vmul.f32 %v797, %v799
        %v801 = vadd.f32 %v797, %v800
        %vm802 = vweird.f32 %v796
        %vm803 = vweird.f32 %v797
        %vm804 = vmor %vm802, %vm803
        %v805 = vsel %vm804, %v797, %v801
        %v806 = vand.u32 2147483647, %v796
        %vm807 = vcmp.eq.f32.partialorder %v806, 8.507059e+37
        %v808 = vand.u32 %v796, 2147483648
        %v809 = vor.u32 1.1754944e-38, %v808
        %v810 = vsel %vm807, %v809, %v805
        %v811 = vmul.f32 1.0, %v810
        %812 = vmatpush.bf16.msra.mxu0 0
        %813 = vmatpush.bf16.msra.mxu0 0
        %814 = vmatpush.bf16.msra.mxu0 0
        %815 = vmatpush.bf16.msra.mxu0 0
        %816 = vmatpush.bf16.msra.mxu0 0
        %817 = vmatpush.bf16.msra.mxu0 0
        %818 = vmatpush.bf16.msra.mxu0 %v523
        %819 = vmatpush.bf16.msra.mxu0 %v522
        %820 = vmatmul.bf16.gmra.mxu0 %v777
        %v821 = vpop.f32.mrf.mxu0
        %v822 = vadd.f32 0.0, %v821
        %v823 = vpop.f32.mrf.mxu0
        %824 = vdwg.mxu0
        %v825 = vadd.f32 %v770, %v822
        %v826 = vxor.u32 %v825, 2147483648
        %v827 = vmul.f32 %v826, 1.442695
        %v828 = vpow.pop %v827
        %v829 = vadd.f32 %v828, 1.0
        %v830 = vrcp.pop %v829
        %v831 = vmul.f32 %v829, %v830
        %v832 = vsub.f32 1.0, %v831
        %v833 = vmul.f32 %v830, %v832
        %v834 = vadd.f32 %v830, %v833
        %vm835 = vweird.f32 %v829
        %vm836 = vweird.f32 %v830
        %vm837 = vmor %vm835, %vm836
        %v838 = vsel %vm837, %v830, %v834
        %v839 = vand.u32 2147483647, %v829
        %vm840 = vcmp.eq.f32.partialorder %v839, 8.507059e+37
        %v841 = vand.u32 %v829, 2147483648
        %v842 = vor.u32 1.1754944e-38, %v841
        %v843 = vsel %vm840, %v842, %v838
        %v844 = vmul.f32 1.0, %v843
        %845 = vmatpush.bf16.msra.mxu0 0
        %846 = vmatpush.bf16.msra.mxu0 0
        %847 = vmatpush.bf16.msra.mxu0 0
        %848 = vmatpush.bf16.msra.mxu0 0
        %849 = vmatpush.bf16.msra.mxu0 0
        %850 = vmatpush.bf16.msra.mxu0 0
        %851 = vmatpush.bf16.msra.mxu0 %v568
        %852 = vmatpush.bf16.msra.mxu0 %v567
        %853 = vmatmul.bf16.gmra.mxu0 %v777
        %v854 = vpop.f32.mrf.mxu0
        %v855 = vadd.f32 0.0, %v854
        %v856 = vpop.f32.mrf.mxu0
        %857 = vdwg.mxu0
        %v858 = vadd.f32 %v772, %v855
        %v859 = vtanh.pop %v858
        %860 = vmatpush.bf16.msra.mxu0 0
        %861 = vmatpush.bf16.msra.mxu0 0
        %862 = vmatpush.bf16.msra.mxu0 0
        %863 = vmatpush.bf16.msra.mxu0 0
        %864 = vmatpush.bf16.msra.mxu0 0
        %865 = vmatpush.bf16.msra.mxu0 0
        %866 = vmatpush.bf16.msra.mxu0 %v595
        %867 = vmatpush.bf16.msra.mxu0 %v594
        %868 = vmatmul.bf16.gmra.mxu0 %v777
        %v869 = vpop.f32.mrf.mxu0
        %v870 = vadd.f32 0.0, %v869
        %v871 = vpop.f32.mrf.mxu0
        %872 = vdwg.mxu0
        %v873 = vadd.f32 %v774, %v870
        %v874 = vxor.u32 %v873, 2147483648
        %v875 = vmul.f32 %v874, 1.442695
        %v876 = vpow.pop %v875
        %v877 = vadd.f32 %v876, 1.0
        %v878 = vrcp.pop %v877
        %v879 = vmul.f32 %v877, %v878
        %v880 = vsub.f32 1.0, %v879
        %v881 = vmul.f32 %v878, %v880
        %v882 = vadd.f32 %v878, %v881
        %vm883 = vweird.f32 %v877
        %vm884 = vweird.f32 %v878
        %vm885 = vmor %vm883, %vm884
        %v886 = vsel %vm885, %v878, %v882
        %v887 = vand.u32 2147483647, %v877
        %vm888 = vcmp.eq.f32.partialorder %v887, 8.507059e+37
        %v889 = vand.u32 %v877, 2147483648
        %v890 = vor.u32 1.1754944e-38, %v889
        %v891 = vsel %vm888, %v890, %v886
        %v892 = vmul.f32 1.0, %v891
        %v893 = vmul.f32 %v844, %v764
        %v894 = vmul.f32 %v811, %v859
        %v895 = vadd.f32 %v893, %v894
        %v896 = vtanh.pop %v895
        %v897 = vmul.f32 %v892, %v896
        %s898 = scalar_lea.vmem %s352, 96 [#allocation3]
        %v899 = vld [vmem:[%s898] sm:$0xff]
        %s900 = scalar_lea.vmem %s352, 104 [#allocation3]
        %v901 = vld [vmem:[%s900] sm:$0xff]
        %s902 = scalar_lea.vmem %s352, 112 [#allocation3]
        %v903 = vld [vmem:[%s902] sm:$0xff]
        %s904 = scalar_lea.vmem %s352, 120 [#allocation3]
        %v905 = vld [vmem:[%s904] sm:$0xff]
        %v906 = vpack.c.bf16 %v897, %v897
        %v908 = vsel %vm477, %v906, 0
        %910 = vmatpush.bf16.msra.mxu0 0
        %911 = vmatpush.bf16.msra.mxu0 0
        %912 = vmatpush.bf16.msra.mxu0 0
        %913 = vmatpush.bf16.msra.mxu0 0
        %914 = vmatpush.bf16.msra.mxu0 0
        %915 = vmatpush.bf16.msra.mxu0 0
        %916 = vmatpush.bf16.msra.mxu0 %v474
        %917 = vmatpush.bf16.msra.mxu0 %v473
        %918 = vmatmul.bf16.gmra.mxu0 %v908
        %v919 = vpop.f32.mrf.mxu0
        %v920 = vadd.f32 0.0, %v919
        %v921 = vpop.f32.mrf.mxu0
        %922 = vdwg.mxu0
        %v923 = vadd.f32 %v899, %v920
        %v924 = vxor.u32 %v923, 2147483648
        %v925 = vmul.f32 %v924, 1.442695
        %v926 = vpow.pop %v925
        %v927 = vadd.f32 %v926, 1.0
        %v928 = vrcp.pop %v927
        %v929 = vmul.f32 %v927, %v928
        %v930 = vsub.f32 1.0, %v929
        %v931 = vmul.f32 %v928, %v930
        %v932 = vadd.f32 %v928, %v931
        %vm933 = vweird.f32 %v927
        %vm934 = vweird.f32 %v928
        %vm935 = vmor %vm933, %vm934
        %v936 = vsel %vm935, %v928, %v932
        %v937 = vand.u32 2147483647, %v927
        %vm938 = vcmp.eq.f32.partialorder %v937, 8.507059e+37
        %v939 = vand.u32 %v927, 2147483648
        %v940 = vor.u32 1.1754944e-38, %v939
        %v941 = vsel %vm938, %v940, %v936
        %v942 = vmul.f32 1.0, %v941
        %943 = vmatpush.bf16.msra.mxu0 0
        %944 = vmatpush.bf16.msra.mxu0 0
        %945 = vmatpush.bf16.msra.mxu0 0
        %946 = vmatpush.bf16.msra.mxu0 0
        %947 = vmatpush.bf16.msra.mxu0 0
        %948 = vmatpush.bf16.msra.mxu0 0
        %949 = vmatpush.bf16.msra.mxu0 %v523
        %950 = vmatpush.bf16.msra.mxu0 %v522
        %951 = vmatmul.bf16.gmra.mxu0 %v908
        %v952 = vpop.f32.mrf.mxu0
        %v953 = vadd.f32 0.0, %v952
        %v954 = vpop.f32.mrf.mxu0
        %955 = vdwg.mxu0
        %v956 = vadd.f32 %v901, %v953
        %v957 = vxor.u32 %v956, 2147483648
        %v958 = vmul.f32 %v957, 1.442695
        %v959 = vpow.pop %v958
        %v960 = vadd.f32 %v959, 1.0
        %v961 = vrcp.pop %v960
        %v962 = vmul.f32 %v960, %v961
        %v963 = vsub.f32 1.0, %v962
        %v964 = vmul.f32 %v961, %v963
        %v965 = vadd.f32 %v961, %v964
        %vm966 = vweird.f32 %v960
        %vm967 = vweird.f32 %v961
        %vm968 = vmor %vm966, %vm967
        %v969 = vsel %vm968, %v961, %v965
        %v970 = vand.u32 2147483647, %v960
        %vm971 = vcmp.eq.f32.partialorder %v970, 8.507059e+37
        %v972 = vand.u32 %v960, 2147483648
        %v973 = vor.u32 1.1754944e-38, %v972
        %v974 = vsel %vm971, %v973, %v969
        %v975 = vmul.f32 1.0, %v974
        %976 = vmatpush.bf16.msra.mxu0 0
        %977 = vmatpush.bf16.msra.mxu0 0
        %978 = vmatpush.bf16.msra.mxu0 0
        %979 = vmatpush.bf16.msra.mxu0 0
        %980 = vmatpush.bf16.msra.mxu0 0
        %981 = vmatpush.bf16.msra.mxu0 0
        %982 = vmatpush.bf16.msra.mxu0 %v568
        %983 = vmatpush.bf16.msra.mxu0 %v567
        %984 = vmatmul.bf16.gmra.mxu0 %v908
        %v985 = vpop.f32.mrf.mxu0
        %v986 = vadd.f32 0.0, %v985
        %v987 = vpop.f32.mrf.mxu0
        %988 = vdwg.mxu0
        %v989 = vadd.f32 %v903, %v986
        %v990 = vtanh.pop %v989
        %991 = vmatpush.bf16.msra.mxu0 0
        %992 = vmatpush.bf16.msra.mxu0 0
        %993 = vmatpush.bf16.msra.mxu0 0
        %994 = vmatpush.bf16.msra.mxu0 0
        %995 = vmatpush.bf16.msra.mxu0 0
        %996 = vmatpush.bf16.msra.mxu0 0
        %997 = vmatpush.bf16.msra.mxu0 %v595
        %998 = vmatpush.bf16.msra.mxu0 %v594
        %999 = vmatmul.bf16.gmra.mxu0 %v908
        %v1000 = vpop.f32.mrf.mxu0
        %v1001 = vadd.f32 0.0, %v1000
        %v1002 = vpop.f32.mrf.mxu0
        %1003 = vdwg.mxu0
        %v1004 = vadd.f32 %v905, %v1001
        %v1005 = vxor.u32 %v1004, 2147483648
        %v1006 = vmul.f32 %v1005, 1.442695
        %v1007 = vpow.pop %v1006
        %v1008 = vadd.f32 %v1007, 1.0
        %v1009 = vrcp.pop %v1008
        %v1010 = vmul.f32 %v1008, %v1009
        %v1011 = vsub.f32 1.0, %v1010
        %v1012 = vmul.f32 %v1009, %v1011
        %v1013 = vadd.f32 %v1009, %v1012
        %vm1014 = vweird.f32 %v1008
        %vm1015 = vweird.f32 %v1009
        %vm1016 = vmor %vm1014, %vm1015
        %v1017 = vsel %vm1016, %v1009, %v1013
        %v1018 = vand.u32 2147483647, %v1008
        %vm1019 = vcmp.eq.f32.partialorder %v1018, 8.507059e+37
        %v1020 = vand.u32 %v1008, 2147483648
        %v1021 = vor.u32 1.1754944e-38, %v1020
        %v1022 = vsel %vm1019, %v1021, %v1017
        %v1023 = vmul.f32 1.0, %v1022
        %v1024 = vmul.f32 %v975, %v895
        %v1025 = vmul.f32 %v942, %v990
        %v1026 = vadd.f32 %v1024, %v1025
        %v1027 = vtanh.pop %v1026
        %v1028 = vmul.f32 %v1023, %v1027
        %s1029 = scalar_lea.vmem %s352, 128 [#allocation3]
        %v1030 = vld [vmem:[%s1029] sm:$0xff]
        %s1031 = scalar_lea.vmem %s352, 136 [#allocation3]
        %v1032 = vld [vmem:[%s1031] sm:$0xff]
        %s1033 = scalar_lea.vmem %s352, 144 [#allocation3]
        %v1034 = vld [vmem:[%s1033] sm:$0xff]
        %s1035 = scalar_lea.vmem %s352, 152 [#allocation3]
        %v1036 = vld [vmem:[%s1035] sm:$0xff]
        %v1037 = vpack.c.bf16 %v1028, %v1028
        %v1039 = vsel %vm477, %v1037, 0
        %1041 = vmatpush.bf16.msra.mxu0 0
        %1042 = vmatpush.bf16.msra.mxu0 0
        %1043 = vmatpush.bf16.msra.mxu0 0
        %1044 = vmatpush.bf16.msra.mxu0 0
        %1045 = vmatpush.bf16.msra.mxu0 0
        %1046 = vmatpush.bf16.msra.mxu0 0
        %1047 = vmatpush.bf16.msra.mxu0 %v474
        %1048 = vmatpush.bf16.msra.mxu0 %v473
        %1049 = vmatmul.bf16.gmra.mxu0 %v1039
        %v1050 = vpop.f32.mrf.mxu0
        %v1051 = vadd.f32 0.0, %v1050
        %v1052 = vpop.f32.mrf.mxu0
        %1053 = vdwg.mxu0
        %v1054 = vadd.f32 %v1030, %v1051
        %v1055 = vxor.u32 %v1054, 2147483648
        %v1056 = vmul.f32 %v1055, 1.442695
        %v1057 = vpow.pop %v1056
        %v1058 = vadd.f32 %v1057, 1.0
        %v1059 = vrcp.pop %v1058
        %v1060 = vmul.f32 %v1058, %v1059
        %v1061 = vsub.f32 1.0, %v1060
        %v1062 = vmul.f32 %v1059, %v1061
        %v1063 = vadd.f32 %v1059, %v1062
        %vm1064 = vweird.f32 %v1058
        %vm1065 = vweird.f32 %v1059
        %vm1066 = vmor %vm1064, %vm1065
        %v1067 = vsel %vm1066, %v1059, %v1063
        %v1068 = vand.u32 2147483647, %v1058
        %vm1069 = vcmp.eq.f32.partialorder %v1068, 8.507059e+37
        %v1070 = vand.u32 %v1058, 2147483648
        %v1071 = vor.u32 1.1754944e-38, %v1070
        %v1072 = vsel %vm1069, %v1071, %v1067
        %v1073 = vmul.f32 1.0, %v1072
        %1074 = vmatpush.bf16.msra.mxu0 0
        %1075 = vmatpush.bf16.msra.mxu0 0
        %1076 = vmatpush.bf16.msra.mxu0 0
        %1077 = vmatpush.bf16.msra.mxu0 0
        %1078 = vmatpush.bf16.msra.mxu0 0
        %1079 = vmatpush.bf16.msra.mxu0 0
        %1080 = vmatpush.bf16.msra.mxu0 %v523
        %1081 = vmatpush.bf16.msra.mxu0 %v522
        %1082 = vmatmul.bf16.gmra.mxu0 %v1039
        %v1083 = vpop.f32.mrf.mxu0
        %v1084 = vadd.f32 0.0, %v1083
        %v1085 = vpop.f32.mrf.mxu0
        %1086 = vdwg.mxu0
        %v1087 = vadd.f32 %v1032, %v1084
        %v1088 = vxor.u32 %v1087, 2147483648
        %v1089 = vmul.f32 %v1088, 1.442695
        %v1090 = vpow.pop %v1089
        %v1091 = vadd.f32 %v1090, 1.0
        %v1092 = vrcp.pop %v1091
        %v1093 = vmul.f32 %v1091, %v1092
        %v1094 = vsub.f32 1.0, %v1093
        %v1095 = vmul.f32 %v1092, %v1094
        %v1096 = vadd.f32 %v1092, %v1095
        %vm1097 = vweird.f32 %v1091
        %vm1098 = vweird.f32 %v1092
        %vm1099 = vmor %vm1097, %vm1098
        %v1100 = vsel %vm1099, %v1092, %v1096
        %v1101 = vand.u32 2147483647, %v1091
        %vm1102 = vcmp.eq.f32.partialorder %v1101, 8.507059e+37
        %v1103 = vand.u32 %v1091, 2147483648
        %v1104 = vor.u32 1.1754944e-38, %v1103
        %v1105 = vsel %vm1102, %v1104, %v1100
        %v1106 = vmul.f32 1.0, %v1105
        %1107 = vmatpush.bf16.msra.mxu0 0
        %1108 = vmatpush.bf16.msra.mxu0 0
        %1109 = vmatpush.bf16.msra.mxu0 0
        %1110 = vmatpush.bf16.msra.mxu0 0
        %1111 = vmatpush.bf16.msra.mxu0 0
        %1112 = vmatpush.bf16.msra.mxu0 0
        %1113 = vmatpush.bf16.msra.mxu0 %v568
        %1114 = vmatpush.bf16.msra.mxu0 %v567
        %1115 = vmatmul.bf16.gmra.mxu0 %v1039
        %v1116 = vpop.f32.mrf.mxu0
        %v1117 = vadd.f32 0.0, %v1116
        %v1118 = vpop.f32.mrf.mxu0
        %1119 = vdwg.mxu0
        %v1120 = vadd.f32 %v1034, %v1117
        %v1121 = vtanh.pop %v1120
        %1122 = vmatpush.bf16.msra.mxu0 0
        %1123 = vmatpush.bf16.msra.mxu0 0
        %1124 = vmatpush.bf16.msra.mxu0 0
        %1125 = vmatpush.bf16.msra.mxu0 0
        %1126 = vmatpush.bf16.msra.mxu0 0
        %1127 = vmatpush.bf16.msra.mxu0 0
        %1128 = vmatpush.bf16.msra.mxu0 %v595
        %1129 = vmatpush.bf16.msra.mxu0 %v594
        %1130 = vmatmul.bf16.gmra.mxu0 %v1039
        %v1131 = vpop.f32.mrf.mxu0
        %v1132 = vadd.f32 0.0, %v1131
        %v1133 = vpop.f32.mrf.mxu0
        %1134 = vdwg.mxu0
        %v1135 = vadd.f32 %v1036, %v1132
        %v1136 = vxor.u32 %v1135, 2147483648
        %v1137 = vmul.f32 %v1136, 1.442695
        %v1138 = vpow.pop %v1137
        %v1139 = vadd.f32 %v1138, 1.0
        %v1140 = vrcp.pop %v1139
        %v1141 = vmul.f32 %v1139, %v1140
        %v1142 = vsub.f32 1.0, %v1141
        %v1143 = vmul.f32 %v1140, %v1142
        %v1144 = vadd.f32 %v1140, %v1143
        %vm1145 = vweird.f32 %v1139
        %vm1146 = vweird.f32 %v1140
        %vm1147 = vmor %vm1145, %vm1146
        %v1148 = vsel %vm1147, %v1140, %v1144
        %v1149 = vand.u32 2147483647, %v1139
        %vm1150 = vcmp.eq.f32.partialorder %v1149, 8.507059e+37
        %v1151 = vand.u32 %v1139, 2147483648
        %v1152 = vor.u32 1.1754944e-38, %v1151
        %v1153 = vsel %vm1150, %v1152, %v1148
        %v1154 = vmul.f32 1.0, %v1153
        %v1155 = vmul.f32 %v1106, %v1026
        %v1156 = vmul.f32 %v1073, %v1121
        %v1157 = vadd.f32 %v1155, %v1156
        %v1158 = vtanh.pop %v1157
        %v1159 = vmul.f32 %v1154, %v1158
        %s1160 = scalar_lea.vmem %s352, 160 [#allocation3]
        %v1161 = vld [vmem:[%s1160] sm:$0xff]
        %s1162 = scalar_lea.vmem %s352, 168 [#allocation3]
        %v1163 = vld [vmem:[%s1162] sm:$0xff]
        %s1164 = scalar_lea.vmem %s352, 176 [#allocation3]
        %v1165 = vld [vmem:[%s1164] sm:$0xff]
        %s1166 = scalar_lea.vmem %s352, 184 [#allocation3]
        %v1167 = vld [vmem:[%s1166] sm:$0xff]
        %v1168 = vpack.c.bf16 %v1159, %v1159
        %v1170 = vsel %vm477, %v1168, 0
        %1172 = vmatpush.bf16.msra.mxu0 0
        %1173 = vmatpush.bf16.msra.mxu0 0
        %1174 = vmatpush.bf16.msra.mxu0 0
        %1175 = vmatpush.bf16.msra.mxu0 0
        %1176 = vmatpush.bf16.msra.mxu0 0
        %1177 = vmatpush.bf16.msra.mxu0 0
        %1178 = vmatpush.bf16.msra.mxu0 %v474
        %1179 = vmatpush.bf16.msra.mxu0 %v473
        %1180 = vmatmul.bf16.gmra.mxu0 %v1170
        %v1181 = vpop.f32.mrf.mxu0
        %v1182 = vadd.f32 0.0, %v1181
        %v1183 = vpop.f32.mrf.mxu0
        %1184 = vdwg.mxu0
        %v1185 = vadd.f32 %v1161, %v1182
        %v1186 = vxor.u32 %v1185, 2147483648
        %v1187 = vmul.f32 %v1186, 1.442695
        %v1188 = vpow.pop %v1187
        %v1189 = vadd.f32 %v1188, 1.0
        %v1190 = vrcp.pop %v1189
        %v1191 = vmul.f32 %v1189, %v1190
        %v1192 = vsub.f32 1.0, %v1191
        %v1193 = vmul.f32 %v1190, %v1192
        %v1194 = vadd.f32 %v1190, %v1193
        %vm1195 = vweird.f32 %v1189
        %vm1196 = vweird.f32 %v1190
        %vm1197 = vmor %vm1195, %vm1196
        %v1198 = vsel %vm1197, %v1190, %v1194
        %v1199 = vand.u32 2147483647, %v1189
        %vm1200 = vcmp.eq.f32.partialorder %v1199, 8.507059e+37
        %v1201 = vand.u32 %v1189, 2147483648
        %v1202 = vor.u32 1.1754944e-38, %v1201
        %v1203 = vsel %vm1200, %v1202, %v1198
        %v1204 = vmul.f32 1.0, %v1203
        %1205 = vmatpush.bf16.msra.mxu0 0
        %1206 = vmatpush.bf16.msra.mxu0 0
        %1207 = vmatpush.bf16.msra.mxu0 0
        %1208 = vmatpush.bf16.msra.mxu0 0
        %1209 = vmatpush.bf16.msra.mxu0 0
        %1210 = vmatpush.bf16.msra.mxu0 0
        %1211 = vmatpush.bf16.msra.mxu0 %v523
        %1212 = vmatpush.bf16.msra.mxu0 %v522
        %1213 = vmatmul.bf16.gmra.mxu0 %v1170
        %v1214 = vpop.f32.mrf.mxu0
        %v1215 = vadd.f32 0.0, %v1214
        %v1216 = vpop.f32.mrf.mxu0
        %1217 = vdwg.mxu0
        %v1218 = vadd.f32 %v1163, %v1215
        %v1219 = vxor.u32 %v1218, 2147483648
        %v1220 = vmul.f32 %v1219, 1.442695
        %v1221 = vpow.pop %v1220
        %v1222 = vadd.f32 %v1221, 1.0
        %v1223 = vrcp.pop %v1222
        %v1224 = vmul.f32 %v1222, %v1223
        %v1225 = vsub.f32 1.0, %v1224
        %v1226 = vmul.f32 %v1223, %v1225
        %v1227 = vadd.f32 %v1223, %v1226
        %vm1228 = vweird.f32 %v1222
        %vm1229 = vweird.f32 %v1223
        %vm1230 = vmor %vm1228, %vm1229
        %v1231 = vsel %vm1230, %v1223, %v1227
        %v1232 = vand.u32 2147483647, %v1222
        %vm1233 = vcmp.eq.f32.partialorder %v1232, 8.507059e+37
        %v1234 = vand.u32 %v1222, 2147483648
        %v1235 = vor.u32 1.1754944e-38, %v1234
        %v1236 = vsel %vm1233, %v1235, %v1231
        %v1237 = vmul.f32 1.0, %v1236
        %1238 = vmatpush.bf16.msra.mxu0 0
        %1239 = vmatpush.bf16.msra.mxu0 0
        %1240 = vmatpush.bf16.msra.mxu0 0
        %1241 = vmatpush.bf16.msra.mxu0 0
        %1242 = vmatpush.bf16.msra.mxu0 0
        %1243 = vmatpush.bf16.msra.mxu0 0
        %1244 = vmatpush.bf16.msra.mxu0 %v568
        %1245 = vmatpush.bf16.msra.mxu0 %v567
        %1246 = vmatmul.bf16.gmra.mxu0 %v1170
        %v1247 = vpop.f32.mrf.mxu0
        %v1248 = vadd.f32 0.0, %v1247
        %v1249 = vpop.f32.mrf.mxu0
        %1250 = vdwg.mxu0
        %v1251 = vadd.f32 %v1165, %v1248
        %v1252 = vtanh.pop %v1251
        %1253 = vmatpush.bf16.msra.mxu0 0
        %1254 = vmatpush.bf16.msra.mxu0 0
        %1255 = vmatpush.bf16.msra.mxu0 0
        %1256 = vmatpush.bf16.msra.mxu0 0
        %1257 = vmatpush.bf16.msra.mxu0 0
        %1258 = vmatpush.bf16.msra.mxu0 0
        %1259 = vmatpush.bf16.msra.mxu0 %v595
        %1260 = vmatpush.bf16.msra.mxu0 %v594
        %1261 = vmatmul.bf16.gmra.mxu0 %v1170
        %v1262 = vpop.f32.mrf.mxu0
        %v1263 = vadd.f32 0.0, %v1262
        %v1264 = vpop.f32.mrf.mxu0
        %1265 = vdwg.mxu0
        %v1266 = vadd.f32 %v1167, %v1263
        %v1267 = vxor.u32 %v1266, 2147483648
        %v1268 = vmul.f32 %v1267, 1.442695
        %v1269 = vpow.pop %v1268
        %v1270 = vadd.f32 %v1269, 1.0
        %v1271 = vrcp.pop %v1270
        %v1272 = vmul.f32 %v1270, %v1271
        %v1273 = vsub.f32 1.0, %v1272
        %v1274 = vmul.f32 %v1271, %v1273
        %v1275 = vadd.f32 %v1271, %v1274
        %vm1276 = vweird.f32 %v1270
        %vm1277 = vweird.f32 %v1271
        %vm1278 = vmor %vm1276, %vm1277
        %v1279 = vsel %vm1278, %v1271, %v1275
        %v1280 = vand.u32 2147483647, %v1270
        %vm1281 = vcmp.eq.f32.partialorder %v1280, 8.507059e+37
        %v1282 = vand.u32 %v1270, 2147483648
        %v1283 = vor.u32 1.1754944e-38, %v1282
        %v1284 = vsel %vm1281, %v1283, %v1279
        %v1285 = vmul.f32 1.0, %v1284
        %v1286 = vmul.f32 %v1237, %v1157
        %v1287 = vmul.f32 %v1204, %v1252
        %v1288 = vadd.f32 %v1286, %v1287
        %v1289 = vtanh.pop %v1288
        %v1290 = vmul.f32 %v1285, %v1289
        %s1291 = scalar_lea.vmem %s352, 192 [#allocation3]
        %v1292 = vld [vmem:[%s1291] sm:$0xff]
        %s1293 = scalar_lea.vmem %s352, 200 [#allocation3]
        %v1294 = vld [vmem:[%s1293] sm:$0xff]
        %s1295 = scalar_lea.vmem %s352, 208 [#allocation3]
        %v1296 = vld [vmem:[%s1295] sm:$0xff]
        %s1297 = scalar_lea.vmem %s352, 216 [#allocation3]
        %v1298 = vld [vmem:[%s1297] sm:$0xff]
        %v1299 = vpack.c.bf16 %v1290, %v1290
        %v1301 = vsel %vm477, %v1299, 0
        %1303 = vmatpush.bf16.msra.mxu0 0
        %1304 = vmatpush.bf16.msra.mxu0 0
        %1305 = vmatpush.bf16.msra.mxu0 0
        %1306 = vmatpush.bf16.msra.mxu0 0
        %1307 = vmatpush.bf16.msra.mxu0 0
        %1308 = vmatpush.bf16.msra.mxu0 0
        %1309 = vmatpush.bf16.msra.mxu0 %v474
        %1310 = vmatpush.bf16.msra.mxu0 %v473
        %1311 = vmatmul.bf16.gmra.mxu0 %v1301
        %v1312 = vpop.f32.mrf.mxu0
        %v1313 = vadd.f32 0.0, %v1312
        %v1314 = vpop.f32.mrf.mxu0
        %1315 = vdwg.mxu0
        %v1316 = vadd.f32 %v1292, %v1313
        %v1317 = vxor.u32 %v1316, 2147483648
        %v1318 = vmul.f32 %v1317, 1.442695
        %v1319 = vpow.pop %v1318
        %v1320 = vadd.f32 %v1319, 1.0
        %v1321 = vrcp.pop %v1320
        %v1322 = vmul.f32 %v1320, %v1321
        %v1323 = vsub.f32 1.0, %v1322
        %v1324 = vmul.f32 %v1321, %v1323
        %v1325 = vadd.f32 %v1321, %v1324
        %vm1326 = vweird.f32 %v1320
        %vm1327 = vweird.f32 %v1321
        %vm1328 = vmor %vm1326, %vm1327
        %v1329 = vsel %vm1328, %v1321, %v1325
        %v1330 = vand.u32 2147483647, %v1320
        %vm1331 = vcmp.eq.f32.partialorder %v1330, 8.507059e+37
        %v1332 = vand.u32 %v1320, 2147483648
        %v1333 = vor.u32 1.1754944e-38, %v1332
        %v1334 = vsel %vm1331, %v1333, %v1329
        %v1335 = vmul.f32 1.0, %v1334
        %1336 = vmatpush.bf16.msra.mxu0 0
        %1337 = vmatpush.bf16.msra.mxu0 0
        %1338 = vmatpush.bf16.msra.mxu0 0
        %1339 = vmatpush.bf16.msra.mxu0 0
        %1340 = vmatpush.bf16.msra.mxu0 0
        %1341 = vmatpush.bf16.msra.mxu0 0
        %1342 = vmatpush.bf16.msra.mxu0 %v523
        %1343 = vmatpush.bf16.msra.mxu0 %v522
        %1344 = vmatmul.bf16.gmra.mxu0 %v1301
        %v1345 = vpop.f32.mrf.mxu0
        %v1346 = vadd.f32 0.0, %v1345
        %v1347 = vpop.f32.mrf.mxu0
        %1348 = vdwg.mxu0
        %v1349 = vadd.f32 %v1294, %v1346
        %v1350 = vxor.u32 %v1349, 2147483648
        %v1351 = vmul.f32 %v1350, 1.442695
        %v1352 = vpow.pop %v1351
        %v1353 = vadd.f32 %v1352, 1.0
        %v1354 = vrcp.pop %v1353
        %v1355 = vmul.f32 %v1353, %v1354
        %v1356 = vsub.f32 1.0, %v1355
        %v1357 = vmul.f32 %v1354, %v1356
        %v1358 = vadd.f32 %v1354, %v1357
        %vm1359 = vweird.f32 %v1353
        %vm1360 = vweird.f32 %v1354
        %vm1361 = vmor %vm1359, %vm1360
        %v1362 = vsel %vm1361, %v1354, %v1358
        %v1363 = vand.u32 2147483647, %v1353
        %vm1364 = vcmp.eq.f32.partialorder %v1363, 8.507059e+37
        %v1365 = vand.u32 %v1353, 2147483648
        %v1366 = vor.u32 1.1754944e-38, %v1365
        %v1367 = vsel %vm1364, %v1366, %v1362
        %v1368 = vmul.f32 1.0, %v1367
        %1369 = vmatpush.bf16.msra.mxu0 0
        %1370 = vmatpush.bf16.msra.mxu0 0
        %1371 = vmatpush.bf16.msra.mxu0 0
        %1372 = vmatpush.bf16.msra.mxu0 0
        %1373 = vmatpush.bf16.msra.mxu0 0
        %1374 = vmatpush.bf16.msra.mxu0 0
        %1375 = vmatpush.bf16.msra.mxu0 %v568
        %1376 = vmatpush.bf16.msra.mxu0 %v567
        %1377 = vmatmul.bf16.gmra.mxu0 %v1301
        %v1378 = vpop.f32.mrf.mxu0
        %v1379 = vadd.f32 0.0, %v1378
        %v1380 = vpop.f32.mrf.mxu0
        %1381 = vdwg.mxu0
        %v1382 = vadd.f32 %v1296, %v1379
        %v1383 = vtanh.pop %v1382
        %1384 = vmatpush.bf16.msra.mxu0 0
        %1385 = vmatpush.bf16.msra.mxu0 0
        %1386 = vmatpush.bf16.msra.mxu0 0
        %1387 = vmatpush.bf16.msra.mxu0 0
        %1388 = vmatpush.bf16.msra.mxu0 0
        %1389 = vmatpush.bf16.msra.mxu0 0
        %1390 = vmatpush.bf16.msra.mxu0 %v595
        %1391 = vmatpush.bf16.msra.mxu0 %v594
        %1392 = vmatmul.bf16.gmra.mxu0 %v1301
        %v1393 = vpop.f32.mrf.mxu0
        %v1394 = vadd.f32 0.0, %v1393
        %v1395 = vpop.f32.mrf.mxu0
        %1396 = vdwg.mxu0
        %v1397 = vadd.f32 %v1298, %v1394
        %v1398 = vxor.u32 %v1397, 2147483648
        %v1399 = vmul.f32 %v1398, 1.442695
        %v1400 = vpow.pop %v1399
        %v1401 = vadd.f32 %v1400, 1.0
        %v1402 = vrcp.pop %v1401
        %v1403 = vmul.f32 %v1401, %v1402
        %v1404 = vsub.f32 1.0, %v1403
        %v1405 = vmul.f32 %v1402, %v1404
        %v1406 = vadd.f32 %v1402, %v1405
        %vm1407 = vweird.f32 %v1401
        %vm1408 = vweird.f32 %v1402
        %vm1409 = vmor %vm1407, %vm1408
        %v1410 = vsel %vm1409, %v1402, %v1406
        %v1411 = vand.u32 2147483647, %v1401
        %vm1412 = vcmp.eq.f32.partialorder %v1411, 8.507059e+37
        %v1413 = vand.u32 %v1401, 2147483648
        %v1414 = vor.u32 1.1754944e-38, %v1413
        %v1415 = vsel %vm1412, %v1414, %v1410
        %v1416 = vmul.f32 1.0, %v1415
        %v1417 = vmul.f32 %v1368, %v1288
        %v1418 = vmul.f32 %v1335, %v1383
        %v1419 = vadd.f32 %v1417, %v1418
        %v1420 = vtanh.pop %v1419
        %v1421 = vmul.f32 %v1416, %v1420
        %s1422 = scalar_lea.vmem %s352, 224 [#allocation3]
        %v1423 = vld [vmem:[%s1422] sm:$0xff]
        %s1424 = scalar_lea.vmem %s352, 232 [#allocation3]
        %v1425 = vld [vmem:[%s1424] sm:$0xff]
        %s1426 = scalar_lea.vmem %s352, 240 [#allocation3]
        %v1427 = vld [vmem:[%s1426] sm:$0xff]
        %s1428 = scalar_lea.vmem %s352, 248 [#allocation3]
        %v1429 = vld [vmem:[%s1428] sm:$0xff]
        %v1430 = vpack.c.bf16 %v1421, %v1421
        %v1432 = vsel %vm477, %v1430, 0
        %1434 = vmatpush.bf16.msra.mxu0 0
        %1435 = vmatpush.bf16.msra.mxu0 0
        %1436 = vmatpush.bf16.msra.mxu0 0
        %1437 = vmatpush.bf16.msra.mxu0 0
        %1438 = vmatpush.bf16.msra.mxu0 0
        %1439 = vmatpush.bf16.msra.mxu0 0
        %1440 = vmatpush.bf16.msra.mxu0 %v474
        %1441 = vmatpush.bf16.msra.mxu0 %v473
        %1442 = vmatmul.bf16.gmra.mxu0 %v1432
        %v1443 = vpop.f32.mrf.mxu0
        %v1444 = vadd.f32 0.0, %v1443
        %v1445 = vpop.f32.mrf.mxu0
        %1446 = vdwg.mxu0
        %v1447 = vadd.f32 %v1423, %v1444
        %v1448 = vxor.u32 %v1447, 2147483648
        %v1449 = vmul.f32 %v1448, 1.442695
        %v1450 = vpow.pop %v1449
        %v1451 = vadd.f32 %v1450, 1.0
        %v1452 = vrcp.pop %v1451
        %v1453 = vmul.f32 %v1451, %v1452
        %v1454 = vsub.f32 1.0, %v1453
        %v1455 = vmul.f32 %v1452, %v1454
        %v1456 = vadd.f32 %v1452, %v1455
        %vm1457 = vweird.f32 %v1451
        %vm1458 = vweird.f32 %v1452
        %vm1459 = vmor %vm1457, %vm1458
        %v1460 = vsel %vm1459, %v1452, %v1456
        %v1461 = vand.u32 2147483647, %v1451
        %vm1462 = vcmp.eq.f32.partialorder %v1461, 8.507059e+37
        %v1463 = vand.u32 %v1451, 2147483648
        %v1464 = vor.u32 1.1754944e-38, %v1463
        %v1465 = vsel %vm1462, %v1464, %v1460
        %v1466 = vmul.f32 1.0, %v1465
        %1467 = vmatpush.bf16.msra.mxu0 0
        %1468 = vmatpush.bf16.msra.mxu0 0
        %1469 = vmatpush.bf16.msra.mxu0 0
        %1470 = vmatpush.bf16.msra.mxu0 0
        %1471 = vmatpush.bf16.msra.mxu0 0
        %1472 = vmatpush.bf16.msra.mxu0 0
        %1473 = vmatpush.bf16.msra.mxu0 %v523
        %1474 = vmatpush.bf16.msra.mxu0 %v522
        %1475 = vmatmul.bf16.gmra.mxu0 %v1432
        %v1476 = vpop.f32.mrf.mxu0
        %v1477 = vadd.f32 0.0, %v1476
        %v1478 = vpop.f32.mrf.mxu0
        %1479 = vdwg.mxu0
        %v1480 = vadd.f32 %v1425, %v1477
        %v1481 = vxor.u32 %v1480, 2147483648
        %v1482 = vmul.f32 %v1481, 1.442695
        %v1483 = vpow.pop %v1482
        %v1484 = vadd.f32 %v1483, 1.0
        %v1485 = vrcp.pop %v1484
        %v1486 = vmul.f32 %v1484, %v1485
        %v1487 = vsub.f32 1.0, %v1486
        %v1488 = vmul.f32 %v1485, %v1487
        %v1489 = vadd.f32 %v1485, %v1488
        %vm1490 = vweird.f32 %v1484
        %vm1491 = vweird.f32 %v1485
        %vm1492 = vmor %vm1490, %vm1491
        %v1493 = vsel %vm1492, %v1485, %v1489
        %v1494 = vand.u32 2147483647, %v1484
        %vm1495 = vcmp.eq.f32.partialorder %v1494, 8.507059e+37
        %v1496 = vand.u32 %v1484, 2147483648
        %v1497 = vor.u32 1.1754944e-38, %v1496
        %v1498 = vsel %vm1495, %v1497, %v1493
        %v1499 = vmul.f32 1.0, %v1498
        %1500 = vmatpush.bf16.msra.mxu0 0
        %1501 = vmatpush.bf16.msra.mxu0 0
        %1502 = vmatpush.bf16.msra.mxu0 0
        %1503 = vmatpush.bf16.msra.mxu0 0
        %1504 = vmatpush.bf16.msra.mxu0 0
        %1505 = vmatpush.bf16.msra.mxu0 0
        %1506 = vmatpush.bf16.msra.mxu0 %v568
        %1507 = vmatpush.bf16.msra.mxu0 %v567
        %1508 = vmatmul.bf16.gmra.mxu0 %v1432
        %v1509 = vpop.f32.mrf.mxu0
        %v1510 = vadd.f32 0.0, %v1509
        %v1511 = vpop.f32.mrf.mxu0
        %1512 = vdwg.mxu0
        %v1513 = vadd.f32 %v1427, %v1510
        %v1514 = vtanh.pop %v1513
        %1515 = vmatpush.bf16.msra.mxu0 0
        %1516 = vmatpush.bf16.msra.mxu0 0
        %1517 = vmatpush.bf16.msra.mxu0 0
        %1518 = vmatpush.bf16.msra.mxu0 0
        %1519 = vmatpush.bf16.msra.mxu0 0
        %1520 = vmatpush.bf16.msra.mxu0 0
        %1521 = vmatpush.bf16.msra.mxu0 %v595
        %1522 = vmatpush.bf16.msra.mxu0 %v594
        %1523 = vmatmul.bf16.gmra.mxu0 %v1432
        %v1524 = vpop.f32.mrf.mxu0
        %v1525 = vadd.f32 0.0, %v1524
        %v1526 = vpop.f32.mrf.mxu0
        %1527 = vdwg.mxu0
        %v1528 = vadd.f32 %v1429, %v1525
        %v1529 = vxor.u32 %v1528, 2147483648
        %v1530 = vmul.f32 %v1529, 1.442695
        %v1531 = vpow.pop %v1530
        %v1532 = vadd.f32 %v1531, 1.0
        %v1533 = vrcp.pop %v1532
        %v1534 = vmul.f32 %v1532, %v1533
        %v1535 = vsub.f32 1.0, %v1534
        %v1536 = vmul.f32 %v1533, %v1535
        %v1537 = vadd.f32 %v1533, %v1536
        %vm1538 = vweird.f32 %v1532
        %vm1539 = vweird.f32 %v1533
        %vm1540 = vmor %vm1538, %vm1539
        %v1541 = vsel %vm1540, %v1533, %v1537
        %v1542 = vand.u32 2147483647, %v1532
        %vm1543 = vcmp.eq.f32.partialorder %v1542, 8.507059e+37
        %v1544 = vand.u32 %v1532, 2147483648
        %v1545 = vor.u32 1.1754944e-38, %v1544
        %v1546 = vsel %vm1543, %v1545, %v1541
        %v1547 = vmul.f32 1.0, %v1546
        %v1548 = vmul.f32 %v1499, %v1419
        %v1549 = vmul.f32 %v1466, %v1514
        %v1550 = vadd.f32 %v1548, %v1549
        %v1551 = vtanh.pop %v1550
        %v1552 = vmul.f32 %v1547, %v1551
        %v1553 = vld [vmem:[%s362] sm:$0xff]
        %s1554 = scalar_lea.vmem %s362, 8 [#allocation5]
        %v1555 = vld [vmem:[%s1554] sm:$0xff]
        %s1556 = scalar_lea.vmem %s362, 16 [#allocation5]
        %v1557 = vld [vmem:[%s1556] sm:$0xff]
        %s1558 = scalar_lea.vmem %s362, 24 [#allocation5]
        %v1559 = vld [vmem:[%s1558] sm:$0xff]
        %v1560 = vpack.c.bf16 %v1552, %v1552
        %v1565 = vunpack.c.l.b16 %v439
        %v1566 = vunpack.c.l.b16 %v440
        %v1567 = vunpack.c.l.b16 %v441
        %v1568 = vunpack.c.l.b16 %v442
        %v1569 = vpack.c.b16 %v1566, %v1565
        %v1570 = vpack.c.b16 %v1568, %v1567
        %v1574 = vsel %vm477, %v1560, 0
        %1576 = vmatpush.bf16.msra.mxu0 0
        %1577 = vmatpush.bf16.msra.mxu0 0
        %1578 = vmatpush.bf16.msra.mxu0 0
        %1579 = vmatpush.bf16.msra.mxu0 0
        %1580 = vmatpush.bf16.msra.mxu0 0
        %1581 = vmatpush.bf16.msra.mxu0 0
        %1582 = vmatpush.bf16.msra.mxu0 %v1570
        %1583 = vmatpush.bf16.msra.mxu0 %v1569
        %1584 = vmatmul.bf16.gmra.mxu0 %v1574
        %v1585 = vpop.f32.mrf.mxu0
        %v1586 = vadd.f32 0.0, %v1585
        %v1587 = vpop.f32.mrf.mxu0
        %1588 = vdwg.mxu0
        %v1589 = vadd.f32 %v1553, %v1586
        %v1590 = vxor.u32 %v1589, 2147483648
        %v1591 = vmul.f32 %v1590, 1.442695
        %v1592 = vpow.pop %v1591
        %v1593 = vadd.f32 %v1592, 1.0
        %v1594 = vrcp.pop %v1593
        %v1595 = vmul.f32 %v1593, %v1594
        %v1596 = vsub.f32 1.0, %v1595
        %v1597 = vmul.f32 %v1594, %v1596
        %v1598 = vadd.f32 %v1594, %v1597
        %vm1599 = vweird.f32 %v1593
        %vm1600 = vweird.f32 %v1594
        %vm1601 = vmor %vm1599, %vm1600
        %v1602 = vsel %vm1601, %v1594, %v1598
        %v1603 = vand.u32 2147483647, %v1593
        %vm1604 = vcmp.eq.f32.partialorder %v1603, 8.507059e+37
        %v1605 = vand.u32 %v1593, 2147483648
        %v1606 = vor.u32 1.1754944e-38, %v1605
        %v1607 = vsel %vm1604, %v1606, %v1602
        %v1608 = vmul.f32 1.0, %v1607
        %v1613 = vunpack.c.l.b16 %v444
        %v1614 = vunpack.c.l.b16 %v445
        %v1615 = vunpack.c.l.b16 %v446
        %v1616 = vunpack.c.l.b16 %v447
        %v1617 = vpack.c.b16 %v1614, %v1613
        %v1618 = vpack.c.b16 %v1616, %v1615
        %1621 = vmatpush.bf16.msra.mxu0 0
        %1622 = vmatpush.bf16.msra.mxu0 0
        %1623 = vmatpush.bf16.msra.mxu0 0
        %1624 = vmatpush.bf16.msra.mxu0 0
        %1625 = vmatpush.bf16.msra.mxu0 0
        %1626 = vmatpush.bf16.msra.mxu0 0
        %1627 = vmatpush.bf16.msra.mxu0 %v1618
        %1628 = vmatpush.bf16.msra.mxu0 %v1617
        %1629 = vmatmul.bf16.gmra.mxu0 %v1574
        %v1630 = vpop.f32.mrf.mxu0
        %v1631 = vadd.f32 0.0, %v1630
        %v1632 = vpop.f32.mrf.mxu0
        %1633 = vdwg.mxu0
        %v1634 = vadd.f32 %v1555, %v1631
        %v1635 = vxor.u32 %v1634, 2147483648
        %v1636 = vmul.f32 %v1635, 1.442695
        %v1637 = vpow.pop %v1636
        %v1638 = vadd.f32 %v1637, 1.0
        %v1639 = vrcp.pop %v1638
        %v1640 = vmul.f32 %v1638, %v1639
        %v1641 = vsub.f32 1.0, %v1640
        %v1642 = vmul.f32 %v1639, %v1641
        %v1643 = vadd.f32 %v1639, %v1642
        %vm1644 = vweird.f32 %v1638
        %vm1645 = vweird.f32 %v1639
        %vm1646 = vmor %vm1644, %vm1645
        %v1647 = vsel %vm1646, %v1639, %v1643
        %v1648 = vand.u32 2147483647, %v1638
        %vm1649 = vcmp.eq.f32.partialorder %v1648, 8.507059e+37
        %v1650 = vand.u32 %v1638, 2147483648
        %v1651 = vor.u32 1.1754944e-38, %v1650
        %v1652 = vsel %vm1649, %v1651, %v1647
        %v1653 = vmul.f32 1.0, %v1652
        %v1658 = vunpack.c.l.b16 %v449
        %v1659 = vunpack.c.l.b16 %v450
        %v1660 = vunpack.c.l.b16 %v451
        %v1661 = vunpack.c.l.b16 %v452
        %v1662 = vpack.c.b16 %v1659, %v1658
        %v1663 = vpack.c.b16 %v1661, %v1660
        %1666 = vmatpush.bf16.msra.mxu0 0
        %1667 = vmatpush.bf16.msra.mxu0 0
        %1668 = vmatpush.bf16.msra.mxu0 0
        %1669 = vmatpush.bf16.msra.mxu0 0
        %1670 = vmatpush.bf16.msra.mxu0 0
        %1671 = vmatpush.bf16.msra.mxu0 0
        %1672 = vmatpush.bf16.msra.mxu0 %v1663
        %1673 = vmatpush.bf16.msra.mxu0 %v1662
        %1674 = vmatmul.bf16.gmra.mxu0 %v1574
        %v1675 = vpop.f32.mrf.mxu0
        %v1676 = vadd.f32 0.0, %v1675
        %v1677 = vpop.f32.mrf.mxu0
        %1678 = vdwg.mxu0
        %v1679 = vadd.f32 %v1557, %v1676
        %v1680 = vtanh.pop %v1679
        %v1685 = vunpack.c.l.b16 %v454
        %v1686 = vunpack.c.l.b16 %v455
        %v1687 = vunpack.c.l.b16 %v456
        %v1688 = vunpack.c.l.b16 %v457
        %v1689 = vpack.c.b16 %v1686, %v1685
        %v1690 = vpack.c.b16 %v1688, %v1687
        %1693 = vmatpush.bf16.msra.mxu0 0
        %1694 = vmatpush.bf16.msra.mxu0 0
        %1695 = vmatpush.bf16.msra.mxu0 0
        %1696 = vmatpush.bf16.msra.mxu0 0
        %1697 = vmatpush.bf16.msra.mxu0 0
        %1698 = vmatpush.bf16.msra.mxu0 0
        %1699 = vmatpush.bf16.msra.mxu0 %v1690
        %1700 = vmatpush.bf16.msra.mxu0 %v1689
        %1701 = vmatmul.bf16.gmra.mxu0 %v1574
        %v1702 = vpop.f32.mrf.mxu0
        %v1703 = vadd.f32 0.0, %v1702
        %v1704 = vpop.f32.mrf.mxu0
        %1705 = vdwg.mxu0
        %v1706 = vadd.f32 %v1559, %v1703
        %v1707 = vxor.u32 %v1706, 2147483648
        %v1708 = vmul.f32 %v1707, 1.442695
        %v1709 = vpow.pop %v1708
        %v1710 = vadd.f32 %v1709, 1.0
        %v1711 = vrcp.pop %v1710
        %v1712 = vmul.f32 %v1710, %v1711
        %v1713 = vsub.f32 1.0, %v1712
        %v1714 = vmul.f32 %v1711, %v1713
        %v1715 = vadd.f32 %v1711, %v1714
        %vm1716 = vweird.f32 %v1710
        %vm1717 = vweird.f32 %v1711
        %vm1718 = vmor %vm1716, %vm1717
        %v1719 = vsel %vm1718, %v1711, %v1715
        %v1720 = vand.u32 2147483647, %v1710
        %vm1721 = vcmp.eq.f32.partialorder %v1720, 8.507059e+37
        %v1722 = vand.u32 %v1710, 2147483648
        %v1723 = vor.u32 1.1754944e-38, %v1722
        %v1724 = vsel %vm1721, %v1723, %v1719
        %v1725 = vmul.f32 1.0, %v1724
        %v1726 = vmul.f32 %v1653, %v1550
        %v1727 = vmul.f32 %v1608, %v1680
        %v1728 = vadd.f32 %v1726, %v1727
        %v1729 = vtanh.pop %v1728
        %v1730 = vmul.f32 %v1725, %v1729
        %s1731 = scalar_lea.vmem %s362, 32 [#allocation5]
        %v1732 = vld [vmem:[%s1731] sm:$0xff]
        %s1733 = scalar_lea.vmem %s362, 40 [#allocation5]
        %v1734 = vld [vmem:[%s1733] sm:$0xff]
        %s1735 = scalar_lea.vmem %s362, 48 [#allocation5]
        %v1736 = vld [vmem:[%s1735] sm:$0xff]
        %s1737 = scalar_lea.vmem %s362, 56 [#allocation5]
        %v1738 = vld [vmem:[%s1737] sm:$0xff]
        %v1739 = vpack.c.bf16 %v1730, %v1730
        %v1741 = vsel %vm477, %v1739, 0
        %1743 = vmatpush.bf16.msra.mxu0 0
        %1744 = vmatpush.bf16.msra.mxu0 0
        %1745 = vmatpush.bf16.msra.mxu0 0
        %1746 = vmatpush.bf16.msra.mxu0 0
        %1747 = vmatpush.bf16.msra.mxu0 0
        %1748 = vmatpush.bf16.msra.mxu0 0
        %1749 = vmatpush.bf16.msra.mxu0 %v1570
        %1750 = vmatpush.bf16.msra.mxu0 %v1569
        %1751 = vmatmul.bf16.gmra.mxu0 %v1741
        %v1752 = vpop.f32.mrf.mxu0
        %v1753 = vadd.f32 0.0, %v1752
        %v1754 = vpop.f32.mrf.mxu0
        %1755 = vdwg.mxu0
        %v1756 = vadd.f32 %v1732, %v1753
        %v1757 = vxor.u32 %v1756, 2147483648
        %v1758 = vmul.f32 %v1757, 1.442695
        %v1759 = vpow.pop %v1758
        %v1760 = vadd.f32 %v1759, 1.0
        %v1761 = vrcp.pop %v1760
        %v1762 = vmul.f32 %v1760, %v1761
        %v1763 = vsub.f32 1.0, %v1762
        %v1764 = vmul.f32 %v1761, %v1763
        %v1765 = vadd.f32 %v1761, %v1764
        %vm1766 = vweird.f32 %v1760
        %vm1767 = vweird.f32 %v1761
        %vm1768 = vmor %vm1766, %vm1767
        %v1769 = vsel %vm1768, %v1761, %v1765
        %v1770 = vand.u32 2147483647, %v1760
        %vm1771 = vcmp.eq.f32.partialorder %v1770, 8.507059e+37
        %v1772 = vand.u32 %v1760, 2147483648
        %v1773 = vor.u32 1.1754944e-38, %v1772
        %v1774 = vsel %vm1771, %v1773, %v1769
        %v1775 = vmul.f32 1.0, %v1774
        %1776 = vmatpush.bf16.msra.mxu0 0
        %1777 = vmatpush.bf16.msra.mxu0 0
        %1778 = vmatpush.bf16.msra.mxu0 0
        %1779 = vmatpush.bf16.msra.mxu0 0
        %1780 = vmatpush.bf16.msra.mxu0 0
        %1781 = vmatpush.bf16.msra.mxu0 0
        %1782 = vmatpush.bf16.msra.mxu0 %v1618
        %1783 = vmatpush.bf16.msra.mxu0 %v1617
        %1784 = vmatmul.bf16.gmra.mxu0 %v1741
        %v1785 = vpop.f32.mrf.mxu0
        %v1786 = vadd.f32 0.0, %v1785
        %v1787 = vpop.f32.mrf.mxu0
        %1788 = vdwg.mxu0
        %v1789 = vadd.f32 %v1734, %v1786
        %v1790 = vxor.u32 %v1789, 2147483648
        %v1791 = vmul.f32 %v1790, 1.442695
        %v1792 = vpow.pop %v1791
        %v1793 = vadd.f32 %v1792, 1.0
        %v1794 = vrcp.pop %v1793
        %v1795 = vmul.f32 %v1793, %v1794
        %v1796 = vsub.f32 1.0, %v1795
        %v1797 = vmul.f32 %v1794, %v1796
        %v1798 = vadd.f32 %v1794, %v1797
        %vm1799 = vweird.f32 %v1793
        %vm1800 = vweird.f32 %v1794
        %vm1801 = vmor %vm1799, %vm1800
        %v1802 = vsel %vm1801, %v1794, %v1798
        %v1803 = vand.u32 2147483647, %v1793
        %vm1804 = vcmp.eq.f32.partialorder %v1803, 8.507059e+37
        %v1805 = vand.u32 %v1793, 2147483648
        %v1806 = vor.u32 1.1754944e-38, %v1805
        %v1807 = vsel %vm1804, %v1806, %v1802
        %v1808 = vmul.f32 1.0, %v1807
        %1809 = vmatpush.bf16.msra.mxu0 0
        %1810 = vmatpush.bf16.msra.mxu0 0
        %1811 = vmatpush.bf16.msra.mxu0 0
        %1812 = vmatpush.bf16.msra.mxu0 0
        %1813 = vmatpush.bf16.msra.mxu0 0
        %1814 = vmatpush.bf16.msra.mxu0 0
        %1815 = vmatpush.bf16.msra.mxu0 %v1663
        %1816 = vmatpush.bf16.msra.mxu0 %v1662
        %1817 = vmatmul.bf16.gmra.mxu0 %v1741
        %v1818 = vpop.f32.mrf.mxu0
        %v1819 = vadd.f32 0.0, %v1818
        %v1820 = vpop.f32.mrf.mxu0
        %1821 = vdwg.mxu0
        %v1822 = vadd.f32 %v1736, %v1819
        %v1823 = vtanh.pop %v1822
        %1824 = vmatpush.bf16.msra.mxu0 0
        %1825 = vmatpush.bf16.msra.mxu0 0
        %1826 = vmatpush.bf16.msra.mxu0 0
        %1827 = vmatpush.bf16.msra.mxu0 0
        %1828 = vmatpush.bf16.msra.mxu0 0
        %1829 = vmatpush.bf16.msra.mxu0 0
        %1830 = vmatpush.bf16.msra.mxu0 %v1690
        %1831 = vmatpush.bf16.msra.mxu0 %v1689
        %1832 = vmatmul.bf16.gmra.mxu0 %v1741
        %v1833 = vpop.f32.mrf.mxu0
        %v1834 = vadd.f32 0.0, %v1833
        %v1835 = vpop.f32.mrf.mxu0
        %1836 = vdwg.mxu0
        %v1837 = vadd.f32 %v1738, %v1834
        %v1838 = vxor.u32 %v1837, 2147483648
        %v1839 = vmul.f32 %v1838, 1.442695
        %v1840 = vpow.pop %v1839
        %v1841 = vadd.f32 %v1840, 1.0
        %v1842 = vrcp.pop %v1841
        %v1843 = vmul.f32 %v1841, %v1842
        %v1844 = vsub.f32 1.0, %v1843
        %v1845 = vmul.f32 %v1842, %v1844
        %v1846 = vadd.f32 %v1842, %v1845
        %vm1847 = vweird.f32 %v1841
        %vm1848 = vweird.f32 %v1842
        %vm1849 = vmor %vm1847, %vm1848
        %v1850 = vsel %vm1849, %v1842, %v1846
        %v1851 = vand.u32 2147483647, %v1841
        %vm1852 = vcmp.eq.f32.partialorder %v1851, 8.507059e+37
        %v1853 = vand.u32 %v1841, 2147483648
        %v1854 = vor.u32 1.1754944e-38, %v1853
        %v1855 = vsel %vm1852, %v1854, %v1850
        %v1856 = vmul.f32 1.0, %v1855
        %v1857 = vmul.f32 %v1808, %v1728
        %v1858 = vmul.f32 %v1775, %v1823
        %v1859 = vadd.f32 %v1857, %v1858
        %v1860 = vtanh.pop %v1859
        %v1861 = vmul.f32 %v1856, %v1860
        %s1862 = scalar_lea.vmem %s362, 64 [#allocation5]
        %v1863 = vld [vmem:[%s1862] sm:$0xff]
        %s1864 = scalar_lea.vmem %s362, 72 [#allocation5]
        %v1865 = vld [vmem:[%s1864] sm:$0xff]
        %s1866 = scalar_lea.vmem %s362, 80 [#allocation5]
        %v1867 = vld [vmem:[%s1866] sm:$0xff]
        %s1868 = scalar_lea.vmem %s362, 88 [#allocation5]
        %v1869 = vld [vmem:[%s1868] sm:$0xff]
        %v1870 = vpack.c.bf16 %v1861, %v1861
        %v1872 = vsel %vm477, %v1870, 0
        %1874 = vmatpush.bf16.msra.mxu0 0
        %1875 = vmatpush.bf16.msra.mxu0 0
        %1876 = vmatpush.bf16.msra.mxu0 0
        %1877 = vmatpush.bf16.msra.mxu0 0
        %1878 = vmatpush.bf16.msra.mxu0 0
        %1879 = vmatpush.bf16.msra.mxu0 0
        %1880 = vmatpush.bf16.msra.mxu0 %v1570
        %1881 = vmatpush.bf16.msra.mxu0 %v1569
        %1882 = vmatmul.bf16.gmra.mxu0 %v1872
        %v1883 = vpop.f32.mrf.mxu0
        %v1884 = vadd.f32 0.0, %v1883
        %v1885 = vpop.f32.mrf.mxu0
        %1886 = vdwg.mxu0
        %v1887 = vadd.f32 %v1863, %v1884
        %v1888 = vxor.u32 %v1887, 2147483648
        %v1889 = vmul.f32 %v1888, 1.442695
        %v1890 = vpow.pop %v1889
        %v1891 = vadd.f32 %v1890, 1.0
        %v1892 = vrcp.pop %v1891
        %v1893 = vmul.f32 %v1891, %v1892
        %v1894 = vsub.f32 1.0, %v1893
        %v1895 = vmul.f32 %v1892, %v1894
        %v1896 = vadd.f32 %v1892, %v1895
        %vm1897 = vweird.f32 %v1891
        %vm1898 = vweird.f32 %v1892
        %vm1899 = vmor %vm1897, %vm1898
        %v1900 = vsel %vm1899, %v1892, %v1896
        %v1901 = vand.u32 2147483647, %v1891
        %vm1902 = vcmp.eq.f32.partialorder %v1901, 8.507059e+37
        %v1903 = vand.u32 %v1891, 2147483648
        %v1904 = vor.u32 1.1754944e-38, %v1903
        %v1905 = vsel %vm1902, %v1904, %v1900
        %v1906 = vmul.f32 1.0, %v1905
        %1907 = vmatpush.bf16.msra.mxu0 0
        %1908 = vmatpush.bf16.msra.mxu0 0
        %1909 = vmatpush.bf16.msra.mxu0 0
        %1910 = vmatpush.bf16.msra.mxu0 0
        %1911 = vmatpush.bf16.msra.mxu0 0
        %1912 = vmatpush.bf16.msra.mxu0 0
        %1913 = vmatpush.bf16.msra.mxu0 %v1618
        %1914 = vmatpush.bf16.msra.mxu0 %v1617
        %1915 = vmatmul.bf16.gmra.mxu0 %v1872
        %v1916 = vpop.f32.mrf.mxu0
        %v1917 = vadd.f32 0.0, %v1916
        %v1918 = vpop.f32.mrf.mxu0
        %1919 = vdwg.mxu0
        %v1920 = vadd.f32 %v1865, %v1917
        %v1921 = vxor.u32 %v1920, 2147483648
        %v1922 = vmul.f32 %v1921, 1.442695
        %v1923 = vpow.pop %v1922
        %v1924 = vadd.f32 %v1923, 1.0
        %v1925 = vrcp.pop %v1924
        %v1926 = vmul.f32 %v1924, %v1925
        %v1927 = vsub.f32 1.0, %v1926
        %v1928 = vmul.f32 %v1925, %v1927
        %v1929 = vadd.f32 %v1925, %v1928
        %vm1930 = vweird.f32 %v1924
        %vm1931 = vweird.f32 %v1925
        %vm1932 = vmor %vm1930, %vm1931
        %v1933 = vsel %vm1932, %v1925, %v1929
        %v1934 = vand.u32 2147483647, %v1924
        %vm1935 = vcmp.eq.f32.partialorder %v1934, 8.507059e+37
        %v1936 = vand.u32 %v1924, 2147483648
        %v1937 = vor.u32 1.1754944e-38, %v1936
        %v1938 = vsel %vm1935, %v1937, %v1933
        %v1939 = vmul.f32 1.0, %v1938
        %1940 = vmatpush.bf16.msra.mxu0 0
        %1941 = vmatpush.bf16.msra.mxu0 0
        %1942 = vmatpush.bf16.msra.mxu0 0
        %1943 = vmatpush.bf16.msra.mxu0 0
        %1944 = vmatpush.bf16.msra.mxu0 0
        %1945 = vmatpush.bf16.msra.mxu0 0
        %1946 = vmatpush.bf16.msra.mxu0 %v1663
        %1947 = vmatpush.bf16.msra.mxu0 %v1662
        %1948 = vmatmul.bf16.gmra.mxu0 %v1872
        %v1949 = vpop.f32.mrf.mxu0
        %v1950 = vadd.f32 0.0, %v1949
        %v1951 = vpop.f32.mrf.mxu0
        %1952 = vdwg.mxu0
        %v1953 = vadd.f32 %v1867, %v1950
        %v1954 = vtanh.pop %v1953
        %1955 = vmatpush.bf16.msra.mxu0 0
        %1956 = vmatpush.bf16.msra.mxu0 0
        %1957 = vmatpush.bf16.msra.mxu0 0
        %1958 = vmatpush.bf16.msra.mxu0 0
        %1959 = vmatpush.bf16.msra.mxu0 0
        %1960 = vmatpush.bf16.msra.mxu0 0
        %1961 = vmatpush.bf16.msra.mxu0 %v1690
        %1962 = vmatpush.bf16.msra.mxu0 %v1689
        %1963 = vmatmul.bf16.gmra.mxu0 %v1872
        %v1964 = vpop.f32.mrf.mxu0
        %v1965 = vadd.f32 0.0, %v1964
        %v1966 = vpop.f32.mrf.mxu0
        %1967 = vdwg.mxu0
        %v1968 = vadd.f32 %v1869, %v1965
        %v1969 = vxor.u32 %v1968, 2147483648
        %v1970 = vmul.f32 %v1969, 1.442695
        %v1971 = vpow.pop %v1970
        %v1972 = vadd.f32 %v1971, 1.0
        %v1973 = vrcp.pop %v1972
        %v1974 = vmul.f32 %v1972, %v1973
        %v1975 = vsub.f32 1.0, %v1974
        %v1976 = vmul.f32 %v1973, %v1975
        %v1977 = vadd.f32 %v1973, %v1976
        %vm1978 = vweird.f32 %v1972
        %vm1979 = vweird.f32 %v1973
        %vm1980 = vmor %vm1978, %vm1979
        %v1981 = vsel %vm1980, %v1973, %v1977
        %v1982 = vand.u32 2147483647, %v1972
        %vm1983 = vcmp.eq.f32.partialorder %v1982, 8.507059e+37
        %v1984 = vand.u32 %v1972, 2147483648
        %v1985 = vor.u32 1.1754944e-38, %v1984
        %v1986 = vsel %vm1983, %v1985, %v1981
        %v1987 = vmul.f32 1.0, %v1986
        %v1988 = vmul.f32 %v1939, %v1859
        %v1989 = vmul.f32 %v1906, %v1954
        %v1990 = vadd.f32 %v1988, %v1989
        %v1991 = vtanh.pop %v1990
        %v1992 = vmul.f32 %v1987, %v1991
        %s1993 = scalar_lea.vmem %s362, 96 [#allocation5]
        %v1994 = vld [vmem:[%s1993] sm:$0xff]
        %s1995 = scalar_lea.vmem %s362, 104 [#allocation5]
        %v1996 = vld [vmem:[%s1995] sm:$0xff]
        %s1997 = scalar_lea.vmem %s362, 112 [#allocation5]
        %v1998 = vld [vmem:[%s1997] sm:$0xff]
        %s1999 = scalar_lea.vmem %s362, 120 [#allocation5]
        %v2000 = vld [vmem:[%s1999] sm:$0xff]
        %v2001 = vpack.c.bf16 %v1992, %v1992
        %v2003 = vsel %vm477, %v2001, 0
        %2005 = vmatpush.bf16.msra.mxu0 0
        %2006 = vmatpush.bf16.msra.mxu0 0
        %2007 = vmatpush.bf16.msra.mxu0 0
        %2008 = vmatpush.bf16.msra.mxu0 0
        %2009 = vmatpush.bf16.msra.mxu0 0
        %2010 = vmatpush.bf16.msra.mxu0 0
        %2011 = vmatpush.bf16.msra.mxu0 %v1570
        %2012 = vmatpush.bf16.msra.mxu0 %v1569
        %2013 = vmatmul.bf16.gmra.mxu0 %v2003
        %v2014 = vpop.f32.mrf.mxu0
        %v2015 = vadd.f32 0.0, %v2014
        %v2016 = vpop.f32.mrf.mxu0
        %2017 = vdwg.mxu0
        %v2018 = vadd.f32 %v1994, %v2015
        %v2019 = vxor.u32 %v2018, 2147483648
        %v2020 = vmul.f32 %v2019, 1.442695
        %v2021 = vpow.pop %v2020
        %v2022 = vadd.f32 %v2021, 1.0
        %v2023 = vrcp.pop %v2022
        %v2024 = vmul.f32 %v2022, %v2023
        %v2025 = vsub.f32 1.0, %v2024
        %v2026 = vmul.f32 %v2023, %v2025
        %v2027 = vadd.f32 %v2023, %v2026
        %vm2028 = vweird.f32 %v2022
        %vm2029 = vweird.f32 %v2023
        %vm2030 = vmor %vm2028, %vm2029
        %v2031 = vsel %vm2030, %v2023, %v2027
        %v2032 = vand.u32 2147483647, %v2022
        %vm2033 = vcmp.eq.f32.partialorder %v2032, 8.507059e+37
        %v2034 = vand.u32 %v2022, 2147483648
        %v2035 = vor.u32 1.1754944e-38, %v2034
        %v2036 = vsel %vm2033, %v2035, %v2031
        %v2037 = vmul.f32 1.0, %v2036
        %2038 = vmatpush.bf16.msra.mxu0 0
        %2039 = vmatpush.bf16.msra.mxu0 0
        %2040 = vmatpush.bf16.msra.mxu0 0
        %2041 = vmatpush.bf16.msra.mxu0 0
        %2042 = vmatpush.bf16.msra.mxu0 0
        %2043 = vmatpush.bf16.msra.mxu0 0
        %2044 = vmatpush.bf16.msra.mxu0 %v1618
        %2045 = vmatpush.bf16.msra.mxu0 %v1617
        %2046 = vmatmul.bf16.gmra.mxu0 %v2003
        %v2047 = vpop.f32.mrf.mxu0
        %v2048 = vadd.f32 0.0, %v2047
        %v2049 = vpop.f32.mrf.mxu0
        %2050 = vdwg.mxu0
        %v2051 = vadd.f32 %v1996, %v2048
        %v2052 = vxor.u32 %v2051, 2147483648
        %v2053 = vmul.f32 %v2052, 1.442695
        %v2054 = vpow.pop %v2053
        %v2055 = vadd.f32 %v2054, 1.0
        %v2056 = vrcp.pop %v2055
        %v2057 = vmul.f32 %v2055, %v2056
        %v2058 = vsub.f32 1.0, %v2057
        %v2059 = vmul.f32 %v2056, %v2058
        %v2060 = vadd.f32 %v2056, %v2059
        %vm2061 = vweird.f32 %v2055
        %vm2062 = vweird.f32 %v2056
        %vm2063 = vmor %vm2061, %vm2062
        %v2064 = vsel %vm2063, %v2056, %v2060
        %v2065 = vand.u32 2147483647, %v2055
        %vm2066 = vcmp.eq.f32.partialorder %v2065, 8.507059e+37
        %v2067 = vand.u32 %v2055, 2147483648
        %v2068 = vor.u32 1.1754944e-38, %v2067
        %v2069 = vsel %vm2066, %v2068, %v2064
        %v2070 = vmul.f32 1.0, %v2069
        %2071 = vmatpush.bf16.msra.mxu0 0
        %2072 = vmatpush.bf16.msra.mxu0 0
        %2073 = vmatpush.bf16.msra.mxu0 0
        %2074 = vmatpush.bf16.msra.mxu0 0
        %2075 = vmatpush.bf16.msra.mxu0 0
        %2076 = vmatpush.bf16.msra.mxu0 0
        %2077 = vmatpush.bf16.msra.mxu0 %v1663
        %2078 = vmatpush.bf16.msra.mxu0 %v1662
        %2079 = vmatmul.bf16.gmra.mxu0 %v2003
        %v2080 = vpop.f32.mrf.mxu0
        %v2081 = vadd.f32 0.0, %v2080
        %v2082 = vpop.f32.mrf.mxu0
        %2083 = vdwg.mxu0
        %v2084 = vadd.f32 %v1998, %v2081
        %v2085 = vtanh.pop %v2084
        %2086 = vmatpush.bf16.msra.mxu0 0
        %2087 = vmatpush.bf16.msra.mxu0 0
        %2088 = vmatpush.bf16.msra.mxu0 0
        %2089 = vmatpush.bf16.msra.mxu0 0
        %2090 = vmatpush.bf16.msra.mxu0 0
        %2091 = vmatpush.bf16.msra.mxu0 0
        %2092 = vmatpush.bf16.msra.mxu0 %v1690
        %2093 = vmatpush.bf16.msra.mxu0 %v1689
        %2094 = vmatmul.bf16.gmra.mxu0 %v2003
        %v2095 = vpop.f32.mrf.mxu0
        %v2096 = vadd.f32 0.0, %v2095
        %v2097 = vpop.f32.mrf.mxu0
        %2098 = vdwg.mxu0
        %v2099 = vadd.f32 %v2000, %v2096
        %v2100 = vxor.u32 %v2099, 2147483648
        %v2101 = vmul.f32 %v2100, 1.442695
        %v2102 = vpow.pop %v2101
        %v2103 = vadd.f32 %v2102, 1.0
        %v2104 = vrcp.pop %v2103
        %v2105 = vmul.f32 %v2103, %v2104
        %v2106 = vsub.f32 1.0, %v2105
        %v2107 = vmul.f32 %v2104, %v2106
        %v2108 = vadd.f32 %v2104, %v2107
        %vm2109 = vweird.f32 %v2103
        %vm2110 = vweird.f32 %v2104
        %vm2111 = vmor %vm2109, %vm2110
        %v2112 = vsel %vm2111, %v2104, %v2108
        %v2113 = vand.u32 2147483647, %v2103
        %vm2114 = vcmp.eq.f32.partialorder %v2113, 8.507059e+37
        %v2115 = vand.u32 %v2103, 2147483648
        %v2116 = vor.u32 1.1754944e-38, %v2115
        %v2117 = vsel %vm2114, %v2116, %v2112
        %v2118 = vmul.f32 1.0, %v2117
        %v2119 = vmul.f32 %v2070, %v1990
        %v2120 = vmul.f32 %v2037, %v2085
        %v2121 = vadd.f32 %v2119, %v2120
        %v2122 = vtanh.pop %v2121
        %v2123 = vmul.f32 %v2118, %v2122
        %s2124 = scalar_lea.vmem %s362, 128 [#allocation5]
        %v2125 = vld [vmem:[%s2124] sm:$0xff]
        %s2126 = scalar_lea.vmem %s362, 136 [#allocation5]
        %v2127 = vld [vmem:[%s2126] sm:$0xff]
        %s2128 = scalar_lea.vmem %s362, 144 [#allocation5]
        %v2129 = vld [vmem:[%s2128] sm:$0xff]
        %s2130 = scalar_lea.vmem %s362, 152 [#allocation5]
        %v2131 = vld [vmem:[%s2130] sm:$0xff]
        %v2132 = vpack.c.bf16 %v2123, %v2123
        %v2134 = vsel %vm477, %v2132, 0
        %2136 = vmatpush.bf16.msra.mxu0 0
        %2137 = vmatpush.bf16.msra.mxu0 0
        %2138 = vmatpush.bf16.msra.mxu0 0
        %2139 = vmatpush.bf16.msra.mxu0 0
        %2140 = vmatpush.bf16.msra.mxu0 0
        %2141 = vmatpush.bf16.msra.mxu0 0
        %2142 = vmatpush.bf16.msra.mxu0 %v1570
        %2143 = vmatpush.bf16.msra.mxu0 %v1569
        %2144 = vmatmul.bf16.gmra.mxu0 %v2134
        %v2145 = vpop.f32.mrf.mxu0
        %v2146 = vadd.f32 0.0, %v2145
        %v2147 = vpop.f32.mrf.mxu0
        %2148 = vdwg.mxu0
        %v2149 = vadd.f32 %v2125, %v2146
        %v2150 = vxor.u32 %v2149, 2147483648
        %v2151 = vmul.f32 %v2150, 1.442695
        %v2152 = vpow.pop %v2151
        %v2153 = vadd.f32 %v2152, 1.0
        %v2154 = vrcp.pop %v2153
        %v2155 = vmul.f32 %v2153, %v2154
        %v2156 = vsub.f32 1.0, %v2155
        %v2157 = vmul.f32 %v2154, %v2156
        %v2158 = vadd.f32 %v2154, %v2157
        %vm2159 = vweird.f32 %v2153
        %vm2160 = vweird.f32 %v2154
        %vm2161 = vmor %vm2159, %vm2160
        %v2162 = vsel %vm2161, %v2154, %v2158
        %v2163 = vand.u32 2147483647, %v2153
        %vm2164 = vcmp.eq.f32.partialorder %v2163, 8.507059e+37
        %v2165 = vand.u32 %v2153, 2147483648
        %v2166 = vor.u32 1.1754944e-38, %v2165
        %v2167 = vsel %vm2164, %v2166, %v2162
        %v2168 = vmul.f32 1.0, %v2167
        %2169 = vmatpush.bf16.msra.mxu0 0
        %2170 = vmatpush.bf16.msra.mxu0 0
        %2171 = vmatpush.bf16.msra.mxu0 0
        %2172 = vmatpush.bf16.msra.mxu0 0
        %2173 = vmatpush.bf16.msra.mxu0 0
        %2174 = vmatpush.bf16.msra.mxu0 0
        %2175 = vmatpush.bf16.msra.mxu0 %v1618
        %2176 = vmatpush.bf16.msra.mxu0 %v1617
        %2177 = vmatmul.bf16.gmra.mxu0 %v2134
        %v2178 = vpop.f32.mrf.mxu0
        %v2179 = vadd.f32 0.0, %v2178
        %v2180 = vpop.f32.mrf.mxu0
        %2181 = vdwg.mxu0
        %v2182 = vadd.f32 %v2127, %v2179
        %v2183 = vxor.u32 %v2182, 2147483648
        %v2184 = vmul.f32 %v2183, 1.442695
        %v2185 = vpow.pop %v2184
        %v2186 = vadd.f32 %v2185, 1.0
        %v2187 = vrcp.pop %v2186
        %v2188 = vmul.f32 %v2186, %v2187
        %v2189 = vsub.f32 1.0, %v2188
        %v2190 = vmul.f32 %v2187, %v2189
        %v2191 = vadd.f32 %v2187, %v2190
        %vm2192 = vweird.f32 %v2186
        %vm2193 = vweird.f32 %v2187
        %vm2194 = vmor %vm2192, %vm2193
        %v2195 = vsel %vm2194, %v2187, %v2191
        %v2196 = vand.u32 2147483647, %v2186
        %vm2197 = vcmp.eq.f32.partialorder %v2196, 8.507059e+37
        %v2198 = vand.u32 %v2186, 2147483648
        %v2199 = vor.u32 1.1754944e-38, %v2198
        %v2200 = vsel %vm2197, %v2199, %v2195
        %v2201 = vmul.f32 1.0, %v2200
        %2202 = vmatpush.bf16.msra.mxu0 0
        %2203 = vmatpush.bf16.msra.mxu0 0
        %2204 = vmatpush.bf16.msra.mxu0 0
        %2205 = vmatpush.bf16.msra.mxu0 0
        %2206 = vmatpush.bf16.msra.mxu0 0
        %2207 = vmatpush.bf16.msra.mxu0 0
        %2208 = vmatpush.bf16.msra.mxu0 %v1663
        %2209 = vmatpush.bf16.msra.mxu0 %v1662
        %2210 = vmatmul.bf16.gmra.mxu0 %v2134
        %v2211 = vpop.f32.mrf.mxu0
        %v2212 = vadd.f32 0.0, %v2211
        %v2213 = vpop.f32.mrf.mxu0
        %2214 = vdwg.mxu0
        %v2215 = vadd.f32 %v2129, %v2212
        %v2216 = vtanh.pop %v2215
        %2217 = vmatpush.bf16.msra.mxu0 0
        %2218 = vmatpush.bf16.msra.mxu0 0
        %2219 = vmatpush.bf16.msra.mxu0 0
        %2220 = vmatpush.bf16.msra.mxu0 0
        %2221 = vmatpush.bf16.msra.mxu0 0
        %2222 = vmatpush.bf16.msra.mxu0 0
        %2223 = vmatpush.bf16.msra.mxu0 %v1690
        %2224 = vmatpush.bf16.msra.mxu0 %v1689
        %2225 = vmatmul.bf16.gmra.mxu0 %v2134
        %v2226 = vpop.f32.mrf.mxu0
        %v2227 = vadd.f32 0.0, %v2226
        %v2228 = vpop.f32.mrf.mxu0
        %2229 = vdwg.mxu0
        %v2230 = vadd.f32 %v2131, %v2227
        %v2231 = vxor.u32 %v2230, 2147483648
        %v2232 = vmul.f32 %v2231, 1.442695
        %v2233 = vpow.pop %v2232
        %v2234 = vadd.f32 %v2233, 1.0
        %v2235 = vrcp.pop %v2234
        %v2236 = vmul.f32 %v2234, %v2235
        %v2237 = vsub.f32 1.0, %v2236
        %v2238 = vmul.f32 %v2235, %v2237
        %v2239 = vadd.f32 %v2235, %v2238
        %vm2240 = vweird.f32 %v2234
        %vm2241 = vweird.f32 %v2235
        %vm2242 = vmor %vm2240, %vm2241
        %v2243 = vsel %vm2242, %v2235, %v2239
        %v2244 = vand.u32 2147483647, %v2234
        %vm2245 = vcmp.eq.f32.partialorder %v2244, 8.507059e+37
        %v2246 = vand.u32 %v2234, 2147483648
        %v2247 = vor.u32 1.1754944e-38, %v2246
        %v2248 = vsel %vm2245, %v2247, %v2243
        %v2249 = vmul.f32 1.0, %v2248
        %v2250 = vmul.f32 %v2201, %v2121
        %v2251 = vmul.f32 %v2168, %v2216
        %v2252 = vadd.f32 %v2250, %v2251
        %v2253 = vtanh.pop %v2252
        %v2254 = vmul.f32 %v2249, %v2253
        %s2255 = scalar_lea.vmem %s362, 160 [#allocation5]
        %v2256 = vld [vmem:[%s2255] sm:$0xff]
        %s2257 = scalar_lea.vmem %s362, 168 [#allocation5]
        %v2258 = vld [vmem:[%s2257] sm:$0xff]
        %s2259 = scalar_lea.vmem %s362, 176 [#allocation5]
        %v2260 = vld [vmem:[%s2259] sm:$0xff]
        %s2261 = scalar_lea.vmem %s362, 184 [#allocation5]
        %v2262 = vld [vmem:[%s2261] sm:$0xff]
        %v2263 = vpack.c.bf16 %v2254, %v2254
        %v2265 = vsel %vm477, %v2263, 0
        %2267 = vmatpush.bf16.msra.mxu0 0
        %2268 = vmatpush.bf16.msra.mxu0 0
        %2269 = vmatpush.bf16.msra.mxu0 0
        %2270 = vmatpush.bf16.msra.mxu0 0
        %2271 = vmatpush.bf16.msra.mxu0 0
        %2272 = vmatpush.bf16.msra.mxu0 0
        %2273 = vmatpush.bf16.msra.mxu0 %v1570
        %2274 = vmatpush.bf16.msra.mxu0 %v1569
        %2275 = vmatmul.bf16.gmra.mxu0 %v2265
        %v2276 = vpop.f32.mrf.mxu0
        %v2277 = vadd.f32 0.0, %v2276
        %v2278 = vpop.f32.mrf.mxu0
        %2279 = vdwg.mxu0
        %v2280 = vadd.f32 %v2256, %v2277
        %v2281 = vxor.u32 %v2280, 2147483648
        %v2282 = vmul.f32 %v2281, 1.442695
        %v2283 = vpow.pop %v2282
        %v2284 = vadd.f32 %v2283, 1.0
        %v2285 = vrcp.pop %v2284
        %v2286 = vmul.f32 %v2284, %v2285
        %v2287 = vsub.f32 1.0, %v2286
        %v2288 = vmul.f32 %v2285, %v2287
        %v2289 = vadd.f32 %v2285, %v2288
        %vm2290 = vweird.f32 %v2284
        %vm2291 = vweird.f32 %v2285
        %vm2292 = vmor %vm2290, %vm2291
        %v2293 = vsel %vm2292, %v2285, %v2289
        %v2294 = vand.u32 2147483647, %v2284
        %vm2295 = vcmp.eq.f32.partialorder %v2294, 8.507059e+37
        %v2296 = vand.u32 %v2284, 2147483648
        %v2297 = vor.u32 1.1754944e-38, %v2296
        %v2298 = vsel %vm2295, %v2297, %v2293
        %v2299 = vmul.f32 1.0, %v2298
        %2300 = vmatpush.bf16.msra.mxu0 0
        %2301 = vmatpush.bf16.msra.mxu0 0
        %2302 = vmatpush.bf16.msra.mxu0 0
        %2303 = vmatpush.bf16.msra.mxu0 0
        %2304 = vmatpush.bf16.msra.mxu0 0
        %2305 = vmatpush.bf16.msra.mxu0 0
        %2306 = vmatpush.bf16.msra.mxu0 %v1618
        %2307 = vmatpush.bf16.msra.mxu0 %v1617
        %2308 = vmatmul.bf16.gmra.mxu0 %v2265
        %v2309 = vpop.f32.mrf.mxu0
        %v2310 = vadd.f32 0.0, %v2309
        %v2311 = vpop.f32.mrf.mxu0
        %2312 = vdwg.mxu0
        %v2313 = vadd.f32 %v2258, %v2310
        %v2314 = vxor.u32 %v2313, 2147483648
        %v2315 = vmul.f32 %v2314, 1.442695
        %v2316 = vpow.pop %v2315
        %v2317 = vadd.f32 %v2316, 1.0
        %v2318 = vrcp.pop %v2317
        %v2319 = vmul.f32 %v2317, %v2318
        %v2320 = vsub.f32 1.0, %v2319
        %v2321 = vmul.f32 %v2318, %v2320
        %v2322 = vadd.f32 %v2318, %v2321
        %vm2323 = vweird.f32 %v2317
        %vm2324 = vweird.f32 %v2318
        %vm2325 = vmor %vm2323, %vm2324
        %v2326 = vsel %vm2325, %v2318, %v2322
        %v2327 = vand.u32 2147483647, %v2317
        %vm2328 = vcmp.eq.f32.partialorder %v2327, 8.507059e+37
        %v2329 = vand.u32 %v2317, 2147483648
        %v2330 = vor.u32 1.1754944e-38, %v2329
        %v2331 = vsel %vm2328, %v2330, %v2326
        %v2332 = vmul.f32 1.0, %v2331
        %2333 = vmatpush.bf16.msra.mxu0 0
        %2334 = vmatpush.bf16.msra.mxu0 0
        %2335 = vmatpush.bf16.msra.mxu0 0
        %2336 = vmatpush.bf16.msra.mxu0 0
        %2337 = vmatpush.bf16.msra.mxu0 0
        %2338 = vmatpush.bf16.msra.mxu0 0
        %2339 = vmatpush.bf16.msra.mxu0 %v1663
        %2340 = vmatpush.bf16.msra.mxu0 %v1662
        %2341 = vmatmul.bf16.gmra.mxu0 %v2265
        %v2342 = vpop.f32.mrf.mxu0
        %v2343 = vadd.f32 0.0, %v2342
        %v2344 = vpop.f32.mrf.mxu0
        %2345 = vdwg.mxu0
        %v2346 = vadd.f32 %v2260, %v2343
        %v2347 = vtanh.pop %v2346
        %2348 = vmatpush.bf16.msra.mxu0 0
        %2349 = vmatpush.bf16.msra.mxu0 0
        %2350 = vmatpush.bf16.msra.mxu0 0
        %2351 = vmatpush.bf16.msra.mxu0 0
        %2352 = vmatpush.bf16.msra.mxu0 0
        %2353 = vmatpush.bf16.msra.mxu0 0
        %2354 = vmatpush.bf16.msra.mxu0 %v1690
        %2355 = vmatpush.bf16.msra.mxu0 %v1689
        %2356 = vmatmul.bf16.gmra.mxu0 %v2265
        %v2357 = vpop.f32.mrf.mxu0
        %v2358 = vadd.f32 0.0, %v2357
        %v2359 = vpop.f32.mrf.mxu0
        %2360 = vdwg.mxu0
        %v2361 = vadd.f32 %v2262, %v2358
        %v2362 = vxor.u32 %v2361, 2147483648
        %v2363 = vmul.f32 %v2362, 1.442695
        %v2364 = vpow.pop %v2363
        %v2365 = vadd.f32 %v2364, 1.0
        %v2366 = vrcp.pop %v2365
        %v2367 = vmul.f32 %v2365, %v2366
        %v2368 = vsub.f32 1.0, %v2367
        %v2369 = vmul.f32 %v2366, %v2368
        %v2370 = vadd.f32 %v2366, %v2369
        %vm2371 = vweird.f32 %v2365
        %vm2372 = vweird.f32 %v2366
        %vm2373 = vmor %vm2371, %vm2372
        %v2374 = vsel %vm2373, %v2366, %v2370
        %v2375 = vand.u32 2147483647, %v2365
        %vm2376 = vcmp.eq.f32.partialorder %v2375, 8.507059e+37
        %v2377 = vand.u32 %v2365, 2147483648
        %v2378 = vor.u32 1.1754944e-38, %v2377
        %v2379 = vsel %vm2376, %v2378, %v2374
        %v2380 = vmul.f32 1.0, %v2379
        %v2381 = vmul.f32 %v2332, %v2252
        %v2382 = vmul.f32 %v2299, %v2347
        %v2383 = vadd.f32 %v2381, %v2382
        %v2384 = vtanh.pop %v2383
        %v2385 = vmul.f32 %v2380, %v2384
        %v2386 = vld [vmem:[%s6] sm:$0x1]
        %v2388 = vperm.slane %v2386, 0
        %v2390 = vmul.f32 %v1730, %v2388
        %v2391 = vmul.f32 %v1861, %v2388
        %v2392 = vmul.f32 %v1992, %v2388
        %v2393 = vmul.f32 %v2123, %v2388
        %v2394 = vmul.f32 %v2254, %v2388
        %v2395 = vmul.f32 %v2385, %v2388
        %v2396 = vsel %vm477, %v2390, 0.0
        %2397 = vadd.xlane.f32.xlu0 %v2396
        %v2398 = vpop.xlane.xlu0 %2397
        %v2399 = vsel %vm477, %v2391, 0.0
        %2400 = vadd.xlane.f32.xlu0 %v2399
        %v2401 = vpop.xlane.xlu0 %2400
        %v2402 = vsel %vm477, %v2392, 0.0
        %2403 = vadd.xlane.f32.xlu0 %v2402
        %v2404 = vpop.xlane.xlu0 %2403
        %v2405 = vsel %vm477, %v2393, 0.0
        %2406 = vadd.xlane.f32.xlu0 %v2405
        %v2407 = vpop.xlane.xlu0 %2406
        %v2408 = vsel %vm477, %v2394, 0.0
        %2409 = vadd.xlane.f32.xlu0 %v2408
        %v2410 = vpop.xlane.xlu0 %2409
        %v2411 = vsel %vm477, %v2395, 0.0
        %2412 = vadd.xlane.f32.xlu0 %v2411
        %v2413 = vpop.xlane.xlu0 %2412
        %v2414 = vld [vmem:[#allocation2] sm:$0x1]
        %v2416 = vperm.slane %v2414, 0
        %2417 = vset.pattern.permute.xlu0 0
        %2418 = vperm.xlu0 %2417, %v2416
        %v2419 = vpop.permute.xlu0 %2418
        %v2421 = vadd.f32 %v2398, %v2419
        %v2422 = vadd.f32 %v2401, %v2419
        %v2423 = vadd.f32 %v2404, %v2419
        %v2424 = vadd.f32 %v2407, %v2419
        %v2425 = vadd.f32 %v2410, %v2419
        %v2426 = vadd.f32 %v2413, %v2419
        %v2433 = vlaneseq
        %v2434 = vand.u32 %v2433, 127
        %v2435 = vperm.slane %v2421, %v2434
        %v2436 = vperm.slane %v2422, %v2434
        %v2437 = vperm.slane %v2423, %v2434
        %v2438 = vperm.slane %v2424, %v2434
        %v2439 = vperm.slane %v2425, %v2434
        %v2440 = vperm.slane %v2426, %v2434
        %vm2441 = vcmask 1041409
        %v2442 = vsel %vm2441, %v2436, %v2435
        %vm2443 = vcmask 1042434
        %v2444 = vsel %vm2443, %v2437, %v2442
        %vm2445 = vcmask 1043459
        %v2446 = vsel %vm2445, %v2438, %v2444
        %vm2447 = vcmask 1044484
        %v2448 = vsel %vm2447, %v2439, %v2446
        %vm2449 = vcmask 1045509
        %v2450 = vsel %vm2449, %v2440, %v2448
        %vm2452 = vcmask 62464
        %2453 = vst.msk [vmem:[%s418] sm:$0x3f] %vm2452, %v2450
        %p2454 = scmp.lt.s32.totalorder %s28, 1
        %s2455 = scalar_select %p2454, %s28, 1
        %s2456 = smul.addr %s2455, 8
        %s2457 = scalar_lea.vmem %s8, %s2456
        // Predicated region
        $region73: #{tpu_custom_call.1} parent=51 // pred_check
          %p2458 = pneg %p224
        $region74: #{tpu_custom_call.1} parent=51 // pred_check_branch
          %2460 = sbr.rel (%p2458) target = $region76
        $region75: #{tpu_custom_call.1} parent=51 // pred_region
          _
        $region76: #{tpu_custom_call.1} parent=51 // pred_fallthru
          _
      $region52: #{tpu_custom_call.1} parent=5 // pred_fallthru
        _
      %p2461 = scmp.le.s32.totalorder 2, %s23
      // Predicated region
      $region77: #{tpu_custom_call.1} parent=5 // pred_check
        %p2462 = pneg %p2461
      $region78: #{tpu_custom_call.1} parent=5 // pred_check_branch
        %2464 = sbr.rel (%p2462) target = $region80
      $region79: #{tpu_custom_call.1} parent=5 // pred_region
        %s2465 = ssub.s32 %s23, 2
        // Predicated region
        $region81: #{tpu_custom_call.1} parent=79 // pred_check
          %p2466 = pneg %p230
        $region82: #{tpu_custom_call.1} parent=79 // pred_check_branch
          %2468 = sbr.rel (%p2466) target = $region84
        $region83: #{tpu_custom_call.1} parent=79 // pred_region
          %p2469 = scmp.lt.s32.totalorder %s29, 1
          %s2470 = scalar_select %p2469, %s29, 1
          %s2471 = smul.addr %s2470, 8
          %s2472 = scalar_lea.vmem %s8, %s2471
        $region84: #{tpu_custom_call.1} parent=79 // pred_fallthru
          _
      $region80: #{tpu_custom_call.1} parent=5 // pred_fallthru
        _
    $region6: #{tpu_custom_call.1} parent=1 // loop_footer
      %s27 = sadd.s32 1, %s23
    $region7: #{tpu_custom_call.1} parent=1 // loop_footer_branch
      %22 = sbr.rel target = $region3
    $region8: #{tpu_custom_call.1} parent=1 // loop_exit
      _
    %2473 = vsyncpa [#allocation4], 1
    %s2474 = scalar_lea.sflag [#allocation4], 1
    %2475 = vsyncpa %s2474, 1
    %2476 = vsyncpa [#allocation6], 1
    %s2477 = scalar_lea.sflag [#allocation6], 1
    %2478 = vsyncpa %s2477, 1
    %2479 = vsyncpa [#allocation9], 1

</llo_original>
